<compile_context>
chip_gen: v6e
topology: v6e:2x2x1
jax: 0.10.0
libtpu: 0.0.40
codegen_flags: <defaults>
</compile_context>

<pallas_src>
import functools

import jax
import jax.numpy as jnp
from jax.experimental import pallas as pl
from jax.experimental.pallas import tpu as pltpu


# --------------------------------------------------------------------------
# Kernel body
# --------------------------------------------------------------------------
def _mlp_kernel(x_ref, g_ref, u_ref, dw_ref, o_ref, acc_ref):
    # x_ref:   (tm, H)   token tile (resident across the I reduction axis)
    # g_ref:   (H, ti)   gate_proj column block for I-tile k
    # u_ref:   (H, ti)   up_proj   column block for I-tile k
    # dw_ref:  (ti, H)   down_proj row block for I-tile k
    # o_ref:   (tm, H)   output tile (written once, at the last I step)
    # acc_ref: (tm, H)   f32 accumulator scratch
    k = pl.program_id(1)

    @pl.when(k == 0)
    def _init():
        acc_ref[...] = jnp.zeros_like(acc_ref)

    x = x_ref[...]
    gate = jnp.dot(x, g_ref[...], preferred_element_type=jnp.float32)
    up = jnp.dot(x, u_ref[...], preferred_element_type=jnp.float32)
    # SiLU in f32.  exp and the approximate reciprocal both go to the EUP slot,
    # leaving VALU slots free when the kernel is MXU-bound at large tm.
    sig = pl.reciprocal(1.0 + jnp.exp(-gate), approx=True)
    hidden = gate * sig * up
    # Partial down-projection for this I tile, accumulated in f32.
    acc_ref[...] += jnp.dot(hidden.astype(x.dtype), dw_ref[...],
                            preferred_element_type=jnp.float32)

    @pl.when(k == pl.num_programs(1) - 1)
    def _finalize():
        o_ref[...] = acc_ref[...].astype(o_ref.dtype)


# --------------------------------------------------------------------------
# Tiling helpers (generation / VMEM aware)
# --------------------------------------------------------------------------
def _round_up(x, m):
    return ((x + m - 1) // m) * m


def _largest_ti(I, ti_req):
    """Largest multiple of 128 that divides I and is <= ti_req (else I)."""
    t = (min(ti_req, I) // 128) * 128
    while t >= 128:
        if I % t == 0:
            return t
        t -= 128
    return I


def _block_vmem_bytes(tm, ti, H, in_item, out_item):
    x_buf = 2 * tm * H * in_item        # x block, double-buffered
    w_buf = 2 * 3 * H * ti * in_item    # gate + up + down blocks, double-buffered
    o_buf = 2 * tm * H * out_item       # output block, double-buffered
    acc = tm * H * 4                    # f32 accumulator scratch
    inter = 3 * tm * ti * 4             # gate/up f32 + hidden matmul intermediates
    return x_buf + w_buf + o_buf + acc + inter


def _vmem_capacity_bytes():
    try:
        info = pltpu.get_tpu_info()
        cap = getattr(info, "vmem_capacity_bytes", None)
        if cap:
            return int(cap)
    except Exception:
        pass
    return 128 * 1024 * 1024


# --------------------------------------------------------------------------
# Wrapper
# --------------------------------------------------------------------------
@functools.partial(jax.jit, static_argnames=("tm", "ti"))
def llama_mlp(x, gate_w, up_w, down_w, *, tm=None, ti=None):
    """x: [B, S, H]; gate_w/up_w: [H, I]; down_w: [I, H] -> [B, S, H].

    tm/ti default to None (auto-derived from device VMEM and problem size).
    """
    B, S, H = x.shape
    I = gate_w.shape[1]
    M = B * S
    in_item = jnp.dtype(x.dtype).itemsize
    w_item = jnp.dtype(gate_w.dtype).itemsize
    out_item = in_item

    # --- per-generation VMEM budget / tile defaults --------------------------
    vmem_cap = _vmem_capacity_bytes()
    if vmem_cap <= 80 * 1024 * 1024:
        # v7x-class: 64 MiB per TensorCore; leave headroom for compiler scratch.
        vmem_limit = max(min(vmem_cap, 64 * 1024 * 1024) - 10 * 1024 * 1024,
                         32 * 1024 * 1024)
        tm_def, ti_def = 512, 512
    else:
        # v5e / v6e: 128 MiB physical VMEM.
        vmem_limit = 100 * 1024 * 1024
        tm_def, ti_def = 512, 1024

    # --- token tile: multiple of 256 (MXU-friendly), clamped to padded M ----
    if tm is None:
        tm_eff = min(tm_def, _round_up(M, 256))
    else:
        tm_eff = tm
    tm_eff = max(8, _round_up(tm_eff, 8))

    # --- intermediate tile: multiple of 128 that divides I -------------------
    ti_eff = _largest_ti(I, ti if ti is not None else ti_def)
    assert I % ti_eff == 0, "intermediate_size must be divisible by ti"

    # --- auto-clamp to the VMEM budget (only shrinks auto-chosen tiles) ------
    budget = int(vmem_limit * 0.9)
    item = max(in_item, w_item)
    while _block_vmem_bytes(tm_eff, ti_eff, H, item, out_item) > budget:
        if ti is None and ti_eff > 128:
            nti = _largest_ti(I, ti_eff // 2)
            if nti < ti_eff:
                ti_eff = nti
                continue
        if tm is None and tm_eff > 256:
            tm_eff = max(256, tm_eff // 2)
            continue
        if tm is None and tm_eff > 64:
            tm_eff //= 2
            continue
        break

    n_i = I // ti_eff
    M_pad = pl.cdiv(M, tm_eff) * tm_eff
    x2d = x.reshape(M, H)
    if M_pad != M:
        x2d = jnp.pad(x2d, ((0, M_pad - M), (0, 0)))

    grid = (M_pad // tm_eff, n_i)  # reduction axis (I) last
    n_m = grid[0]

    # Weights are re-streamed once per M tile; reflect that in the estimate.
    cost = pl.CostEstimate(
        flops=6 * M_pad * H * I,
        transcendentals=2 * M_pad * I,  # exp + reciprocal
        bytes_accessed=(M_pad * H * in_item
                        + n_m * 3 * H * I * w_item
                        + M_pad * H * out_item),
    )

    out2d = pl.pallas_call(
        _mlp_kernel,
        out_shape=jax.ShapeDtypeStruct((M_pad, H), x.dtype),
        grid_spec=pltpu.PrefetchScalarGridSpec(
            num_scalar_prefetch=0,
            grid=grid,
            in_specs=[
                # x tile: index constant along k, effectively resident across
                # the reduction.  (On v7x, pipeline_mode=pl.Buffered(1) here
                # would free ~tm*H bytes of VMEM; omitted for portability.)
                pl.BlockSpec((tm_eff, H), lambda i, k: (i, 0)),
                pl.BlockSpec((H, ti_eff), lambda i, k: (0, k)),   # gate block
                pl.BlockSpec((H, ti_eff), lambda i, k: (0, k)),   # up block
                pl.BlockSpec((ti_eff, H), lambda i, k: (k, 0)),   # down block
            ],
            out_specs=pl.BlockSpec((tm_eff, H), lambda i, k: (i, 0)),
            scratch_shapes=[pltpu.VMEM((tm_eff, H), jnp.float32)],
        ),
        compiler_params=pltpu.CompilerParams(
            dimension_semantics=("parallel", "arbitrary"),
            vmem_limit_bytes=int(vmem_limit),
        ),
        cost_estimate=cost,
    )(x2d, gate_w, up_w, down_w)

    if M_pad != M:
        out2d = out2d[:M]
    return out2d.reshape(B, S, H)


# --------------------------------------------------------------------------
# References
# --------------------------------------------------------------------------
def _reference_f32(x, gate_w, up_w, down_w):
    g = x @ gate_w
    u = x @ up_w
    return (jax.nn.silu(g) * u) @ down_w


def _reference_same_precision(x, gate_w, up_w, down_w):
    # Mirrors the kernel's precision path (f32 accumulate, hidden cast back).
    g = jnp.dot(x, gate_w, preferred_element_type=jnp.float32)
    u = jnp.dot(x, up_w, preferred_element_type=jnp.float32)
    h = ((g * jax.nn.sigmoid(g)) * u).astype(x.dtype)
    out = jnp.dot(h, down_w, preferred_element_type=jnp.float32)
    return out.astype(x.dtype)


if __name__ == "__main__":
    key = jax.random.PRNGKey(0)
    kx, kg, ku, kd, kx2 = jax.random.split(key, 5)

    # --- Test 1: small f32 config, auto tiling (hidden=256, intermediate=512)
    B, S, H, I = 2, 8, 256, 512
    x = jax.random.normal(kx, (B, S, H), dtype=jnp.float32)
    gate_w = jax.random.normal(kg, (H, I), dtype=jnp.float32) * (1.0 / H) ** 0.5
    up_w = jax.random.normal(ku, (H, I), dtype=jnp.float32) * (1.0 / H) ** 0.5
    down_w = jax.random.normal(kd, (I, H), dtype=jnp.float32) * (1.0 / I) ** 0.5

    out = llama_mlp(x, gate_w, up_w, down_w)
    out = jax.block_until_ready(out)
    ref = _reference_f32(x, gate_w, up_w, down_w)
    assert out.shape == (B, S, H)
    err32 = float(jnp.max(jnp.abs(out - ref)))
    # Tolerance covers the approximate (EUP) reciprocal in SiLU.
    assert err32 < 2e-2, f"f32 mismatch, max abs err = {err32}"

    # --- Test 2: bf16 datapath, multiple M tiles and multiple I tiles --------
    B2, S2 = 4, 128
    x_bf = jax.random.normal(kx2, (B2, S2, H), dtype=jnp.float32).astype(
        jnp.bfloat16)
    gate_bf = gate_w.astype(jnp.bfloat16)
    up_bf = up_w.astype(jnp.bfloat16)
    down_bf = down_w.astype(jnp.bfloat16)

    out_bf = llama_mlp(x_bf, gate_bf, up_bf, down_bf, tm=256, ti=256)
    out_bf = jax.block_until_ready(out_bf)
    ref_bf = _reference_same_precision(x_bf, gate_bf, up_bf, down_bf)
    err_bf = float(jnp.max(jnp.abs(
        out_bf.astype(jnp.float32).reshape(-1, H)
        - ref_bf.astype(jnp.float32).reshape(-1, H))))
    assert out_bf.shape == (B2, S2, H)
    assert err_bf < 3e-2, f"bf16 mismatch, max abs err = {err_bf}"

    print("KERNEL_OK")
</pallas_src>

<mosaic_0001>
module attributes {stable_mosaic.version = 11 : i64} {
  func.func @_mlp_kernel(%arg0: i32, %arg1: i32, %arg2: memref<256x256xf32, #tpu.memory_space<vmem>>, %arg3: memref<256x512xf32, #tpu.memory_space<vmem>>, %arg4: memref<256x512xf32, #tpu.memory_space<vmem>>, %arg5: memref<512x256xf32, #tpu.memory_space<vmem>>, %arg6: memref<256x256xf32, #tpu.memory_space<vmem>>, %arg7: memref<256x256xf32, #tpu.memory_space<vmem>>) attributes {dimension_semantics = [#tpu.dimension_semantics<parallel>, #tpu.dimension_semantics<arbitrary>], iteration_bounds = array<i64: 1, 1>, scalar_prefetch = 0 : i64, scratch_operands = 1 : i64, tpu.core_type = #tpu.core_type<tc>, window_params = [{transform_indices = @transform_0, window_bounds = array<i64: 256, 256>}, {transform_indices = @transform_1, window_bounds = array<i64: 256, 512>}, {transform_indices = @transform_2, window_bounds = array<i64: 256, 512>}, {transform_indices = @transform_3, window_bounds = array<i64: 512, 256>}, {transform_indices = @transform_4, window_bounds = array<i64: 256, 256>}]} {
    %c0_i32 = arith.constant 0 : i32
    %0 = arith.cmpi eq, %arg1, %c0_i32 : i32
    %1 = arith.extui %0 : i1 to i32
    %c0_i32_0 = arith.constant 0 : i32
    %2 = arith.cmpi ne, %1, %c0_i32_0 : i32
    scf.if %2 {
      %cst_18 = arith.constant 0.000000e+00 : f32
      %24 = vector.broadcast %cst_18 : f32 to vector<256x256xf32>
      %c0_19 = arith.constant 0 : index
      %c0_20 = arith.constant 0 : index
      %25 = vector.load %arg7[%c0_19, %c0_20] : memref<256x256xf32, #tpu.memory_space<vmem>>, vector<256x256xf32>
      tpu.vector_store %arg7[%c0_19, %c0_20], %24 {strides = array<i32>} : memref<256x256xf32, #tpu.memory_space<vmem>>, vector<256x256xf32>,
    } else {
    }
    %c0 = arith.constant 0 : index
    %c0_1 = arith.constant 0 : index
    %3 = vector.load %arg2[%c0, %c0_1] : memref<256x256xf32, #tpu.memory_space<vmem>>, vector<256x256xf32>
    %c0_2 = arith.constant 0 : index
    %c0_3 = arith.constant 0 : index
    %4 = vector.load %arg3[%c0_2, %c0_3] : memref<256x512xf32, #tpu.memory_space<vmem>>, vector<256x512xf32>
    %cst = arith.constant dense<0.000000e+00> : vector<256x512xf32>
    %5 = tpu.matmul %3, %4, %cst {dimension_numbers = #tpu.dot_dimension_numbers<[1], [0], [0], [1], [0, 0, 1, 1], [], []>} : vector<256x256xf32>, vector<256x512xf32>, vector<256x512xf32> -> vector<256x512xf32>
    %c0_4 = arith.constant 0 : index
    %c0_5 = arith.constant 0 : index
    %6 = vector.load %arg4[%c0_4, %c0_5] : memref<256x512xf32, #tpu.memory_space<vmem>>, vector<256x512xf32>
    %cst_6 = arith.constant dense<0.000000e+00> : vector<256x512xf32>
    %7 = tpu.matmul %3, %6, %cst_6 {dimension_numbers = #tpu.dot_dimension_numbers<[1], [0], [0], [1], [0, 0, 1, 1], [], []>} : vector<256x256xf32>, vector<256x512xf32>, vector<256x512xf32> -> vector<256x512xf32>
    %cst_7 = arith.constant 0.000000e+00 : f32
    %8 = vector.broadcast %cst_7 : f32 to vector<256x512xf32>
    %9 = arith.subf %8, %5 : vector<256x512xf32>
    %10 = math.exp %9 : vector<256x512xf32>
    %cst_8 = arith.constant 1.000000e+00 : f32
    %11 = vector.broadcast %cst_8 : f32 to vector<256x512xf32>
    %12 = arith.addf %11, %10 : vector<256x512xf32>
    %13 = tpu.reciprocal %12 {approx = true} : vector<256x512xf32> -> vector<256x512xf32>
    %14 = arith.mulf %5, %13 : vector<256x512xf32>
    %15 = arith.mulf %14, %7 : vector<256x512xf32>
    %c0_9 = arith.constant 0 : index
    %c0_10 = arith.constant 0 : index
    %16 = vector.load %arg7[%c0_9, %c0_10] : memref<256x256xf32, #tpu.memory_space<vmem>>, vector<256x256xf32>
    %c0_11 = arith.constant 0 : index
    %c0_12 = arith.constant 0 : index
    %17 = vector.load %arg5[%c0_11, %c0_12] : memref<512x256xf32, #tpu.memory_space<vmem>>, vector<512x256xf32>
    %cst_13 = arith.constant dense<0.000000e+00> : vector<256x256xf32>
    %18 = tpu.matmul %15, %17, %cst_13 {dimension_numbers = #tpu.dot_dimension_numbers<[1], [0], [0], [1], [0, 0, 1, 1], [], []>} : vector<256x512xf32>, vector<512x256xf32>, vector<256x256xf32> -> vector<256x256xf32>
    %19 = arith.addf %16, %18 : vector<256x256xf32>
    %c0_14 = arith.constant 0 : index
    %c0_15 = arith.constant 0 : index
    %20 = vector.load %arg7[%c0_14, %c0_15] : memref<256x256xf32, #tpu.memory_space<vmem>>, vector<256x256xf32>
    tpu.vector_store %arg7[%c0_14, %c0_15], %19 {strides = array<i32>} : memref<256x256xf32, #tpu.memory_space<vmem>>, vector<256x256xf32>,
    %c0_i32_16 = arith.constant 0 : i32
    %21 = arith.cmpi eq, %arg1, %c0_i32_16 : i32
    %22 = arith.extui %21 : i1 to i32
    %c0_i32_17 = arith.constant 0 : i32
    %23 = arith.cmpi ne, %22, %c0_i32_17 : i32
    scf.if %23 {
      %c0_18 = arith.constant 0 : index
      %c0_19 = arith.constant 0 : index
      %24 = vector.load %arg7[%c0_18, %c0_19] : memref<256x256xf32, #tpu.memory_space<vmem>>, vector<256x256xf32>
      %c0_20 = arith.constant 0 : index
      %c0_21 = arith.constant 0 : index
      %25 = vector.load %arg6[%c0_20, %c0_21] : memref<256x256xf32, #tpu.memory_space<vmem>>, vector<256x256xf32>
      tpu.vector_store %arg6[%c0_20, %c0_21], %24 {strides = array<i32>} : memref<256x256xf32, #tpu.memory_space<vmem>>, vector<256x256xf32>,
    } else {
    }
    return
  }
  func.func @transform_0(%arg0: i32, %arg1: i32) -> (i32, i32) {
    %c0_i32 = arith.constant 0 : i32
    %c0_i32_0 = arith.constant 0 : i32
    return %arg0, %c0_i32 : i32, i32
  }
  func.func @transform_1(%arg0: i32, %arg1: i32) -> (i32, i32) {
    %c0_i32 = arith.constant 0 : i32
    %c0_i32_0 = arith.constant 0 : i32
    return %c0_i32, %arg1 : i32, i32
  }
  func.func @transform_2(%arg0: i32, %arg1: i32) -> (i32, i32) {
    %c0_i32 = arith.constant 0 : i32
    %c0_i32_0 = arith.constant 0 : i32
    return %c0_i32, %arg1 : i32, i32
  }
  func.func @transform_3(%arg0: i32, %arg1: i32) -> (i32, i32) {
    %c0_i32 = arith.constant 0 : i32
    %c0_i32_0 = arith.constant 0 : i32
    return %arg1, %c0_i32 : i32, i32
  }
  func.func @transform_4(%arg0: i32, %arg1: i32) -> (i32, i32) {
    %c0_i32 = arith.constant 0 : i32
    %c0_i32_0 = arith.constant 0 : i32
    return %arg0, %c0_i32 : i32, i32
  }
}

</mosaic_0001>

<llo_original>
// kernel: llama_mlp.1
$region0: #{llama_mlp.1}
  #allocation0 [shape = 'u32[]', space=smem, size = 0x4, offset = 0x4, fixed_abs, tag = 'smem constant byte address 0x4 - core index']
  #allocation1 [shape = 'u32[144,128]{1,0:T(1,128)}', space=vmem, size = 0x12000, scoped, tag = 'internal scratch']
  #allocation2 [shape = 'f32[256,256]{1,0:T(8,128)}', space=vmem, size = 0x40000, scoped, tag = 'scratch operand']
  %s0 = inlined_call_operand.vmem [shape: f32[256,256], index: 0, kind: input, shape index: {}]
  %s1 = inlined_call_operand.hbm [shape: f32[256,512], index: 1, kind: input, shape index: {}]
  %s2 = inlined_call_operand.hbm [shape: f32[256,512], index: 2, kind: input, shape index: {}]
  %s3 = inlined_call_operand.hbm [shape: f32[512,256], index: 3, kind: input, shape index: {}]
  %s4 = inlined_call_operand.vmem [shape: f32[256,256], index: 4, kind: output, shape index: {}]
  %s5 = sld [smem:[#allocation0]]
  $region46: #{llama_mlp.1} parent=0
    _
  %s7 = ssub.s32 1, %s5
  %s8 = scalar_select 0, %s7, %s5
  $region1: #{llama_mlp.1} parent=0
    #allocation3 [shape = 'u8[524288]{0}', space=vmem, size = 0x80000, scoped, tag = 'input window, operand 1, single buffered']
    #allocation4 [shape = 's32[1]{0}', space=sflag, size = 0x4, scoped, tag = 'scoped memory for llama_mlp.1']
    #allocation5 [shape = 'u8[524288]{0}', space=vmem, size = 0x80000, scoped, tag = 'input window, operand 2, single buffered']
    #allocation6 [shape = 's32[1]{0}', space=sflag, size = 0x4, scoped, tag = 'scoped memory for llama_mlp.1']
    #allocation7 [shape = 'u8[524288]{0}', space=vmem, size = 0x80000, scoped, tag = 'input window, operand 3, single buffered']
    %9 = vsyncpa [#allocation4], 0
    %10 = vsyncpa [#allocation6], 0
    // Predicated region
    $region2: #{llama_mlp.1} parent=1 // pred_check
      _
    $region3: #{llama_mlp.1} parent=1 // pred_check_branch
      %12 = sbr.rel (0) target = $region5
    $region4: #{llama_mlp.1} parent=1 // pred_region
      _
    $region5: #{llama_mlp.1} parent=1 // pred_fallthru
      _
    // Predicated region
    $region6: #{llama_mlp.1} parent=1 // pred_check
      _
    $region7: #{llama_mlp.1} parent=1 // pred_check_branch
      %14 = sbr.rel (0) target = $region9
    $region8: #{llama_mlp.1} parent=1 // pred_region
      %s16 = ssub.s32 16384, 16384
      %17 = vsyncadd [#allocation4], %s16
      %s18 = sshll.u32 [#allocation3], 4
      %s19 = int_to_ptr.vmem [resolvable:$true] %s18
      %24 = dma.hbm_to_vmem [thread:$0]  %s1, 16384, %s19, [#allocation4], 512, 512, 32
    $region9: #{llama_mlp.1} parent=1 // pred_fallthru
      _
    // Predicated region
    $region10: #{llama_mlp.1} parent=1 // pred_check
      _
    $region11: #{llama_mlp.1} parent=1 // pred_check_branch
      %26 = sbr.rel (0) target = $region13
    $region12: #{llama_mlp.1} parent=1 // pred_region
      %s28 = ssub.s32 16384, 16384
      %29 = vsyncadd [#allocation6], %s28
      %s30 = sshll.u32 [#allocation5], 4
      %s31 = int_to_ptr.vmem [resolvable:$true] %s30
      %36 = dma.hbm_to_vmem [thread:$0]  %s2, 16384, %s31, [#allocation6], 512, 512, 32
    $region13: #{llama_mlp.1} parent=1 // pred_fallthru
      _
    // Predicated region
    $region14: #{llama_mlp.1} parent=1 // pred_check
      _
    $region15: #{llama_mlp.1} parent=1 // pred_check_branch
      %38 = sbr.rel (0) target = $region17
    $region16: #{llama_mlp.1} parent=1 // pred_region
      %s40 = ssub.s32 16384, 16384
      %41 = vsyncadd [#allocation6], %s40
      %s42 = sshll.u32 [#allocation7], 4
      %s43 = int_to_ptr.vmem [resolvable:$true] %s42
      %48 = dma.hbm_to_vmem [thread:$0]  %s3, 16384, %s43, [#allocation6], 256, 256, 16
    $region17: #{llama_mlp.1} parent=1 // pred_fallthru
      _
    // Predicated region
    $region18: #{llama_mlp.1} parent=1 // pred_check
      _
    $region19: #{llama_mlp.1} parent=1 // pred_check_branch
      %50 = sbr.rel (0) target = $region21
    $region20: #{llama_mlp.1} parent=1 // pred_region
      %51 = dma.done [#allocation4], 16384
    $region21: #{llama_mlp.1} parent=1 // pred_fallthru
      _
    // Predicated region
    $region22: #{llama_mlp.1} parent=1 // pred_check
      _
    $region23: #{llama_mlp.1} parent=1 // pred_check_branch
      %53 = sbr.rel (0) target = $region25
    $region24: #{llama_mlp.1} parent=1 // pred_region
      %54 = dma.done [#allocation6], 16384
    $region25: #{llama_mlp.1} parent=1 // pred_fallthru
      _
    // Predicated region
    $region26: #{llama_mlp.1} parent=1 // pred_check
      _
    $region27: #{llama_mlp.1} parent=1 // pred_check_branch
      %56 = sbr.rel (0) target = $region29
    $region28: #{llama_mlp.1} parent=1 // pred_region
      %57 = dma.done [#allocation6], 16384
    $region29: #{llama_mlp.1} parent=1 // pred_fallthru
      _
    %p58 = scmp.eq.s32.totalorder 0, 0
    // Predicated region
    $region30: #{llama_mlp.1} parent=1 // pred_check
      %p59 = pneg %p58
    $region31: #{llama_mlp.1} parent=1 // pred_check_branch
      %61 = sbr.rel (%p59) target = $region33
    $region32: #{llama_mlp.1} parent=1 // pred_region
      %62 = vst [vmem:[#allocation2] sm:$0xff] 0.0
      %63 = vst [vmem:[#allocation2 + $0x8] sm:$0xff] 0.0
      %64 = vst [vmem:[#allocation2 + $0x10] sm:$0xff] 0.0
      %65 = vst [vmem:[#allocation2 + $0x18] sm:$0xff] 0.0
      %66 = vst [vmem:[#allocation2 + $0x20] sm:$0xff] 0.0
      %67 = vst [vmem:[#allocation2 + $0x28] sm:$0xff] 0.0
      %68 = vst [vmem:[#allocation2 + $0x30] sm:$0xff] 0.0
      %69 = vst [vmem:[#allocation2 + $0x38] sm:$0xff] 0.0
      %70 = vst [vmem:[#allocation2 + $0x40] sm:$0xff] 0.0
      %71 = vst [vmem:[#allocation2 + $0x48] sm:$0xff] 0.0
      %72 = vst [vmem:[#allocation2 + $0x50] sm:$0xff] 0.0
      %73 = vst [vmem:[#allocation2 + $0x58] sm:$0xff] 0.0
      %74 = vst [vmem:[#allocation2 + $0x60] sm:$0xff] 0.0
      %75 = vst [vmem:[#allocation2 + $0x68] sm:$0xff] 0.0
      %76 = vst [vmem:[#allocation2 + $0x70] sm:$0xff] 0.0
      %77 = vst [vmem:[#allocation2 + $0x78] sm:$0xff] 0.0
      %78 = vst [vmem:[#allocation2 + $0x80] sm:$0xff] 0.0
      %79 = vst [vmem:[#allocation2 + $0x88] sm:$0xff] 0.0
      %80 = vst [vmem:[#allocation2 + $0x90] sm:$0xff] 0.0
      %81 = vst [vmem:[#allocation2 + $0x98] sm:$0xff] 0.0
      %82 = vst [vmem:[#allocation2 + $0xa0] sm:$0xff] 0.0
      %83 = vst [vmem:[#allocation2 + $0xa8] sm:$0xff] 0.0
      %84 = vst [vmem:[#allocation2 + $0xb0] sm:$0xff] 0.0
      %85 = vst [vmem:[#allocation2 + $0xb8] sm:$0xff] 0.0
      %86 = vst [vmem:[#allocation2 + $0xc0] sm:$0xff] 0.0
      %87 = vst [vmem:[#allocation2 + $0xc8] sm:$0xff] 0.0
      %88 = vst [vmem:[#allocation2 + $0xd0] sm:$0xff] 0.0
      %89 = vst [vmem:[#allocation2 + $0xd8] sm:$0xff] 0.0
      %90 = vst [vmem:[#allocation2 + $0xe0] sm:$0xff] 0.0
      %91 = vst [vmem:[#allocation2 + $0xe8] sm:$0xff] 0.0
      %92 = vst [vmem:[#allocation2 + $0xf0] sm:$0xff] 0.0
      %93 = vst [vmem:[#allocation2 + $0xf8] sm:$0xff] 0.0
      %94 = vst [vmem:[#allocation2 + $0x100] sm:$0xff] 0.0
      %95 = vst [vmem:[#allocation2 + $0x108] sm:$0xff] 0.0
      %96 = vst [vmem:[#allocation2 + $0x110] sm:$0xff] 0.0
      %97 = vst [vmem:[#allocation2 + $0x118] sm:$0xff] 0.0
      %98 = vst [vmem:[#allocation2 + $0x120] sm:$0xff] 0.0
      %99 = vst [vmem:[#allocation2 + $0x128] sm:$0xff] 0.0
      %100 = vst [vmem:[#allocation2 + $0x130] sm:$0xff] 0.0
      %101 = vst [vmem:[#allocation2 + $0x138] sm:$0xff] 0.0
      %102 = vst [vmem:[#allocation2 + $0x140] sm:$0xff] 0.0
      %103 = vst [vmem:[#allocation2 + $0x148] sm:$0xff] 0.0
      %104 = vst [vmem:[#allocation2 + $0x150] sm:$0xff] 0.0
      %105 = vst [vmem:[#allocation2 + $0x158] sm:$0xff] 0.0
      %106 = vst [vmem:[#allocation2 + $0x160] sm:$0xff] 0.0
      %107 = vst [vmem:[#allocation2 + $0x168] sm:$0xff] 0.0
      %108 = vst [vmem:[#allocation2 + $0x170] sm:$0xff] 0.0
      %109 = vst [vmem:[#allocation2 + $0x178] sm:$0xff] 0.0
      %110 = vst [vmem:[#allocation2 + $0x180] sm:$0xff] 0.0
      %111 = vst [vmem:[#allocation2 + $0x188] sm:$0xff] 0.0
      %112 = vst [vmem:[#allocation2 + $0x190] sm:$0xff] 0.0
      %113 = vst [vmem:[#allocation2 + $0x198] sm:$0xff] 0.0
      %114 = vst [vmem:[#allocation2 + $0x1a0] sm:$0xff] 0.0
      %115 = vst [vmem:[#allocation2 + $0x1a8] sm:$0xff] 0.0
      %116 = vst [vmem:[#allocation2 + $0x1b0] sm:$0xff] 0.0
      %117 = vst [vmem:[#allocation2 + $0x1b8] sm:$0xff] 0.0
      %118 = vst [vmem:[#allocation2 + $0x1c0] sm:$0xff] 0.0
      %119 = vst [vmem:[#allocation2 + $0x1c8] sm:$0xff] 0.0
      %120 = vst [vmem:[#allocation2 + $0x1d0] sm:$0xff] 0.0
      %121 = vst [vmem:[#allocation2 + $0x1d8] sm:$0xff] 0.0
      %122 = vst [vmem:[#allocation2 + $0x1e0] sm:$0xff] 0.0
      %123 = vst [vmem:[#allocation2 + $0x1e8] sm:$0xff] 0.0
      %124 = vst [vmem:[#allocation2 + $0x1f0] sm:$0xff] 0.0
      %125 = vst [vmem:[#allocation2 + $0x1f8] sm:$0xff] 0.0
    $region33: #{llama_mlp.1} parent=1 // pred_fallthru
      _
    %v126 = vld [vmem:[%s0] sm:$0xff]
    %v127 = vld [vmem:[%s0 + $0x8] sm:$0xff]
    %v128 = vld [vmem:[%s0 + $0x10] sm:$0xff]
    %v129 = vld [vmem:[%s0 + $0x18] sm:$0xff]
    %v130 = vld [vmem:[%s0 + $0x20] sm:$0xff]
    %v131 = vld [vmem:[%s0 + $0x28] sm:$0xff]
    %v132 = vld [vmem:[%s0 + $0x30] sm:$0xff]
    %v133 = vld [vmem:[%s0 + $0x38] sm:$0xff]
    %v134 = vld [vmem:[%s0 + $0x40] sm:$0xff]
    %v135 = vld [vmem:[%s0 + $0x48] sm:$0xff]
    %v136 = vld [vmem:[%s0 + $0x50] sm:$0xff]
    %v137 = vld [vmem:[%s0 + $0x58] sm:$0xff]
    %v138 = vld [vmem:[%s0 + $0x60] sm:$0xff]
    %v139 = vld [vmem:[%s0 + $0x68] sm:$0xff]
    %v140 = vld [vmem:[%s0 + $0x70] sm:$0xff]
    %v141 = vld [vmem:[%s0 + $0x78] sm:$0xff]
    %v142 = vld [vmem:[%s0 + $0x80] sm:$0xff]
    %v143 = vld [vmem:[%s0 + $0x88] sm:$0xff]
    %v144 = vld [vmem:[%s0 + $0x90] sm:$0xff]
    %v145 = vld [vmem:[%s0 + $0x98] sm:$0xff]
    %v146 = vld [vmem:[%s0 + $0xa0] sm:$0xff]
    %v147 = vld [vmem:[%s0 + $0xa8] sm:$0xff]
    %v148 = vld [vmem:[%s0 + $0xb0] sm:$0xff]
    %v149 = vld [vmem:[%s0 + $0xb8] sm:$0xff]
    %v150 = vld [vmem:[%s0 + $0xc0] sm:$0xff]
    %v151 = vld [vmem:[%s0 + $0xc8] sm:$0xff]
    %v152 = vld [vmem:[%s0 + $0xd0] sm:$0xff]
    %v153 = vld [vmem:[%s0 + $0xd8] sm:$0xff]
    %v154 = vld [vmem:[%s0 + $0xe0] sm:$0xff]
    %v155 = vld [vmem:[%s0 + $0xe8] sm:$0xff]
    %v156 = vld [vmem:[%s0 + $0xf0] sm:$0xff]
    %v157 = vld [vmem:[%s0 + $0xf8] sm:$0xff]
    %v158 = vld [vmem:[%s0 + $0x100] sm:$0xff]
    %v159 = vld [vmem:[%s0 + $0x108] sm:$0xff]
    %v160 = vld [vmem:[%s0 + $0x110] sm:$0xff]
    %v161 = vld [vmem:[%s0 + $0x118] sm:$0xff]
    %v162 = vld [vmem:[%s0 + $0x120] sm:$0xff]
    %v163 = vld [vmem:[%s0 + $0x128] sm:$0xff]
    %v164 = vld [vmem:[%s0 + $0x130] sm:$0xff]
    %v165 = vld [vmem:[%s0 + $0x138] sm:$0xff]
    %v166 = vld [vmem:[%s0 + $0x140] sm:$0xff]
    %v167 = vld [vmem:[%s0 + $0x148] sm:$0xff]
    %v168 = vld [vmem:[%s0 + $0x150] sm:$0xff]
    %v169 = vld [vmem:[%s0 + $0x158] sm:$0xff]
    %v170 = vld [vmem:[%s0 + $0x160] sm:$0xff]
    %v171 = vld [vmem:[%s0 + $0x168] sm:$0xff]
    %v172 = vld [vmem:[%s0 + $0x170] sm:$0xff]
    %v173 = vld [vmem:[%s0 + $0x178] sm:$0xff]
    %v174 = vld [vmem:[%s0 + $0x180] sm:$0xff]
    %v175 = vld [vmem:[%s0 + $0x188] sm:$0xff]
    %v176 = vld [vmem:[%s0 + $0x190] sm:$0xff]
    %v177 = vld [vmem:[%s0 + $0x198] sm:$0xff]
    %v178 = vld [vmem:[%s0 + $0x1a0] sm:$0xff]
    %v179 = vld [vmem:[%s0 + $0x1a8] sm:$0xff]
    %v180 = vld [vmem:[%s0 + $0x1b0] sm:$0xff]
    %v181 = vld [vmem:[%s0 + $0x1b8] sm:$0xff]
    %v182 = vld [vmem:[%s0 + $0x1c0] sm:$0xff]
    %v183 = vld [vmem:[%s0 + $0x1c8] sm:$0xff]
    %v184 = vld [vmem:[%s0 + $0x1d0] sm:$0xff]
    %v185 = vld [vmem:[%s0 + $0x1d8] sm:$0xff]
    %v186 = vld [vmem:[%s0 + $0x1e0] sm:$0xff]
    %v187 = vld [vmem:[%s0 + $0x1e8] sm:$0xff]
    %v188 = vld [vmem:[%s0 + $0x1f0] sm:$0xff]
    %v189 = vld [vmem:[%s0 + $0x1f8] sm:$0xff]
    %v190 = vld [vmem:[#allocation3] sm:$0xff]
    %v191 = vld [vmem:[#allocation3 + $0x8] sm:$0xff]
    %v192 = vld [vmem:[#allocation3 + $0x10] sm:$0xff]
    %v193 = vld [vmem:[#allocation3 + $0x18] sm:$0xff]
    %v194 = vld [vmem:[#allocation3 + $0x20] sm:$0xff]
    %v195 = vld [vmem:[#allocation3 + $0x28] sm:$0xff]
    %v196 = vld [vmem:[#allocation3 + $0x30] sm:$0xff]
    %v197 = vld [vmem:[#allocation3 + $0x38] sm:$0xff]
    %v198 = vld [vmem:[#allocation3 + $0x40] sm:$0xff]
    %v199 = vld [vmem:[#allocation3 + $0x48] sm:$0xff]
    %v200 = vld [vmem:[#allocation3 + $0x50] sm:$0xff]
    %v201 = vld [vmem:[#allocation3 + $0x58] sm:$0xff]
    %v202 = vld [vmem:[#allocation3 + $0x60] sm:$0xff]
    %v203 = vld [vmem:[#allocation3 + $0x68] sm:$0xff]
    %v204 = vld [vmem:[#allocation3 + $0x70] sm:$0xff]
    %v205 = vld [vmem:[#allocation3 + $0x78] sm:$0xff]
    %v206 = vld [vmem:[#allocation3 + $0x80] sm:$0xff]
    %v207 = vld [vmem:[#allocation3 + $0x88] sm:$0xff]
    %v208 = vld [vmem:[#allocation3 + $0x90] sm:$0xff]
    %v209 = vld [vmem:[#allocation3 + $0x98] sm:$0xff]
    %v210 = vld [vmem:[#allocation3 + $0xa0] sm:$0xff]
    %v211 = vld [vmem:[#allocation3 + $0xa8] sm:$0xff]
    %v212 = vld [vmem:[#allocation3 + $0xb0] sm:$0xff]
    %v213 = vld [vmem:[#allocation3 + $0xb8] sm:$0xff]
    %v214 = vld [vmem:[#allocation3 + $0xc0] sm:$0xff]
    %v215 = vld [vmem:[#allocation3 + $0xc8] sm:$0xff]
    %v216 = vld [vmem:[#allocation3 + $0xd0] sm:$0xff]
    %v217 = vld [vmem:[#allocation3 + $0xd8] sm:$0xff]
    %v218 = vld [vmem:[#allocation3 + $0xe0] sm:$0xff]
    %v219 = vld [vmem:[#allocation3 + $0xe8] sm:$0xff]
    %v220 = vld [vmem:[#allocation3 + $0xf0] sm:$0xff]
    %v221 = vld [vmem:[#allocation3 + $0xf8] sm:$0xff]
    %v222 = vld [vmem:[#allocation3 + $0x100] sm:$0xff]
    %v223 = vld [vmem:[#allocation3 + $0x108] sm:$0xff]
    %v224 = vld [vmem:[#allocation3 + $0x110] sm:$0xff]
    %v225 = vld [vmem:[#allocation3 + $0x118] sm:$0xff]
    %v226 = vld [vmem:[#allocation3 + $0x120] sm:$0xff]
    %v227 = vld [vmem:[#allocation3 + $0x128] sm:$0xff]
    %v228 = vld [vmem:[#allocation3 + $0x130] sm:$0xff]
    %v229 = vld [vmem:[#allocation3 + $0x138] sm:$0xff]
    %v230 = vld [vmem:[#allocation3 + $0x140] sm:$0xff]
    %v231 = vld [vmem:[#allocation3 + $0x148] sm:$0xff]
    %v232 = vld [vmem:[#allocation3 + $0x150] sm:$0xff]
    %v233 = vld [vmem:[#allocation3 + $0x158] sm:$0xff]
    %v234 = vld [vmem:[#allocation3 + $0x160] sm:$0xff]
    %v235 = vld [vmem:[#allocation3 + $0x168] sm:$0xff]
    %v236 = vld [vmem:[#allocation3 + $0x170] sm:$0xff]
    %v237 = vld [vmem:[#allocation3 + $0x178] sm:$0xff]
    %v238 = vld [vmem:[#allocation3 + $0x180] sm:$0xff]
    %v239 = vld [vmem:[#allocation3 + $0x188] sm:$0xff]
    %v240 = vld [vmem:[#allocation3 + $0x190] sm:$0xff]
    %v241 = vld [vmem:[#allocation3 + $0x198] sm:$0xff]
    %v242 = vld [vmem:[#allocation3 + $0x1a0] sm:$0xff]
    %v243 = vld [vmem:[#allocation3 + $0x1a8] sm:$0xff]
    %v244 = vld [vmem:[#allocation3 + $0x1b0] sm:$0xff]
    %v245 = vld [vmem:[#allocation3 + $0x1b8] sm:$0xff]
    %v246 = vld [vmem:[#allocation3 + $0x1c0] sm:$0xff]
    %v247 = vld [vmem:[#allocation3 + $0x1c8] sm:$0xff]
    %v248 = vld [vmem:[#allocation3 + $0x1d0] sm:$0xff]
    %v249 = vld [vmem:[#allocation3 + $0x1d8] sm:$0xff]
    %v250 = vld [vmem:[#allocation3 + $0x1e0] sm:$0xff]
    %v251 = vld [vmem:[#allocation3 + $0x1e8] sm:$0xff]
    %v252 = vld [vmem:[#allocation3 + $0x1f0] sm:$0xff]
    %v253 = vld [vmem:[#allocation3 + $0x1f8] sm:$0xff]
    %v254 = vld [vmem:[#allocation3 + $0x200] sm:$0xff]
    %v255 = vld [vmem:[#allocation3 + $0x208] sm:$0xff]
    %v256 = vld [vmem:[#allocation3 + $0x210] sm:$0xff]
    %v257 = vld [vmem:[#allocation3 + $0x218] sm:$0xff]
    %v258 = vld [vmem:[#allocation3 + $0x220] sm:$0xff]
    %v259 = vld [vmem:[#allocation3 + $0x228] sm:$0xff]
    %v260 = vld [vmem:[#allocation3 + $0x230] sm:$0xff]
    %v261 = vld [vmem:[#allocation3 + $0x238] sm:$0xff]
    %v262 = vld [vmem:[#allocation3 + $0x240] sm:$0xff]
    %v263 = vld [vmem:[#allocation3 + $0x248] sm:$0xff]
    %v264 = vld [vmem:[#allocation3 + $0x250] sm:$0xff]
    %v265 = vld [vmem:[#allocation3 + $0x258] sm:$0xff]
    %v266 = vld [vmem:[#allocation3 + $0x260] sm:$0xff]
    %v267 = vld [vmem:[#allocation3 + $0x268] sm:$0xff]
    %v268 = vld [vmem:[#allocation3 + $0x270] sm:$0xff]
    %v269 = vld [vmem:[#allocation3 + $0x278] sm:$0xff]
    %v270 = vld [vmem:[#allocation3 + $0x280] sm:$0xff]
    %v271 = vld [vmem:[#allocation3 + $0x288] sm:$0xff]
    %v272 = vld [vmem:[#allocation3 + $0x290] sm:$0xff]
    %v273 = vld [vmem:[#allocation3 + $0x298] sm:$0xff]
    %v274 = vld [vmem:[#allocation3 + $0x2a0] sm:$0xff]
    %v275 = vld [vmem:[#allocation3 + $0x2a8] sm:$0xff]
    %v276 = vld [vmem:[#allocation3 + $0x2b0] sm:$0xff]
    %v277 = vld [vmem:[#allocation3 + $0x2b8] sm:$0xff]
    %v278 = vld [vmem:[#allocation3 + $0x2c0] sm:$0xff]
    %v279 = vld [vmem:[#allocation3 + $0x2c8] sm:$0xff]
    %v280 = vld [vmem:[#allocation3 + $0x2d0] sm:$0xff]
    %v281 = vld [vmem:[#allocation3 + $0x2d8] sm:$0xff]
    %v282 = vld [vmem:[#allocation3 + $0x2e0] sm:$0xff]
    %v283 = vld [vmem:[#allocation3 + $0x2e8] sm:$0xff]
    %v284 = vld [vmem:[#allocation3 + $0x2f0] sm:$0xff]
    %v285 = vld [vmem:[#allocation3 + $0x2f8] sm:$0xff]
    %v286 = vld [vmem:[#allocation3 + $0x300] sm:$0xff]
    %v287 = vld [vmem:[#allocation3 + $0x308] sm:$0xff]
    %v288 = vld [vmem:[#allocation3 + $0x310] sm:$0xff]
    %v289 = vld [vmem:[#allocation3 + $0x318] sm:$0xff]
    %v290 = vld [vmem:[#allocation3 + $0x320] sm:$0xff]
    %v291 = vld [vmem:[#allocation3 + $0x328] sm:$0xff]
    %v292 = vld [vmem:[#allocation3 + $0x330] sm:$0xff]
    %v293 = vld [vmem:[#allocation3 + $0x338] sm:$0xff]
    %v294 = vld [vmem:[#allocation3 + $0x340] sm:$0xff]
    %v295 = vld [vmem:[#allocation3 + $0x348] sm:$0xff]
    %v296 = vld [vmem:[#allocation3 + $0x350] sm:$0xff]
    %v297 = vld [vmem:[#allocation3 + $0x358] sm:$0xff]
    %v298 = vld [vmem:[#allocation3 + $0x360] sm:$0xff]
    %v299 = vld [vmem:[#allocation3 + $0x368] sm:$0xff]
    %v300 = vld [vmem:[#allocation3 + $0x370] sm:$0xff]
    %v301 = vld [vmem:[#allocation3 + $0x378] sm:$0xff]
    %v302 = vld [vmem:[#allocation3 + $0x380] sm:$0xff]
    %v303 = vld [vmem:[#allocation3 + $0x388] sm:$0xff]
    %v304 = vld [vmem:[#allocation3 + $0x390] sm:$0xff]
    %v305 = vld [vmem:[#allocation3 + $0x398] sm:$0xff]
    %v306 = vld [vmem:[#allocation3 + $0x3a0] sm:$0xff]
    %v307 = vld [vmem:[#allocation3 + $0x3a8] sm:$0xff]
    %v308 = vld [vmem:[#allocation3 + $0x3b0] sm:$0xff]
    %v309 = vld [vmem:[#allocation3 + $0x3b8] sm:$0xff]
    %v310 = vld [vmem:[#allocation3 + $0x3c0] sm:$0xff]
    %v311 = vld [vmem:[#allocation3 + $0x3c8] sm:$0xff]
    %v312 = vld [vmem:[#allocation3 + $0x3d0] sm:$0xff]
    %v313 = vld [vmem:[#allocation3 + $0x3d8] sm:$0xff]
    %v314 = vld [vmem:[#allocation3 + $0x3e0] sm:$0xff]
    %v315 = vld [vmem:[#allocation3 + $0x3e8] sm:$0xff]
    %v316 = vld [vmem:[#allocation3 + $0x3f0] sm:$0xff]
    %v317 = vld [vmem:[#allocation3 + $0x3f8] sm:$0xff]
    %318 = vmatprep.subr.mxu0 %v251
    %319 = vmatpush1.msra.mxu0 %v250
    %320 = vmatprep.subr.mxu0 %v247
    %321 = vmatpush1.msra.mxu0 %v246
    %322 = vmatprep.subr.mxu0 %v243
    %323 = vmatpush1.msra.mxu0 %v242
    %324 = vmatprep.subr.mxu0 %v239
    %325 = vmatpush1.msra.mxu0 %v238
    %326 = vmatprep.subr.mxu0 %v235
    %327 = vmatpush1.msra.mxu0 %v234
    %328 = vmatprep.subr.mxu0 %v231
    %329 = vmatpush1.msra.mxu0 %v230
    %330 = vmatprep.subr.mxu0 %v227
    %331 = vmatpush1.msra.mxu0 %v226
    %332 = vmatprep.subr.mxu0 %v223
    %333 = vmatpush1.msra.mxu0 %v222
    %334 = vmatprep.subr.mxu0 %v219
    %335 = vmatpush1.msra.mxu0 %v218
    %336 = vmatprep.subr.mxu0 %v215
    %337 = vmatpush1.msra.mxu0 %v214
    %338 = vmatprep.subr.mxu0 %v211
    %339 = vmatpush1.msra.mxu0 %v210
    %340 = vmatprep.subr.mxu0 %v207
    %341 = vmatpush1.msra.mxu0 %v206
    %342 = vmatprep.subr.mxu0 %v203
    %343 = vmatpush1.msra.mxu0 %v202
    %344 = vmatprep.subr.mxu0 %v199
    %345 = vmatpush1.msra.mxu0 %v198
    %346 = vmatprep.subr.mxu0 %v195
    %347 = vmatpush1.msra.mxu0 %v194
    %348 = vmatprep.subr.mxu0 %v191
    %349 = vmatpush1.msra.mxu0 %v190
    %350 = vmatprep.subr.mxu0 %v315
    %351 = vmatpush2.msra.mxu0 %v314
    %352 = vmatprep.subr.mxu0 %v311
    %353 = vmatpush2.msra.mxu0 %v310
    %354 = vmatprep.subr.mxu0 %v307
    %355 = vmatpush2.msra.mxu0 %v306
    %356 = vmatprep.subr.mxu0 %v303
    %357 = vmatpush2.msra.mxu0 %v302
    %358 = vmatprep.subr.mxu0 %v299
    %359 = vmatpush2.msra.mxu0 %v298
    %360 = vmatprep.subr.mxu0 %v295
    %361 = vmatpush2.msra.mxu0 %v294
    %362 = vmatprep.subr.mxu0 %v291
    %363 = vmatpush2.msra.mxu0 %v290
    %364 = vmatprep.subr.mxu0 %v287
    %365 = vmatpush2.msra.mxu0 %v286
    %366 = vmatprep.subr.mxu0 %v283
    %367 = vmatpush2.msra.mxu0 %v282
    %368 = vmatprep.subr.mxu0 %v279
    %369 = vmatpush2.msra.mxu0 %v278
    %370 = vmatprep.subr.mxu0 %v275
    %371 = vmatpush2.msra.mxu0 %v274
    %372 = vmatprep.subr.mxu0 %v271
    %373 = vmatpush2.msra.mxu0 %v270
    %374 = vmatprep.subr.mxu0 %v267
    %375 = vmatpush2.msra.mxu0 %v266
    %376 = vmatprep.subr.mxu0 %v263
    %377 = vmatpush2.msra.mxu0 %v262
    %378 = vmatprep.subr.mxu0 %v259
    %379 = vmatpush2.msra.mxu0 %v258
    %380 = vmatprep.subr.mxu0 %v255
    %381 = vmatpush2.msra.mxu0 %v254
    %382 = vmatprep.mubr.f32.mxu0 %v127
    %383 = vmatmul.mubr.f32.gmra.mxu0 %v126
    %v384 = vpop.f32.mrf.mxu0
    %v385 = vadd.f32 0.0, %v384
    %v386 = vpop.f32.mrf.mxu0
    %v387 = vadd.f32 0.0, %v386
    %388 = vmatprep.mubr.f32.mxu0 %v129
    %389 = vmatmul.mubr.f32.gmra.mxu0 %v128
    %v390 = vpop.f32.mrf.mxu0
    %v391 = vadd.f32 0.0, %v390
    %v392 = vpop.f32.mrf.mxu0
    %v393 = vadd.f32 0.0, %v392
    %394 = vmatprep.mubr.f32.mxu0 %v131
    %395 = vmatmul.mubr.f32.gmra.mxu0 %v130
    %v396 = vpop.f32.mrf.mxu0
    %v397 = vadd.f32 0.0, %v396
    %v398 = vpop.f32.mrf.mxu0
    %v399 = vadd.f32 0.0, %v398
    %400 = vmatprep.mubr.f32.mxu0 %v133
    %401 = vmatmul.mubr.f32.gmra.mxu0 %v132
    %v402 = vpop.f32.mrf.mxu0
    %v403 = vadd.f32 0.0, %v402
    %v404 = vpop.f32.mrf.mxu0
    %v405 = vadd.f32 0.0, %v404
    %406 = vmatprep.mubr.f32.mxu0 %v135
    %407 = vmatmul.mubr.f32.gmra.mxu0 %v134
    %v408 = vpop.f32.mrf.mxu0
    %v409 = vadd.f32 0.0, %v408
    %v410 = vpop.f32.mrf.mxu0
    %v411 = vadd.f32 0.0, %v410
    %412 = vmatprep.mubr.f32.mxu0 %v137
    %413 = vmatmul.mubr.f32.gmra.mxu0 %v136
    %v414 = vpop.f32.mrf.mxu0
    %v415 = vadd.f32 0.0, %v414
    %v416 = vpop.f32.mrf.mxu0
    %v417 = vadd.f32 0.0, %v416
    %418 = vmatprep.mubr.f32.mxu0 %v139
    %419 = vmatmul.mubr.f32.gmra.mxu0 %v138
    %v420 = vpop.f32.mrf.mxu0
    %v421 = vadd.f32 0.0, %v420
    %v422 = vpop.f32.mrf.mxu0
    %v423 = vadd.f32 0.0, %v422
    %424 = vmatprep.mubr.f32.mxu0 %v141
    %425 = vmatmul.mubr.f32.gmra.mxu0 %v140
    %v426 = vpop.f32.mrf.mxu0
    %v427 = vadd.f32 0.0, %v426
    %v428 = vpop.f32.mrf.mxu0
    %v429 = vadd.f32 0.0, %v428
    %430 = vmatprep.mubr.f32.mxu0 %v143
    %431 = vmatmul.mubr.f32.gmra.mxu0 %v142
    %v432 = vpop.f32.mrf.mxu0
    %v433 = vadd.f32 0.0, %v432
    %v434 = vpop.f32.mrf.mxu0
    %v435 = vadd.f32 0.0, %v434
    %436 = vmatprep.mubr.f32.mxu0 %v145
    %437 = vmatmul.mubr.f32.gmra.mxu0 %v144
    %v438 = vpop.f32.mrf.mxu0
    %v439 = vadd.f32 0.0, %v438
    %v440 = vpop.f32.mrf.mxu0
    %v441 = vadd.f32 0.0, %v440
    %442 = vmatprep.mubr.f32.mxu0 %v147
    %443 = vmatmul.mubr.f32.gmra.mxu0 %v146
    %v444 = vpop.f32.mrf.mxu0
    %v445 = vadd.f32 0.0, %v444
    %v446 = vpop.f32.mrf.mxu0
    %v447 = vadd.f32 0.0, %v446
    %448 = vmatprep.mubr.f32.mxu0 %v149
    %449 = vmatmul.mubr.f32.gmra.mxu0 %v148
    %v450 = vpop.f32.mrf.mxu0
    %v451 = vadd.f32 0.0, %v450
    %v452 = vpop.f32.mrf.mxu0
    %v453 = vadd.f32 0.0, %v452
    %454 = vmatprep.mubr.f32.mxu0 %v151
    %455 = vmatmul.mubr.f32.gmra.mxu0 %v150
    %v456 = vpop.f32.mrf.mxu0
    %v457 = vadd.f32 0.0, %v456
    %v458 = vpop.f32.mrf.mxu0
    %v459 = vadd.f32 0.0, %v458
    %460 = vmatprep.mubr.f32.mxu0 %v153
    %461 = vmatmul.mubr.f32.gmra.mxu0 %v152
    %v462 = vpop.f32.mrf.mxu0
    %v463 = vadd.f32 0.0, %v462
    %v464 = vpop.f32.mrf.mxu0
    %v465 = vadd.f32 0.0, %v464
    %466 = vmatprep.mubr.f32.mxu0 %v155
    %467 = vmatmul.mubr.f32.gmra.mxu0 %v154
    %v468 = vpop.f32.mrf.mxu0
    %v469 = vadd.f32 0.0, %v468
    %v470 = vpop.f32.mrf.mxu0
    %v471 = vadd.f32 0.0, %v470
    %472 = vmatprep.mubr.f32.mxu0 %v157
    %473 = vmatmul.mubr.f32.gmra.mxu0 %v156
    %v474 = vpop.f32.mrf.mxu0
    %v475 = vadd.f32 0.0, %v474
    %v476 = vpop.f32.mrf.mxu0
    %v477 = vadd.f32 0.0, %v476
    %478 = vmatprep.mubr.f32.mxu0 %v159
    %479 = vmatmul.mubr.f32.gmra.mxu0 %v158
    %v480 = vpop.f32.mrf.mxu0
    %v481 = vadd.f32 0.0, %v480
    %v482 = vpop.f32.mrf.mxu0
    %v483 = vadd.f32 0.0, %v482
    %484 = vmatprep.mubr.f32.mxu0 %v161
    %485 = vmatmul.mubr.f32.gmra.mxu0 %v160
    %v486 = vpop.f32.mrf.mxu0
    %v487 = vadd.f32 0.0, %v486
    %v488 = vpop.f32.mrf.mxu0
    %v489 = vadd.f32 0.0, %v488
    %490 = vmatprep.mubr.f32.mxu0 %v163
    %491 = vmatmul.mubr.f32.gmra.mxu0 %v162
    %v492 = vpop.f32.mrf.mxu0
    %v493 = vadd.f32 0.0, %v492
    %v494 = vpop.f32.mrf.mxu0
    %v495 = vadd.f32 0.0, %v494
    %496 = vmatprep.mubr.f32.mxu0 %v165
    %497 = vmatmul.mubr.f32.gmra.mxu0 %v164
    %v498 = vpop.f32.mrf.mxu0
    %v499 = vadd.f32 0.0, %v498
    %v500 = vpop.f32.mrf.mxu0
    %v501 = vadd.f32 0.0, %v500
    %502 = vmatprep.mubr.f32.mxu0 %v167
    %503 = vmatmul.mubr.f32.gmra.mxu0 %v166
    %v504 = vpop.f32.mrf.mxu0
    %v505 = vadd.f32 0.0, %v504
    %v506 = vpop.f32.mrf.mxu0
    %v507 = vadd.f32 0.0, %v506
    %508 = vmatprep.mubr.f32.mxu0 %v169
    %509 = vmatmul.mubr.f32.gmra.mxu0 %v168
    %v510 = vpop.f32.mrf.mxu0
    %v511 = vadd.f32 0.0, %v510
    %v512 = vpop.f32.mrf.mxu0
    %v513 = vadd.f32 0.0, %v512
    %514 = vmatprep.mubr.f32.mxu0 %v171
    %515 = vmatmul.mubr.f32.gmra.mxu0 %v170
    %v516 = vpop.f32.mrf.mxu0
    %v517 = vadd.f32 0.0, %v516
    %v518 = vpop.f32.mrf.mxu0
    %v519 = vadd.f32 0.0, %v518
    %520 = vmatprep.mubr.f32.mxu0 %v173
    %521 = vmatmul.mubr.f32.gmra.mxu0 %v172
    %v522 = vpop.f32.mrf.mxu0
    %v523 = vadd.f32 0.0, %v522
    %v524 = vpop.f32.mrf.mxu0
    %v525 = vadd.f32 0.0, %v524
    %526 = vmatprep.mubr.f32.mxu0 %v175
    %527 = vmatmul.mubr.f32.gmra.mxu0 %v174
    %v528 = vpop.f32.mrf.mxu0
    %v529 = vadd.f32 0.0, %v528
    %v530 = vpop.f32.mrf.mxu0
    %v531 = vadd.f32 0.0, %v530
    %532 = vmatprep.mubr.f32.mxu0 %v177
    %533 = vmatmul.mubr.f32.gmra.mxu0 %v176
    %v534 = vpop.f32.mrf.mxu0
    %v535 = vadd.f32 0.0, %v534
    %v536 = vpop.f32.mrf.mxu0
    %v537 = vadd.f32 0.0, %v536
    %538 = vmatprep.mubr.f32.mxu0 %v179
    %539 = vmatmul.mubr.f32.gmra.mxu0 %v178
    %v540 = vpop.f32.mrf.mxu0
    %v541 = vadd.f32 0.0, %v540
    %v542 = vpop.f32.mrf.mxu0
    %v543 = vadd.f32 0.0, %v542
    %544 = vmatprep.mubr.f32.mxu0 %v181
    %545 = vmatmul.mubr.f32.gmra.mxu0 %v180
    %v546 = vpop.f32.mrf.mxu0
    %v547 = vadd.f32 0.0, %v546
    %v548 = vpop.f32.mrf.mxu0
    %v549 = vadd.f32 0.0, %v548
    %550 = vmatprep.mubr.f32.mxu0 %v183
    %551 = vmatmul.mubr.f32.gmra.mxu0 %v182
    %v552 = vpop.f32.mrf.mxu0
    %v553 = vadd.f32 0.0, %v552
    %v554 = vpop.f32.mrf.mxu0
    %v555 = vadd.f32 0.0, %v554
    %556 = vmatprep.mubr.f32.mxu0 %v185
    %557 = vmatmul.mubr.f32.gmra.mxu0 %v184
    %v558 = vpop.f32.mrf.mxu0
    %v559 = vadd.f32 0.0, %v558
    %v560 = vpop.f32.mrf.mxu0
    %v561 = vadd.f32 0.0, %v560
    %562 = vmatprep.mubr.f32.mxu0 %v187
    %563 = vmatmul.mubr.f32.gmra.mxu0 %v186
    %v564 = vpop.f32.mrf.mxu0
    %v565 = vadd.f32 0.0, %v564
    %v566 = vpop.f32.mrf.mxu0
    %v567 = vadd.f32 0.0, %v566
    %568 = vmatprep.mubr.f32.mxu0 %v189
    %569 = vmatmul.mubr.f32.gmra.mxu0 %v188
    %v570 = vpop.f32.mrf.mxu0
    %v571 = vadd.f32 0.0, %v570
    %v572 = vpop.f32.mrf.mxu0
    %v573 = vadd.f32 0.0, %v572
    %574 = vdwg.mxu0
    %575 = vmatprep.subr.mxu0 %v253
    %576 = vmatpush1.msra.mxu0 %v252
    %577 = vmatprep.subr.mxu0 %v249
    %578 = vmatpush1.msra.mxu0 %v248
    %579 = vmatprep.subr.mxu0 %v245
    %580 = vmatpush1.msra.mxu0 %v244
    %581 = vmatprep.subr.mxu0 %v241
    %582 = vmatpush1.msra.mxu0 %v240
    %583 = vmatprep.subr.mxu0 %v237
    %584 = vmatpush1.msra.mxu0 %v236
    %585 = vmatprep.subr.mxu0 %v233
    %586 = vmatpush1.msra.mxu0 %v232
    %587 = vmatprep.subr.mxu0 %v229
    %588 = vmatpush1.msra.mxu0 %v228
    %589 = vmatprep.subr.mxu0 %v225
    %590 = vmatpush1.msra.mxu0 %v224
    %591 = vmatprep.subr.mxu0 %v221
    %592 = vmatpush1.msra.mxu0 %v220
    %593 = vmatprep.subr.mxu0 %v217
    %594 = vmatpush1.msra.mxu0 %v216
    %595 = vmatprep.subr.mxu0 %v213
    %596 = vmatpush1.msra.mxu0 %v212
    %597 = vmatprep.subr.mxu0 %v209
    %598 = vmatpush1.msra.mxu0 %v208
    %599 = vmatprep.subr.mxu0 %v205
    %600 = vmatpush1.msra.mxu0 %v204
    %601 = vmatprep.subr.mxu0 %v201
    %602 = vmatpush1.msra.mxu0 %v200
    %603 = vmatprep.subr.mxu0 %v197
    %604 = vmatpush1.msra.mxu0 %v196
    %605 = vmatprep.subr.mxu0 %v193
    %606 = vmatpush1.msra.mxu0 %v192
    %607 = vmatprep.subr.mxu0 %v317
    %608 = vmatpush2.msra.mxu0 %v316
    %609 = vmatprep.subr.mxu0 %v313
    %610 = vmatpush2.msra.mxu0 %v312
    %611 = vmatprep.subr.mxu0 %v309
    %612 = vmatpush2.msra.mxu0 %v308
    %613 = vmatprep.subr.mxu0 %v305
    %614 = vmatpush2.msra.mxu0 %v304
    %615 = vmatprep.subr.mxu0 %v301
    %616 = vmatpush2.msra.mxu0 %v300
    %617 = vmatprep.subr.mxu0 %v297
    %618 = vmatpush2.msra.mxu0 %v296
    %619 = vmatprep.subr.mxu0 %v293
    %620 = vmatpush2.msra.mxu0 %v292
    %621 = vmatprep.subr.mxu0 %v289
    %622 = vmatpush2.msra.mxu0 %v288
    %623 = vmatprep.subr.mxu0 %v285
    %624 = vmatpush2.msra.mxu0 %v284
    %625 = vmatprep.subr.mxu0 %v281
    %626 = vmatpush2.msra.mxu0 %v280
    %627 = vmatprep.subr.mxu0 %v277
    %628 = vmatpush2.msra.mxu0 %v276
    %629 = vmatprep.subr.mxu0 %v273
    %630 = vmatpush2.msra.mxu0 %v272
    %631 = vmatprep.subr.mxu0 %v269
    %632 = vmatpush2.msra.mxu0 %v268
    %633 = vmatprep.subr.mxu0 %v265
    %634 = vmatpush2.msra.mxu0 %v264
    %635 = vmatprep.subr.mxu0 %v261
    %636 = vmatpush2.msra.mxu0 %v260
    %637 = vmatprep.subr.mxu0 %v257
    %638 = vmatpush2.msra.mxu0 %v256
    %639 = vmatprep.mubr.f32.mxu0 %v127
    %640 = vmatmul.mubr.f32.gmra.mxu0 %v126
    %v641 = vpop.f32.mrf.mxu0
    %v642 = vadd.f32 0.0, %v641
    %v643 = vpop.f32.mrf.mxu0
    %v644 = vadd.f32 0.0, %v643
    %645 = vmatprep.mubr.f32.mxu0 %v129
    %646 = vmatmul.mubr.f32.gmra.mxu0 %v128
    %v647 = vpop.f32.mrf.mxu0
    %v648 = vadd.f32 0.0, %v647
    %v649 = vpop.f32.mrf.mxu0
    %v650 = vadd.f32 0.0, %v649
    %651 = vmatprep.mubr.f32.mxu0 %v131
    %652 = vmatmul.mubr.f32.gmra.mxu0 %v130
    %v653 = vpop.f32.mrf.mxu0
    %v654 = vadd.f32 0.0, %v653
    %v655 = vpop.f32.mrf.mxu0
    %v656 = vadd.f32 0.0, %v655
    %657 = vmatprep.mubr.f32.mxu0 %v133
    %658 = vmatmul.mubr.f32.gmra.mxu0 %v132
    %v659 = vpop.f32.mrf.mxu0
    %v660 = vadd.f32 0.0, %v659
    %v661 = vpop.f32.mrf.mxu0
    %v662 = vadd.f32 0.0, %v661
    %663 = vmatprep.mubr.f32.mxu0 %v135
    %664 = vmatmul.mubr.f32.gmra.mxu0 %v134
    %v665 = vpop.f32.mrf.mxu0
    %v666 = vadd.f32 0.0, %v665
    %v667 = vpop.f32.mrf.mxu0
    %v668 = vadd.f32 0.0, %v667
    %669 = vmatprep.mubr.f32.mxu0 %v137
    %670 = vmatmul.mubr.f32.gmra.mxu0 %v136
    %v671 = vpop.f32.mrf.mxu0
    %v672 = vadd.f32 0.0, %v671
    %v673 = vpop.f32.mrf.mxu0
    %v674 = vadd.f32 0.0, %v673
    %675 = vmatprep.mubr.f32.mxu0 %v139
    %676 = vmatmul.mubr.f32.gmra.mxu0 %v138
    %v677 = vpop.f32.mrf.mxu0
    %v678 = vadd.f32 0.0, %v677
    %v679 = vpop.f32.mrf.mxu0
    %v680 = vadd.f32 0.0, %v679
    %681 = vmatprep.mubr.f32.mxu0 %v141
    %682 = vmatmul.mubr.f32.gmra.mxu0 %v140
    %v683 = vpop.f32.mrf.mxu0
    %v684 = vadd.f32 0.0, %v683
    %v685 = vpop.f32.mrf.mxu0
    %v686 = vadd.f32 0.0, %v685
    %687 = vmatprep.mubr.f32.mxu0 %v143
    %688 = vmatmul.mubr.f32.gmra.mxu0 %v142
    %v689 = vpop.f32.mrf.mxu0
    %v690 = vadd.f32 0.0, %v689
    %v691 = vpop.f32.mrf.mxu0
    %v692 = vadd.f32 0.0, %v691
    %693 = vmatprep.mubr.f32.mxu0 %v145
    %694 = vmatmul.mubr.f32.gmra.mxu0 %v144
    %v695 = vpop.f32.mrf.mxu0
    %v696 = vadd.f32 0.0, %v695
    %v697 = vpop.f32.mrf.mxu0
    %v698 = vadd.f32 0.0, %v697
    %699 = vmatprep.mubr.f32.mxu0 %v147
    %700 = vmatmul.mubr.f32.gmra.mxu0 %v146
    %v701 = vpop.f32.mrf.mxu0
    %v702 = vadd.f32 0.0, %v701
    %v703 = vpop.f32.mrf.mxu0
    %v704 = vadd.f32 0.0, %v703
    %705 = vmatprep.mubr.f32.mxu0 %v149
    %706 = vmatmul.mubr.f32.gmra.mxu0 %v148
    %v707 = vpop.f32.mrf.mxu0
    %v708 = vadd.f32 0.0, %v707
    %v709 = vpop.f32.mrf.mxu0
    %v710 = vadd.f32 0.0, %v709
    %711 = vmatprep.mubr.f32.mxu0 %v151
    %712 = vmatmul.mubr.f32.gmra.mxu0 %v150
    %v713 = vpop.f32.mrf.mxu0
    %v714 = vadd.f32 0.0, %v713
    %v715 = vpop.f32.mrf.mxu0
    %v716 = vadd.f32 0.0, %v715
    %717 = vmatprep.mubr.f32.mxu0 %v153
    %718 = vmatmul.mubr.f32.gmra.mxu0 %v152
    %v719 = vpop.f32.mrf.mxu0
    %v720 = vadd.f32 0.0, %v719
    %v721 = vpop.f32.mrf.mxu0
    %v722 = vadd.f32 0.0, %v721
    %723 = vmatprep.mubr.f32.mxu0 %v155
    %724 = vmatmul.mubr.f32.gmra.mxu0 %v154
    %v725 = vpop.f32.mrf.mxu0
    %v726 = vadd.f32 0.0, %v725
    %v727 = vpop.f32.mrf.mxu0
    %v728 = vadd.f32 0.0, %v727
    %729 = vmatprep.mubr.f32.mxu0 %v157
    %730 = vmatmul.mubr.f32.gmra.mxu0 %v156
    %v731 = vpop.f32.mrf.mxu0
    %v732 = vadd.f32 0.0, %v731
    %v733 = vpop.f32.mrf.mxu0
    %v734 = vadd.f32 0.0, %v733
    %735 = vmatprep.mubr.f32.mxu0 %v159
    %736 = vmatmul.mubr.f32.gmra.mxu0 %v158
    %v737 = vpop.f32.mrf.mxu0
    %v738 = vadd.f32 0.0, %v737
    %v739 = vpop.f32.mrf.mxu0
    %v740 = vadd.f32 0.0, %v739
    %741 = vmatprep.mubr.f32.mxu0 %v161
    %742 = vmatmul.mubr.f32.gmra.mxu0 %v160
    %v743 = vpop.f32.mrf.mxu0
    %v744 = vadd.f32 0.0, %v743
    %v745 = vpop.f32.mrf.mxu0
    %v746 = vadd.f32 0.0, %v745
    %747 = vmatprep.mubr.f32.mxu0 %v163
    %748 = vmatmul.mubr.f32.gmra.mxu0 %v162
    %v749 = vpop.f32.mrf.mxu0
    %v750 = vadd.f32 0.0, %v749
    %v751 = vpop.f32.mrf.mxu0
    %v752 = vadd.f32 0.0, %v751
    %753 = vmatprep.mubr.f32.mxu0 %v165
    %754 = vmatmul.mubr.f32.gmra.mxu0 %v164
    %v755 = vpop.f32.mrf.mxu0
    %v756 = vadd.f32 0.0, %v755
    %v757 = vpop.f32.mrf.mxu0
    %v758 = vadd.f32 0.0, %v757
    %759 = vmatprep.mubr.f32.mxu0 %v167
    %760 = vmatmul.mubr.f32.gmra.mxu0 %v166
    %v761 = vpop.f32.mrf.mxu0
    %v762 = vadd.f32 0.0, %v761
    %v763 = vpop.f32.mrf.mxu0
    %v764 = vadd.f32 0.0, %v763
    %765 = vmatprep.mubr.f32.mxu0 %v169
    %766 = vmatmul.mubr.f32.gmra.mxu0 %v168
    %v767 = vpop.f32.mrf.mxu0
    %v768 = vadd.f32 0.0, %v767
    %v769 = vpop.f32.mrf.mxu0
    %v770 = vadd.f32 0.0, %v769
    %771 = vmatprep.mubr.f32.mxu0 %v171
    %772 = vmatmul.mubr.f32.gmra.mxu0 %v170
    %v773 = vpop.f32.mrf.mxu0
    %v774 = vadd.f32 0.0, %v773
    %v775 = vpop.f32.mrf.mxu0
    %v776 = vadd.f32 0.0, %v775
    %777 = vmatprep.mubr.f32.mxu0 %v173
    %778 = vmatmul.mubr.f32.gmra.mxu0 %v172
    %v779 = vpop.f32.mrf.mxu0
    %v780 = vadd.f32 0.0, %v779
    %v781 = vpop.f32.mrf.mxu0
    %v782 = vadd.f32 0.0, %v781
    %783 = vmatprep.mubr.f32.mxu0 %v175
    %784 = vmatmul.mubr.f32.gmra.mxu0 %v174
    %v785 = vpop.f32.mrf.mxu0
    %v786 = vadd.f32 0.0, %v785
    %v787 = vpop.f32.mrf.mxu0
    %v788 = vadd.f32 0.0, %v787
    %789 = vmatprep.mubr.f32.mxu0 %v177
    %790 = vmatmul.mubr.f32.gmra.mxu0 %v176
    %v791 = vpop.f32.mrf.mxu0
    %v792 = vadd.f32 0.0, %v791
    %v793 = vpop.f32.mrf.mxu0
    %v794 = vadd.f32 0.0, %v793
    %795 = vmatprep.mubr.f32.mxu0 %v179
    %796 = vmatmul.mubr.f32.gmra.mxu0 %v178
    %v797 = vpop.f32.mrf.mxu0
    %v798 = vadd.f32 0.0, %v797
    %v799 = vpop.f32.mrf.mxu0
    %v800 = vadd.f32 0.0, %v799
    %801 = vmatprep.mubr.f32.mxu0 %v181
    %802 = vmatmul.mubr.f32.gmra.mxu0 %v180
    %v803 = vpop.f32.mrf.mxu0
    %v804 = vadd.f32 0.0, %v803
    %v805 = vpop.f32.mrf.mxu0
    %v806 = vadd.f32 0.0, %v805
    %807 = vmatprep.mubr.f32.mxu0 %v183
    %808 = vmatmul.mubr.f32.gmra.mxu0 %v182
    %v809 = vpop.f32.mrf.mxu0
    %v810 = vadd.f32 0.0, %v809
    %v811 = vpop.f32.mrf.mxu0
    %v812 = vadd.f32 0.0, %v811
    %813 = vmatprep.mubr.f32.mxu0 %v185
    %814 = vmatmul.mubr.f32.gmra.mxu0 %v184
    %v815 = vpop.f32.mrf.mxu0
    %v816 = vadd.f32 0.0, %v815
    %v817 = vpop.f32.mrf.mxu0
    %v818 = vadd.f32 0.0, %v817
    %819 = vmatprep.mubr.f32.mxu0 %v187
    %820 = vmatmul.mubr.f32.gmra.mxu0 %v186
    %v821 = vpop.f32.mrf.mxu0
    %v822 = vadd.f32 0.0, %v821
    %v823 = vpop.f32.mrf.mxu0
    %v824 = vadd.f32 0.0, %v823
    %825 = vmatprep.mubr.f32.mxu0 %v189
    %826 = vmatmul.mubr.f32.gmra.mxu0 %v188
    %v827 = vpop.f32.mrf.mxu0
    %v828 = vadd.f32 0.0, %v827
    %v829 = vpop.f32.mrf.mxu0
    %v830 = vadd.f32 0.0, %v829
    %831 = vdwg.mxu0
    %v832 = vld [vmem:[#allocation5] sm:$0xff]
    %v833 = vld [vmem:[#allocation5 + $0x8] sm:$0xff]
    %v834 = vld [vmem:[#allocation5 + $0x10] sm:$0xff]
    %v835 = vld [vmem:[#allocation5 + $0x18] sm:$0xff]
    %v836 = vld [vmem:[#allocation5 + $0x20] sm:$0xff]
    %v837 = vld [vmem:[#allocation5 + $0x28] sm:$0xff]
    %v838 = vld [vmem:[#allocation5 + $0x30] sm:$0xff]
    %v839 = vld [vmem:[#allocation5 + $0x38] sm:$0xff]
    %v840 = vld [vmem:[#allocation5 + $0x40] sm:$0xff]
    %v841 = vld [vmem:[#allocation5 + $0x48] sm:$0xff]
    %v842 = vld [vmem:[#allocation5 + $0x50] sm:$0xff]
    %v843 = vld [vmem:[#allocation5 + $0x58] sm:$0xff]
    %v844 = vld [vmem:[#allocation5 + $0x60] sm:$0xff]
    %v845 = vld [vmem:[#allocation5 + $0x68] sm:$0xff]
    %v846 = vld [vmem:[#allocation5 + $0x70] sm:$0xff]
    %v847 = vld [vmem:[#allocation5 + $0x78] sm:$0xff]
    %v848 = vld [vmem:[#allocation5 + $0x80] sm:$0xff]
    %v849 = vld [vmem:[#allocation5 + $0x88] sm:$0xff]
    %v850 = vld [vmem:[#allocation5 + $0x90] sm:$0xff]
    %v851 = vld [vmem:[#allocation5 + $0x98] sm:$0xff]
    %v852 = vld [vmem:[#allocation5 + $0xa0] sm:$0xff]
    %v853 = vld [vmem:[#allocation5 + $0xa8] sm:$0xff]
    %v854 = vld [vmem:[#allocation5 + $0xb0] sm:$0xff]
    %v855 = vld [vmem:[#allocation5 + $0xb8] sm:$0xff]
    %v856 = vld [vmem:[#allocation5 + $0xc0] sm:$0xff]
    %v857 = vld [vmem:[#allocation5 + $0xc8] sm:$0xff]
    %v858 = vld [vmem:[#allocation5 + $0xd0] sm:$0xff]
    %v859 = vld [vmem:[#allocation5 + $0xd8] sm:$0xff]
    %v860 = vld [vmem:[#allocation5 + $0xe0] sm:$0xff]
    %v861 = vld [vmem:[#allocation5 + $0xe8] sm:$0xff]
    %v862 = vld [vmem:[#allocation5 + $0xf0] sm:$0xff]
    %v863 = vld [vmem:[#allocation5 + $0xf8] sm:$0xff]
    %v864 = vld [vmem:[#allocation5 + $0x100] sm:$0xff]
    %v865 = vld [vmem:[#allocation5 + $0x108] sm:$0xff]
    %v866 = vld [vmem:[#allocation5 + $0x110] sm:$0xff]
    %v867 = vld [vmem:[#allocation5 + $0x118] sm:$0xff]
    %v868 = vld [vmem:[#allocation5 + $0x120] sm:$0xff]
    %v869 = vld [vmem:[#allocation5 + $0x128] sm:$0xff]
    %v870 = vld [vmem:[#allocation5 + $0x130] sm:$0xff]
    %v871 = vld [vmem:[#allocation5 + $0x138] sm:$0xff]
    %v872 = vld [vmem:[#allocation5 + $0x140] sm:$0xff]
    %v873 = vld [vmem:[#allocation5 + $0x148] sm:$0xff]
    %v874 = vld [vmem:[#allocation5 + $0x150] sm:$0xff]
    %v875 = vld [vmem:[#allocation5 + $0x158] sm:$0xff]
    %v876 = vld [vmem:[#allocation5 + $0x160] sm:$0xff]
    %v877 = vld [vmem:[#allocation5 + $0x168] sm:$0xff]
    %v878 = vld [vmem:[#allocation5 + $0x170] sm:$0xff]
    %v879 = vld [vmem:[#allocation5 + $0x178] sm:$0xff]
    %v880 = vld [vmem:[#allocation5 + $0x180] sm:$0xff]
    %v881 = vld [vmem:[#allocation5 + $0x188] sm:$0xff]
    %v882 = vld [vmem:[#allocation5 + $0x190] sm:$0xff]
    %v883 = vld [vmem:[#allocation5 + $0x198] sm:$0xff]
    %v884 = vld [vmem:[#allocation5 + $0x1a0] sm:$0xff]
    %v885 = vld [vmem:[#allocation5 + $0x1a8] sm:$0xff]
    %v886 = vld [vmem:[#allocation5 + $0x1b0] sm:$0xff]
    %v887 = vld [vmem:[#allocation5 + $0x1b8] sm:$0xff]
    %v888 = vld [vmem:[#allocation5 + $0x1c0] sm:$0xff]
    %v889 = vld [vmem:[#allocation5 + $0x1c8] sm:$0xff]
    %v890 = vld [vmem:[#allocation5 + $0x1d0] sm:$0xff]
    %v891 = vld [vmem:[#allocation5 + $0x1d8] sm:$0xff]
    %v892 = vld [vmem:[#allocation5 + $0x1e0] sm:$0xff]
    %v893 = vld [vmem:[#allocation5 + $0x1e8] sm:$0xff]
    %v894 = vld [vmem:[#allocation5 + $0x1f0] sm:$0xff]
    %v895 = vld [vmem:[#allocation5 + $0x1f8] sm:$0xff]
    %v896 = vld [vmem:[#allocation5 + $0x200] sm:$0xff]
    %v897 = vld [vmem:[#allocation5 + $0x208] sm:$0xff]
    %v898 = vld [vmem:[#allocation5 + $0x210] sm:$0xff]
    %v899 = vld [vmem:[#allocation5 + $0x218] sm:$0xff]
    %v900 = vld [vmem:[#allocation5 + $0x220] sm:$0xff]
    %v901 = vld [vmem:[#allocation5 + $0x228] sm:$0xff]
    %v902 = vld [vmem:[#allocation5 + $0x230] sm:$0xff]
    %v903 = vld [vmem:[#allocation5 + $0x238] sm:$0xff]
    %v904 = vld [vmem:[#allocation5 + $0x240] sm:$0xff]
    %v905 = vld [vmem:[#allocation5 + $0x248] sm:$0xff]
    %v906 = vld [vmem:[#allocation5 + $0x250] sm:$0xff]
    %v907 = vld [vmem:[#allocation5 + $0x258] sm:$0xff]
    %v908 = vld [vmem:[#allocation5 + $0x260] sm:$0xff]
    %v909 = vld [vmem:[#allocation5 + $0x268] sm:$0xff]
    %v910 = vld [vmem:[#allocation5 + $0x270] sm:$0xff]
    %v911 = vld [vmem:[#allocation5 + $0x278] sm:$0xff]
    %v912 = vld [vmem:[#allocation5 + $0x280] sm:$0xff]
    %v913 = vld [vmem:[#allocation5 + $0x288] sm:$0xff]
    %v914 = vld [vmem:[#allocation5 + $0x290] sm:$0xff]
    %v915 = vld [vmem:[#allocation5 + $0x298] sm:$0xff]
    %v916 = vld [vmem:[#allocation5 + $0x2a0] sm:$0xff]
    %v917 = vld [vmem:[#allocation5 + $0x2a8] sm:$0xff]
    %v918 = vld [vmem:[#allocation5 + $0x2b0] sm:$0xff]
    %v919 = vld [vmem:[#allocation5 + $0x2b8] sm:$0xff]
    %v920 = vld [vmem:[#allocation5 + $0x2c0] sm:$0xff]
    %v921 = vld [vmem:[#allocation5 + $0x2c8] sm:$0xff]
    %v922 = vld [vmem:[#allocation5 + $0x2d0] sm:$0xff]
    %v923 = vld [vmem:[#allocation5 + $0x2d8] sm:$0xff]
    %v924 = vld [vmem:[#allocation5 + $0x2e0] sm:$0xff]
    %v925 = vld [vmem:[#allocation5 + $0x2e8] sm:$0xff]
    %v926 = vld [vmem:[#allocation5 + $0x2f0] sm:$0xff]
    %v927 = vld [vmem:[#allocation5 + $0x2f8] sm:$0xff]
    %v928 = vld [vmem:[#allocation5 + $0x300] sm:$0xff]
    %v929 = vld [vmem:[#allocation5 + $0x308] sm:$0xff]
    %v930 = vld [vmem:[#allocation5 + $0x310] sm:$0xff]
    %v931 = vld [vmem:[#allocation5 + $0x318] sm:$0xff]
    %v932 = vld [vmem:[#allocation5 + $0x320] sm:$0xff]
    %v933 = vld [vmem:[#allocation5 + $0x328] sm:$0xff]
    %v934 = vld [vmem:[#allocation5 + $0x330] sm:$0xff]
    %v935 = vld [vmem:[#allocation5 + $0x338] sm:$0xff]
    %v936 = vld [vmem:[#allocation5 + $0x340] sm:$0xff]
    %v937 = vld [vmem:[#allocation5 + $0x348] sm:$0xff]
    %v938 = vld [vmem:[#allocation5 + $0x350] sm:$0xff]
    %v939 = vld [vmem:[#allocation5 + $0x358] sm:$0xff]
    %v940 = vld [vmem:[#allocation5 + $0x360] sm:$0xff]
    %v941 = vld [vmem:[#allocation5 + $0x368] sm:$0xff]
    %v942 = vld [vmem:[#allocation5 + $0x370] sm:$0xff]
    %v943 = vld [vmem:[#allocation5 + $0x378] sm:$0xff]
    %v944 = vld [vmem:[#allocation5 + $0x380] sm:$0xff]
    %v945 = vld [vmem:[#allocation5 + $0x388] sm:$0xff]
    %v946 = vld [vmem:[#allocation5 + $0x390] sm:$0xff]
    %v947 = vld [vmem:[#allocation5 + $0x398] sm:$0xff]
    %v948 = vld [vmem:[#allocation5 + $0x3a0] sm:$0xff]
    %v949 = vld [vmem:[#allocation5 + $0x3a8] sm:$0xff]
    %v950 = vld [vmem:[#allocation5 + $0x3b0] sm:$0xff]
    %v951 = vld [vmem:[#allocation5 + $0x3b8] sm:$0xff]
    %v952 = vld [vmem:[#allocation5 + $0x3c0] sm:$0xff]
    %v953 = vld [vmem:[#allocation5 + $0x3c8] sm:$0xff]
    %v954 = vld [vmem:[#allocation5 + $0x3d0] sm:$0xff]
    %v955 = vld [vmem:[#allocation5 + $0x3d8] sm:$0xff]
    %v956 = vld [vmem:[#allocation5 + $0x3e0] sm:$0xff]
    %v957 = vld [vmem:[#allocation5 + $0x3e8] sm:$0xff]
    %v958 = vld [vmem:[#allocation5 + $0x3f0] sm:$0xff]
    %v959 = vld [vmem:[#allocation5 + $0x3f8] sm:$0xff]
    %960 = vmatprep.subr.mxu0 %v893
    %961 = vmatpush1.msra.mxu0 %v892
    %962 = vmatprep.subr.mxu0 %v889
    %963 = vmatpush1.msra.mxu0 %v888
    %964 = vmatprep.subr.mxu0 %v885
    %965 = vmatpush1.msra.mxu0 %v884
    %966 = vmatprep.subr.mxu0 %v881
    %967 = vmatpush1.msra.mxu0 %v880
    %968 = vmatprep.subr.mxu0 %v877
    %969 = vmatpush1.msra.mxu0 %v876
    %970 = vmatprep.subr.mxu0 %v873
    %971 = vmatpush1.msra.mxu0 %v872
    %972 = vmatprep.subr.mxu0 %v869
    %973 = vmatpush1.msra.mxu0 %v868
    %974 = vmatprep.subr.mxu0 %v865
    %975 = vmatpush1.msra.mxu0 %v864
    %976 = vmatprep.subr.mxu0 %v861
    %977 = vmatpush1.msra.mxu0 %v860
    %978 = vmatprep.subr.mxu0 %v857
    %979 = vmatpush1.msra.mxu0 %v856
    %980 = vmatprep.subr.mxu0 %v853
    %981 = vmatpush1.msra.mxu0 %v852
    %982 = vmatprep.subr.mxu0 %v849
    %983 = vmatpush1.msra.mxu0 %v848
    %984 = vmatprep.subr.mxu0 %v845
    %985 = vmatpush1.msra.mxu0 %v844
    %986 = vmatprep.subr.mxu0 %v841
    %987 = vmatpush1.msra.mxu0 %v840
    %988 = vmatprep.subr.mxu0 %v837
    %989 = vmatpush1.msra.mxu0 %v836
    %990 = vmatprep.subr.mxu0 %v833
    %991 = vmatpush1.msra.mxu0 %v832
    %992 = vmatprep.subr.mxu0 %v957
    %993 = vmatpush2.msra.mxu0 %v956
    %994 = vmatprep.subr.mxu0 %v953
    %995 = vmatpush2.msra.mxu0 %v952
    %996 = vmatprep.subr.mxu0 %v949
    %997 = vmatpush2.msra.mxu0 %v948
    %998 = vmatprep.subr.mxu0 %v945
    %999 = vmatpush2.msra.mxu0 %v944
    %1000 = vmatprep.subr.mxu0 %v941
    %1001 = vmatpush2.msra.mxu0 %v940
    %1002 = vmatprep.subr.mxu0 %v937
    %1003 = vmatpush2.msra.mxu0 %v936
    %1004 = vmatprep.subr.mxu0 %v933
    %1005 = vmatpush2.msra.mxu0 %v932
    %1006 = vmatprep.subr.mxu0 %v929
    %1007 = vmatpush2.msra.mxu0 %v928
    %1008 = vmatprep.subr.mxu0 %v925
    %1009 = vmatpush2.msra.mxu0 %v924
    %1010 = vmatprep.subr.mxu0 %v921
    %1011 = vmatpush2.msra.mxu0 %v920
    %1012 = vmatprep.subr.mxu0 %v917
    %1013 = vmatpush2.msra.mxu0 %v916
    %1014 = vmatprep.subr.mxu0 %v913
    %1015 = vmatpush2.msra.mxu0 %v912
    %1016 = vmatprep.subr.mxu0 %v909
    %1017 = vmatpush2.msra.mxu0 %v908
    %1018 = vmatprep.subr.mxu0 %v905
    %1019 = vmatpush2.msra.mxu0 %v904
    %1020 = vmatprep.subr.mxu0 %v901
    %1021 = vmatpush2.msra.mxu0 %v900
    %1022 = vmatprep.subr.mxu0 %v897
    %1023 = vmatpush2.msra.mxu0 %v896
    %1024 = vmatprep.mubr.f32.mxu0 %v127
    %1025 = vmatmul.mubr.f32.gmra.mxu0 %v126
    %v1026 = vpop.f32.mrf.mxu0
    %v1027 = vadd.f32 0.0, %v1026
    %v1028 = vpop.f32.mrf.mxu0
    %v1029 = vadd.f32 0.0, %v1028
    %1030 = vmatprep.mubr.f32.mxu0 %v129
    %1031 = vmatmul.mubr.f32.gmra.mxu0 %v128
    %v1032 = vpop.f32.mrf.mxu0
    %v1033 = vadd.f32 0.0, %v1032
    %v1034 = vpop.f32.mrf.mxu0
    %v1035 = vadd.f32 0.0, %v1034
    %1036 = vmatprep.mubr.f32.mxu0 %v131
    %1037 = vmatmul.mubr.f32.gmra.mxu0 %v130
    %v1038 = vpop.f32.mrf.mxu0
    %v1039 = vadd.f32 0.0, %v1038
    %v1040 = vpop.f32.mrf.mxu0
    %v1041 = vadd.f32 0.0, %v1040
    %1042 = vmatprep.mubr.f32.mxu0 %v133
    %1043 = vmatmul.mubr.f32.gmra.mxu0 %v132
    %v1044 = vpop.f32.mrf.mxu0
    %v1045 = vadd.f32 0.0, %v1044
    %v1046 = vpop.f32.mrf.mxu0
    %v1047 = vadd.f32 0.0, %v1046
    %1048 = vmatprep.mubr.f32.mxu0 %v135
    %1049 = vmatmul.mubr.f32.gmra.mxu0 %v134
    %v1050 = vpop.f32.mrf.mxu0
    %v1051 = vadd.f32 0.0, %v1050
    %v1052 = vpop.f32.mrf.mxu0
    %v1053 = vadd.f32 0.0, %v1052
    %1054 = vmatprep.mubr.f32.mxu0 %v137
    %1055 = vmatmul.mubr.f32.gmra.mxu0 %v136
    %v1056 = vpop.f32.mrf.mxu0
    %v1057 = vadd.f32 0.0, %v1056
    %v1058 = vpop.f32.mrf.mxu0
    %v1059 = vadd.f32 0.0, %v1058
    %1060 = vmatprep.mubr.f32.mxu0 %v139
    %1061 = vmatmul.mubr.f32.gmra.mxu0 %v138
    %v1062 = vpop.f32.mrf.mxu0
    %v1063 = vadd.f32 0.0, %v1062
    %v1064 = vpop.f32.mrf.mxu0
    %v1065 = vadd.f32 0.0, %v1064
    %1066 = vmatprep.mubr.f32.mxu0 %v141
    %1067 = vmatmul.mubr.f32.gmra.mxu0 %v140
    %v1068 = vpop.f32.mrf.mxu0
    %v1069 = vadd.f32 0.0, %v1068
    %v1070 = vpop.f32.mrf.mxu0
    %v1071 = vadd.f32 0.0, %v1070
    %1072 = vmatprep.mubr.f32.mxu0 %v143
    %1073 = vmatmul.mubr.f32.gmra.mxu0 %v142
    %v1074 = vpop.f32.mrf.mxu0
    %v1075 = vadd.f32 0.0, %v1074
    %v1076 = vpop.f32.mrf.mxu0
    %v1077 = vadd.f32 0.0, %v1076
    %1078 = vmatprep.mubr.f32.mxu0 %v145
    %1079 = vmatmul.mubr.f32.gmra.mxu0 %v144
    %v1080 = vpop.f32.mrf.mxu0
    %v1081 = vadd.f32 0.0, %v1080
    %v1082 = vpop.f32.mrf.mxu0
    %v1083 = vadd.f32 0.0, %v1082
    %1084 = vmatprep.mubr.f32.mxu0 %v147
    %1085 = vmatmul.mubr.f32.gmra.mxu0 %v146
    %v1086 = vpop.f32.mrf.mxu0
    %v1087 = vadd.f32 0.0, %v1086
    %v1088 = vpop.f32.mrf.mxu0
    %v1089 = vadd.f32 0.0, %v1088
    %1090 = vmatprep.mubr.f32.mxu0 %v149
    %1091 = vmatmul.mubr.f32.gmra.mxu0 %v148
    %v1092 = vpop.f32.mrf.mxu0
    %v1093 = vadd.f32 0.0, %v1092
    %v1094 = vpop.f32.mrf.mxu0
    %v1095 = vadd.f32 0.0, %v1094
    %1096 = vmatprep.mubr.f32.mxu0 %v151
    %1097 = vmatmul.mubr.f32.gmra.mxu0 %v150
    %v1098 = vpop.f32.mrf.mxu0
    %v1099 = vadd.f32 0.0, %v1098
    %v1100 = vpop.f32.mrf.mxu0
    %v1101 = vadd.f32 0.0, %v1100
    %1102 = vmatprep.mubr.f32.mxu0 %v153
    %1103 = vmatmul.mubr.f32.gmra.mxu0 %v152
    %v1104 = vpop.f32.mrf.mxu0
    %v1105 = vadd.f32 0.0, %v1104
    %v1106 = vpop.f32.mrf.mxu0
    %v1107 = vadd.f32 0.0, %v1106
    %1108 = vmatprep.mubr.f32.mxu0 %v155
    %1109 = vmatmul.mubr.f32.gmra.mxu0 %v154
    %v1110 = vpop.f32.mrf.mxu0
    %v1111 = vadd.f32 0.0, %v1110
    %v1112 = vpop.f32.mrf.mxu0
    %v1113 = vadd.f32 0.0, %v1112
    %1114 = vmatprep.mubr.f32.mxu0 %v157
    %1115 = vmatmul.mubr.f32.gmra.mxu0 %v156
    %v1116 = vpop.f32.mrf.mxu0
    %v1117 = vadd.f32 0.0, %v1116
    %v1118 = vpop.f32.mrf.mxu0
    %v1119 = vadd.f32 0.0, %v1118
    %1120 = vmatprep.mubr.f32.mxu0 %v159
    %1121 = vmatmul.mubr.f32.gmra.mxu0 %v158
    %v1122 = vpop.f32.mrf.mxu0
    %v1123 = vadd.f32 0.0, %v1122
    %v1124 = vpop.f32.mrf.mxu0
    %v1125 = vadd.f32 0.0, %v1124
    %1126 = vmatprep.mubr.f32.mxu0 %v161
    %1127 = vmatmul.mubr.f32.gmra.mxu0 %v160
    %v1128 = vpop.f32.mrf.mxu0
    %v1129 = vadd.f32 0.0, %v1128
    %v1130 = vpop.f32.mrf.mxu0
    %v1131 = vadd.f32 0.0, %v1130
    %1132 = vmatprep.mubr.f32.mxu0 %v163
    %1133 = vmatmul.mubr.f32.gmra.mxu0 %v162
    %v1134 = vpop.f32.mrf.mxu0
    %v1135 = vadd.f32 0.0, %v1134
    %v1136 = vpop.f32.mrf.mxu0
    %v1137 = vadd.f32 0.0, %v1136
    %1138 = vmatprep.mubr.f32.mxu0 %v165
    %1139 = vmatmul.mubr.f32.gmra.mxu0 %v164
    %v1140 = vpop.f32.mrf.mxu0
    %v1141 = vadd.f32 0.0, %v1140
    %v1142 = vpop.f32.mrf.mxu0
    %v1143 = vadd.f32 0.0, %v1142
    %1144 = vmatprep.mubr.f32.mxu0 %v167
    %1145 = vmatmul.mubr.f32.gmra.mxu0 %v166
    %v1146 = vpop.f32.mrf.mxu0
    %v1147 = vadd.f32 0.0, %v1146
    %v1148 = vpop.f32.mrf.mxu0
    %v1149 = vadd.f32 0.0, %v1148
    %1150 = vmatprep.mubr.f32.mxu0 %v169
    %1151 = vmatmul.mubr.f32.gmra.mxu0 %v168
    %v1152 = vpop.f32.mrf.mxu0
    %v1153 = vadd.f32 0.0, %v1152
    %v1154 = vpop.f32.mrf.mxu0
    %v1155 = vadd.f32 0.0, %v1154
    %1156 = vmatprep.mubr.f32.mxu0 %v171
    %1157 = vmatmul.mubr.f32.gmra.mxu0 %v170
    %v1158 = vpop.f32.mrf.mxu0
    %v1159 = vadd.f32 0.0, %v1158
    %v1160 = vpop.f32.mrf.mxu0
    %v1161 = vadd.f32 0.0, %v1160
    %1162 = vmatprep.mubr.f32.mxu0 %v173
    %1163 = vmatmul.mubr.f32.gmra.mxu0 %v172
    %v1164 = vpop.f32.mrf.mxu0
    %v1165 = vadd.f32 0.0, %v1164
    %v1166 = vpop.f32.mrf.mxu0
    %v1167 = vadd.f32 0.0, %v1166
    %1168 = vmatprep.mubr.f32.mxu0 %v175
    %1169 = vmatmul.mubr.f32.gmra.mxu0 %v174
    %v1170 = vpop.f32.mrf.mxu0
    %v1171 = vadd.f32 0.0, %v1170
    %v1172 = vpop.f32.mrf.mxu0
    %v1173 = vadd.f32 0.0, %v1172
    %1174 = vmatprep.mubr.f32.mxu0 %v177
    %1175 = vmatmul.mubr.f32.gmra.mxu0 %v176
    %v1176 = vpop.f32.mrf.mxu0
    %v1177 = vadd.f32 0.0, %v1176
    %v1178 = vpop.f32.mrf.mxu0
    %v1179 = vadd.f32 0.0, %v1178
    %1180 = vmatprep.mubr.f32.mxu0 %v179
    %1181 = vmatmul.mubr.f32.gmra.mxu0 %v178
    %v1182 = vpop.f32.mrf.mxu0
    %v1183 = vadd.f32 0.0, %v1182
    %v1184 = vpop.f32.mrf.mxu0
    %v1185 = vadd.f32 0.0, %v1184
    %1186 = vmatprep.mubr.f32.mxu0 %v181
    %1187 = vmatmul.mubr.f32.gmra.mxu0 %v180
    %v1188 = vpop.f32.mrf.mxu0
    %v1189 = vadd.f32 0.0, %v1188
    %v1190 = vpop.f32.mrf.mxu0
    %v1191 = vadd.f32 0.0, %v1190
    %1192 = vmatprep.mubr.f32.mxu0 %v183
    %1193 = vmatmul.mubr.f32.gmra.mxu0 %v182
    %v1194 = vpop.f32.mrf.mxu0
    %v1195 = vadd.f32 0.0, %v1194
    %v1196 = vpop.f32.mrf.mxu0
    %v1197 = vadd.f32 0.0, %v1196
    %1198 = vmatprep.mubr.f32.mxu0 %v185
    %1199 = vmatmul.mubr.f32.gmra.mxu0 %v184
    %v1200 = vpop.f32.mrf.mxu0
    %v1201 = vadd.f32 0.0, %v1200
    %v1202 = vpop.f32.mrf.mxu0
    %v1203 = vadd.f32 0.0, %v1202
    %1204 = vmatprep.mubr.f32.mxu0 %v187
    %1205 = vmatmul.mubr.f32.gmra.mxu0 %v186
    %v1206 = vpop.f32.mrf.mxu0
    %v1207 = vadd.f32 0.0, %v1206
    %v1208 = vpop.f32.mrf.mxu0
    %v1209 = vadd.f32 0.0, %v1208
    %1210 = vmatprep.mubr.f32.mxu0 %v189
    %1211 = vmatmul.mubr.f32.gmra.mxu0 %v188
    %v1212 = vpop.f32.mrf.mxu0
    %v1213 = vadd.f32 0.0, %v1212
    %v1214 = vpop.f32.mrf.mxu0
    %v1215 = vadd.f32 0.0, %v1214
    %1216 = vdwg.mxu0
    %1217 = vmatprep.subr.mxu0 %v895
    %1218 = vmatpush1.msra.mxu0 %v894
    %1219 = vmatprep.subr.mxu0 %v891
    %1220 = vmatpush1.msra.mxu0 %v890
    %1221 = vmatprep.subr.mxu0 %v887
    %1222 = vmatpush1.msra.mxu0 %v886
    %1223 = vmatprep.subr.mxu0 %v883
    %1224 = vmatpush1.msra.mxu0 %v882
    %1225 = vmatprep.subr.mxu0 %v879
    %1226 = vmatpush1.msra.mxu0 %v878
    %1227 = vmatprep.subr.mxu0 %v875
    %1228 = vmatpush1.msra.mxu0 %v874
    %1229 = vmatprep.subr.mxu0 %v871
    %1230 = vmatpush1.msra.mxu0 %v870
    %1231 = vmatprep.subr.mxu0 %v867
    %1232 = vmatpush1.msra.mxu0 %v866
    %1233 = vmatprep.subr.mxu0 %v863
    %1234 = vmatpush1.msra.mxu0 %v862
    %1235 = vmatprep.subr.mxu0 %v859
    %1236 = vmatpush1.msra.mxu0 %v858
    %1237 = vmatprep.subr.mxu0 %v855
    %1238 = vmatpush1.msra.mxu0 %v854
    %1239 = vmatprep.subr.mxu0 %v851
    %1240 = vmatpush1.msra.mxu0 %v850
    %1241 = vmatprep.subr.mxu0 %v847
    %1242 = vmatpush1.msra.mxu0 %v846
    %1243 = vmatprep.subr.mxu0 %v843
    %1244 = vmatpush1.msra.mxu0 %v842
    %1245 = vmatprep.subr.mxu0 %v839
    %1246 = vmatpush1.msra.mxu0 %v838
    %1247 = vmatprep.subr.mxu0 %v835
    %1248 = vmatpush1.msra.mxu0 %v834
    %1249 = vmatprep.subr.mxu0 %v959
    %1250 = vmatpush2.msra.mxu0 %v958
    %1251 = vmatprep.subr.mxu0 %v955
    %1252 = vmatpush2.msra.mxu0 %v954
    %1253 = vmatprep.subr.mxu0 %v951
    %1254 = vmatpush2.msra.mxu0 %v950
    %1255 = vmatprep.subr.mxu0 %v947
    %1256 = vmatpush2.msra.mxu0 %v946
    %1257 = vmatprep.subr.mxu0 %v943
    %1258 = vmatpush2.msra.mxu0 %v942
    %1259 = vmatprep.subr.mxu0 %v939
    %1260 = vmatpush2.msra.mxu0 %v938
    %1261 = vmatprep.subr.mxu0 %v935
    %1262 = vmatpush2.msra.mxu0 %v934
    %1263 = vmatprep.subr.mxu0 %v931
    %1264 = vmatpush2.msra.mxu0 %v930
    %1265 = vmatprep.subr.mxu0 %v927
    %1266 = vmatpush2.msra.mxu0 %v926
    %1267 = vmatprep.subr.mxu0 %v923
    %1268 = vmatpush2.msra.mxu0 %v922
    %1269 = vmatprep.subr.mxu0 %v919
    %1270 = vmatpush2.msra.mxu0 %v918
    %1271 = vmatprep.subr.mxu0 %v915
    %1272 = vmatpush2.msra.mxu0 %v914
    %1273 = vmatprep.subr.mxu0 %v911
    %1274 = vmatpush2.msra.mxu0 %v910
    %1275 = vmatprep.subr.mxu0 %v907
    %1276 = vmatpush2.msra.mxu0 %v906
    %1277 = vmatprep.subr.mxu0 %v903
    %1278 = vmatpush2.msra.mxu0 %v902
    %1279 = vmatprep.subr.mxu0 %v899
    %1280 = vmatpush2.msra.mxu0 %v898
    %1281 = vmatprep.mubr.f32.mxu0 %v127
    %1282 = vmatmul.mubr.f32.gmra.mxu0 %v126
    %v1283 = vpop.f32.mrf.mxu0
    %v1284 = vadd.f32 0.0, %v1283
    %v1285 = vpop.f32.mrf.mxu0
    %v1286 = vadd.f32 0.0, %v1285
    %1287 = vmatprep.mubr.f32.mxu0 %v129
    %1288 = vmatmul.mubr.f32.gmra.mxu0 %v128
    %v1289 = vpop.f32.mrf.mxu0
    %v1290 = vadd.f32 0.0, %v1289
    %v1291 = vpop.f32.mrf.mxu0
    %v1292 = vadd.f32 0.0, %v1291
    %1293 = vmatprep.mubr.f32.mxu0 %v131
    %1294 = vmatmul.mubr.f32.gmra.mxu0 %v130
    %v1295 = vpop.f32.mrf.mxu0
    %v1296 = vadd.f32 0.0, %v1295
    %v1297 = vpop.f32.mrf.mxu0
    %v1298 = vadd.f32 0.0, %v1297
    %1299 = vmatprep.mubr.f32.mxu0 %v133
    %1300 = vmatmul.mubr.f32.gmra.mxu0 %v132
    %v1301 = vpop.f32.mrf.mxu0
    %v1302 = vadd.f32 0.0, %v1301
    %v1303 = vpop.f32.mrf.mxu0
    %v1304 = vadd.f32 0.0, %v1303
    %1305 = vmatprep.mubr.f32.mxu0 %v135
    %1306 = vmatmul.mubr.f32.gmra.mxu0 %v134
    %v1307 = vpop.f32.mrf.mxu0
    %v1308 = vadd.f32 0.0, %v1307
    %v1309 = vpop.f32.mrf.mxu0
    %v1310 = vadd.f32 0.0, %v1309
    %1311 = vmatprep.mubr.f32.mxu0 %v137
    %1312 = vmatmul.mubr.f32.gmra.mxu0 %v136
    %v1313 = vpop.f32.mrf.mxu0
    %v1314 = vadd.f32 0.0, %v1313
    %v1315 = vpop.f32.mrf.mxu0
    %v1316 = vadd.f32 0.0, %v1315
    %1317 = vmatprep.mubr.f32.mxu0 %v139
    %1318 = vmatmul.mubr.f32.gmra.mxu0 %v138
    %v1319 = vpop.f32.mrf.mxu0
    %v1320 = vadd.f32 0.0, %v1319
    %v1321 = vpop.f32.mrf.mxu0
    %v1322 = vadd.f32 0.0, %v1321
    %1323 = vmatprep.mubr.f32.mxu0 %v141
    %1324 = vmatmul.mubr.f32.gmra.mxu0 %v140
    %v1325 = vpop.f32.mrf.mxu0
    %v1326 = vadd.f32 0.0, %v1325
    %v1327 = vpop.f32.mrf.mxu0
    %v1328 = vadd.f32 0.0, %v1327
    %1329 = vmatprep.mubr.f32.mxu0 %v143
    %1330 = vmatmul.mubr.f32.gmra.mxu0 %v142
    %v1331 = vpop.f32.mrf.mxu0
    %v1332 = vadd.f32 0.0, %v1331
    %v1333 = vpop.f32.mrf.mxu0
    %v1334 = vadd.f32 0.0, %v1333
    %1335 = vmatprep.mubr.f32.mxu0 %v145
    %1336 = vmatmul.mubr.f32.gmra.mxu0 %v144
    %v1337 = vpop.f32.mrf.mxu0
    %v1338 = vadd.f32 0.0, %v1337
    %v1339 = vpop.f32.mrf.mxu0
    %v1340 = vadd.f32 0.0, %v1339
    %1341 = vmatprep.mubr.f32.mxu0 %v147
    %1342 = vmatmul.mubr.f32.gmra.mxu0 %v146
    %v1343 = vpop.f32.mrf.mxu0
    %v1344 = vadd.f32 0.0, %v1343
    %v1345 = vpop.f32.mrf.mxu0
    %v1346 = vadd.f32 0.0, %v1345
    %1347 = vmatprep.mubr.f32.mxu0 %v149
    %1348 = vmatmul.mubr.f32.gmra.mxu0 %v148
    %v1349 = vpop.f32.mrf.mxu0
    %v1350 = vadd.f32 0.0, %v1349
    %v1351 = vpop.f32.mrf.mxu0
    %v1352 = vadd.f32 0.0, %v1351
    %1353 = vmatprep.mubr.f32.mxu0 %v151
    %1354 = vmatmul.mubr.f32.gmra.mxu0 %v150
    %v1355 = vpop.f32.mrf.mxu0
    %v1356 = vadd.f32 0.0, %v1355
    %v1357 = vpop.f32.mrf.mxu0
    %v1358 = vadd.f32 0.0, %v1357
    %1359 = vmatprep.mubr.f32.mxu0 %v153
    %1360 = vmatmul.mubr.f32.gmra.mxu0 %v152
    %v1361 = vpop.f32.mrf.mxu0
    %v1362 = vadd.f32 0.0, %v1361
    %v1363 = vpop.f32.mrf.mxu0
    %v1364 = vadd.f32 0.0, %v1363
    %1365 = vmatprep.mubr.f32.mxu0 %v155
    %1366 = vmatmul.mubr.f32.gmra.mxu0 %v154
    %v1367 = vpop.f32.mrf.mxu0
    %v1368 = vadd.f32 0.0, %v1367
    %v1369 = vpop.f32.mrf.mxu0
    %v1370 = vadd.f32 0.0, %v1369
    %1371 = vmatprep.mubr.f32.mxu0 %v157
    %1372 = vmatmul.mubr.f32.gmra.mxu0 %v156
    %v1373 = vpop.f32.mrf.mxu0
    %v1374 = vadd.f32 0.0, %v1373
    %v1375 = vpop.f32.mrf.mxu0
    %v1376 = vadd.f32 0.0, %v1375
    %1377 = vmatprep.mubr.f32.mxu0 %v159
    %1378 = vmatmul.mubr.f32.gmra.mxu0 %v158
    %v1379 = vpop.f32.mrf.mxu0
    %v1380 = vadd.f32 0.0, %v1379
    %v1381 = vpop.f32.mrf.mxu0
    %v1382 = vadd.f32 0.0, %v1381
    %1383 = vmatprep.mubr.f32.mxu0 %v161
    %1384 = vmatmul.mubr.f32.gmra.mxu0 %v160
    %v1385 = vpop.f32.mrf.mxu0
    %v1386 = vadd.f32 0.0, %v1385
    %v1387 = vpop.f32.mrf.mxu0
    %v1388 = vadd.f32 0.0, %v1387
    %1389 = vmatprep.mubr.f32.mxu0 %v163
    %1390 = vmatmul.mubr.f32.gmra.mxu0 %v162
    %v1391 = vpop.f32.mrf.mxu0
    %v1392 = vadd.f32 0.0, %v1391
    %v1393 = vpop.f32.mrf.mxu0
    %v1394 = vadd.f32 0.0, %v1393
    %1395 = vmatprep.mubr.f32.mxu0 %v165
    %1396 = vmatmul.mubr.f32.gmra.mxu0 %v164
    %v1397 = vpop.f32.mrf.mxu0
    %v1398 = vadd.f32 0.0, %v1397
    %v1399 = vpop.f32.mrf.mxu0
    %v1400 = vadd.f32 0.0, %v1399
    %1401 = vmatprep.mubr.f32.mxu0 %v167
    %1402 = vmatmul.mubr.f32.gmra.mxu0 %v166
    %v1403 = vpop.f32.mrf.mxu0
    %v1404 = vadd.f32 0.0, %v1403
    %v1405 = vpop.f32.mrf.mxu0
    %v1406 = vadd.f32 0.0, %v1405
    %1407 = vmatprep.mubr.f32.mxu0 %v169
    %1408 = vmatmul.mubr.f32.gmra.mxu0 %v168
    %v1409 = vpop.f32.mrf.mxu0
    %v1410 = vadd.f32 0.0, %v1409
    %v1411 = vpop.f32.mrf.mxu0
    %v1412 = vadd.f32 0.0, %v1411
    %1413 = vmatprep.mubr.f32.mxu0 %v171
    %1414 = vmatmul.mubr.f32.gmra.mxu0 %v170
    %v1415 = vpop.f32.mrf.mxu0
    %v1416 = vadd.f32 0.0, %v1415
    %v1417 = vpop.f32.mrf.mxu0
    %v1418 = vadd.f32 0.0, %v1417
    %1419 = vmatprep.mubr.f32.mxu0 %v173
    %1420 = vmatmul.mubr.f32.gmra.mxu0 %v172
    %v1421 = vpop.f32.mrf.mxu0
    %v1422 = vadd.f32 0.0, %v1421
    %v1423 = vpop.f32.mrf.mxu0
    %v1424 = vadd.f32 0.0, %v1423
    %1425 = vmatprep.mubr.f32.mxu0 %v175
    %1426 = vmatmul.mubr.f32.gmra.mxu0 %v174
    %v1427 = vpop.f32.mrf.mxu0
    %v1428 = vadd.f32 0.0, %v1427
    %v1429 = vpop.f32.mrf.mxu0
    %v1430 = vadd.f32 0.0, %v1429
    %1431 = vmatprep.mubr.f32.mxu0 %v177
    %1432 = vmatmul.mubr.f32.gmra.mxu0 %v176
    %v1433 = vpop.f32.mrf.mxu0
    %v1434 = vadd.f32 0.0, %v1433
    %v1435 = vpop.f32.mrf.mxu0
    %v1436 = vadd.f32 0.0, %v1435
    %1437 = vmatprep.mubr.f32.mxu0 %v179
    %1438 = vmatmul.mubr.f32.gmra.mxu0 %v178
    %v1439 = vpop.f32.mrf.mxu0
    %v1440 = vadd.f32 0.0, %v1439
    %v1441 = vpop.f32.mrf.mxu0
    %v1442 = vadd.f32 0.0, %v1441
    %1443 = vmatprep.mubr.f32.mxu0 %v181
    %1444 = vmatmul.mubr.f32.gmra.mxu0 %v180
    %v1445 = vpop.f32.mrf.mxu0
    %v1446 = vadd.f32 0.0, %v1445
    %v1447 = vpop.f32.mrf.mxu0
    %v1448 = vadd.f32 0.0, %v1447
    %1449 = vmatprep.mubr.f32.mxu0 %v183
    %1450 = vmatmul.mubr.f32.gmra.mxu0 %v182
    %v1451 = vpop.f32.mrf.mxu0
    %v1452 = vadd.f32 0.0, %v1451
    %v1453 = vpop.f32.mrf.mxu0
    %v1454 = vadd.f32 0.0, %v1453
    %1455 = vmatprep.mubr.f32.mxu0 %v185
    %1456 = vmatmul.mubr.f32.gmra.mxu0 %v184
    %v1457 = vpop.f32.mrf.mxu0
    %v1458 = vadd.f32 0.0, %v1457
    %v1459 = vpop.f32.mrf.mxu0
    %v1460 = vadd.f32 0.0, %v1459
    %1461 = vmatprep.mubr.f32.mxu0 %v187
    %1462 = vmatmul.mubr.f32.gmra.mxu0 %v186
    %v1463 = vpop.f32.mrf.mxu0
    %v1464 = vadd.f32 0.0, %v1463
    %v1465 = vpop.f32.mrf.mxu0
    %v1466 = vadd.f32 0.0, %v1465
    %1467 = vmatprep.mubr.f32.mxu0 %v189
    %1468 = vmatmul.mubr.f32.gmra.mxu0 %v188
    %v1469 = vpop.f32.mrf.mxu0
    %v1470 = vadd.f32 0.0, %v1469
    %v1471 = vpop.f32.mrf.mxu0
    %v1472 = vadd.f32 0.0, %v1471
    %1473 = vdwg.mxu0
    %v1474 = vsub.f32 0.0, %v385
    %v1475 = vsub.f32 0.0, %v387
    %v1476 = vsub.f32 0.0, %v642
    %v1477 = vsub.f32 0.0, %v644
    %v1478 = vsub.f32 0.0, %v391
    %v1479 = vsub.f32 0.0, %v393
    %v1480 = vsub.f32 0.0, %v648
    %v1481 = vsub.f32 0.0, %v650
    %v1482 = vsub.f32 0.0, %v397
    %v1483 = vsub.f32 0.0, %v399
    %v1484 = vsub.f32 0.0, %v654
    %v1485 = vsub.f32 0.0, %v656
    %v1486 = vsub.f32 0.0, %v403
    %v1487 = vsub.f32 0.0, %v405
    %v1488 = vsub.f32 0.0, %v660
    %v1489 = vsub.f32 0.0, %v662
    %v1490 = vsub.f32 0.0, %v409
    %v1491 = vsub.f32 0.0, %v411
    %v1492 = vsub.f32 0.0, %v666
    %v1493 = vsub.f32 0.0, %v668
    %v1494 = vsub.f32 0.0, %v415
    %v1495 = vsub.f32 0.0, %v417
    %v1496 = vsub.f32 0.0, %v672
    %v1497 = vsub.f32 0.0, %v674
    %v1498 = vsub.f32 0.0, %v421
    %v1499 = vsub.f32 0.0, %v423
    %v1500 = vsub.f32 0.0, %v678
    %v1501 = vsub.f32 0.0, %v680
    %v1502 = vsub.f32 0.0, %v427
    %v1503 = vsub.f32 0.0, %v429
    %v1504 = vsub.f32 0.0, %v684
    %v1505 = vsub.f32 0.0, %v686
    %v1506 = vsub.f32 0.0, %v433
    %v1507 = vsub.f32 0.0, %v435
    %v1508 = vsub.f32 0.0, %v690
    %v1509 = vsub.f32 0.0, %v692
    %v1510 = vsub.f32 0.0, %v439
    %v1511 = vsub.f32 0.0, %v441
    %v1512 = vsub.f32 0.0, %v696
    %v1513 = vsub.f32 0.0, %v698
    %v1514 = vsub.f32 0.0, %v445
    %v1515 = vsub.f32 0.0, %v447
    %v1516 = vsub.f32 0.0, %v702
    %v1517 = vsub.f32 0.0, %v704
    %v1518 = vsub.f32 0.0, %v451
    %v1519 = vsub.f32 0.0, %v453
    %v1520 = vsub.f32 0.0, %v708
    %v1521 = vsub.f32 0.0, %v710
    %v1522 = vsub.f32 0.0, %v457
    %v1523 = vsub.f32 0.0, %v459
    %v1524 = vsub.f32 0.0, %v714
    %v1525 = vsub.f32 0.0, %v716
    %v1526 = vsub.f32 0.0, %v463
    %v1527 = vsub.f32 0.0, %v465
    %v1528 = vsub.f32 0.0, %v720
    %v1529 = vsub.f32 0.0, %v722
    %v1530 = vsub.f32 0.0, %v469
    %v1531 = vsub.f32 0.0, %v471
    %v1532 = vsub.f32 0.0, %v726
    %v1533 = vsub.f32 0.0, %v728
    %v1534 = vsub.f32 0.0, %v475
    %v1535 = vsub.f32 0.0, %v477
    %v1536 = vsub.f32 0.0, %v732
    %v1537 = vsub.f32 0.0, %v734
    %v1538 = vsub.f32 0.0, %v481
    %v1539 = vsub.f32 0.0, %v483
    %v1540 = vsub.f32 0.0, %v738
    %v1541 = vsub.f32 0.0, %v740
    %v1542 = vsub.f32 0.0, %v487
    %v1543 = vsub.f32 0.0, %v489
    %v1544 = vsub.f32 0.0, %v744
    %v1545 = vsub.f32 0.0, %v746
    %v1546 = vsub.f32 0.0, %v493
    %v1547 = vsub.f32 0.0, %v495
    %v1548 = vsub.f32 0.0, %v750
    %v1549 = vsub.f32 0.0, %v752
    %v1550 = vsub.f32 0.0, %v499
    %v1551 = vsub.f32 0.0, %v501
    %v1552 = vsub.f32 0.0, %v756
    %v1553 = vsub.f32 0.0, %v758
    %v1554 = vsub.f32 0.0, %v505
    %v1555 = vsub.f32 0.0, %v507
    %v1556 = vsub.f32 0.0, %v762
    %v1557 = vsub.f32 0.0, %v764
    %v1558 = vsub.f32 0.0, %v511
    %v1559 = vsub.f32 0.0, %v513
    %v1560 = vsub.f32 0.0, %v768
    %v1561 = vsub.f32 0.0, %v770
    %v1562 = vsub.f32 0.0, %v517
    %v1563 = vsub.f32 0.0, %v519
    %v1564 = vsub.f32 0.0, %v774
    %v1565 = vsub.f32 0.0, %v776
    %v1566 = vsub.f32 0.0, %v523
    %v1567 = vsub.f32 0.0, %v525
    %v1568 = vsub.f32 0.0, %v780
    %v1569 = vsub.f32 0.0, %v782
    %v1570 = vsub.f32 0.0, %v529
    %v1571 = vsub.f32 0.0, %v531
    %v1572 = vsub.f32 0.0, %v786
    %v1573 = vsub.f32 0.0, %v788
    %v1574 = vsub.f32 0.0, %v535
    %v1575 = vsub.f32 0.0, %v537
    %v1576 = vsub.f32 0.0, %v792
    %v1577 = vsub.f32 0.0, %v794
    %v1578 = vsub.f32 0.0, %v541
    %v1579 = vsub.f32 0.0, %v543
    %v1580 = vsub.f32 0.0, %v798
    %v1581 = vsub.f32 0.0, %v800
    %v1582 = vsub.f32 0.0, %v547
    %v1583 = vsub.f32 0.0, %v549
    %v1584 = vsub.f32 0.0, %v804
    %v1585 = vsub.f32 0.0, %v806
    %v1586 = vsub.f32 0.0, %v553
    %v1587 = vsub.f32 0.0, %v555
    %v1588 = vsub.f32 0.0, %v810
    %v1589 = vsub.f32 0.0, %v812
    %v1590 = vsub.f32 0.0, %v559
    %v1591 = vsub.f32 0.0, %v561
    %v1592 = vsub.f32 0.0, %v816
    %v1593 = vsub.f32 0.0, %v818
    %v1594 = vsub.f32 0.0, %v565
    %v1595 = vsub.f32 0.0, %v567
    %v1596 = vsub.f32 0.0, %v822
    %v1597 = vsub.f32 0.0, %v824
    %v1598 = vsub.f32 0.0, %v571
    %v1599 = vsub.f32 0.0, %v573
    %v1600 = vsub.f32 0.0, %v828
    %v1601 = vsub.f32 0.0, %v830
    %v1602 = vmul.f32 %v1474, 1.442695
    %v1603 = vpow.pop %v1602
    %v1604 = vmul.f32 %v1475, 1.442695
    %v1605 = vpow.pop %v1604
    %v1606 = vmul.f32 %v1476, 1.442695
    %v1607 = vpow.pop %v1606
    %v1608 = vmul.f32 %v1477, 1.442695
    %v1609 = vpow.pop %v1608
    %v1610 = vmul.f32 %v1478, 1.442695
    %v1611 = vpow.pop %v1610
    %v1612 = vmul.f32 %v1479, 1.442695
    %v1613 = vpow.pop %v1612
    %v1614 = vmul.f32 %v1480, 1.442695
    %v1615 = vpow.pop %v1614
    %v1616 = vmul.f32 %v1481, 1.442695
    %v1617 = vpow.pop %v1616
    %v1618 = vmul.f32 %v1482, 1.442695
    %v1619 = vpow.pop %v1618
    %v1620 = vmul.f32 %v1483, 1.442695
    %v1621 = vpow.pop %v1620
    %v1622 = vmul.f32 %v1484, 1.442695
    %v1623 = vpow.pop %v1622
    %v1624 = vmul.f32 %v1485, 1.442695
    %v1625 = vpow.pop %v1624
    %v1626 = vmul.f32 %v1486, 1.442695
    %v1627 = vpow.pop %v1626
    %v1628 = vmul.f32 %v1487, 1.442695
    %v1629 = vpow.pop %v1628
    %v1630 = vmul.f32 %v1488, 1.442695
    %v1631 = vpow.pop %v1630
    %v1632 = vmul.f32 %v1489, 1.442695
    %v1633 = vpow.pop %v1632
    %v1634 = vmul.f32 %v1490, 1.442695
    %v1635 = vpow.pop %v1634
    %v1636 = vmul.f32 %v1491, 1.442695
    %v1637 = vpow.pop %v1636
    %v1638 = vmul.f32 %v1492, 1.442695
    %v1639 = vpow.pop %v1638
    %v1640 = vmul.f32 %v1493, 1.442695
    %v1641 = vpow.pop %v1640
    %v1642 = vmul.f32 %v1494, 1.442695
    %v1643 = vpow.pop %v1642
    %v1644 = vmul.f32 %v1495, 1.442695
    %v1645 = vpow.pop %v1644
    %v1646 = vmul.f32 %v1496, 1.442695
    %v1647 = vpow.pop %v1646
    %v1648 = vmul.f32 %v1497, 1.442695
    %v1649 = vpow.pop %v1648
    %v1650 = vmul.f32 %v1498, 1.442695
    %v1651 = vpow.pop %v1650
    %v1652 = vmul.f32 %v1499, 1.442695
    %v1653 = vpow.pop %v1652
    %v1654 = vmul.f32 %v1500, 1.442695
    %v1655 = vpow.pop %v1654
    %v1656 = vmul.f32 %v1501, 1.442695
    %v1657 = vpow.pop %v1656
    %v1658 = vmul.f32 %v1502, 1.442695
    %v1659 = vpow.pop %v1658
    %v1660 = vmul.f32 %v1503, 1.442695
    %v1661 = vpow.pop %v1660
    %v1662 = vmul.f32 %v1504, 1.442695
    %v1663 = vpow.pop %v1662
    %v1664 = vmul.f32 %v1505, 1.442695
    %v1665 = vpow.pop %v1664
    %v1666 = vmul.f32 %v1506, 1.442695
    %v1667 = vpow.pop %v1666
    %v1668 = vmul.f32 %v1507, 1.442695
    %v1669 = vpow.pop %v1668
    %v1670 = vmul.f32 %v1508, 1.442695
    %v1671 = vpow.pop %v1670
    %v1672 = vmul.f32 %v1509, 1.442695
    %v1673 = vpow.pop %v1672
    %v1674 = vmul.f32 %v1510, 1.442695
    %v1675 = vpow.pop %v1674
    %v1676 = vmul.f32 %v1511, 1.442695
    %v1677 = vpow.pop %v1676
    %v1678 = vmul.f32 %v1512, 1.442695
    %v1679 = vpow.pop %v1678
    %v1680 = vmul.f32 %v1513, 1.442695
    %v1681 = vpow.pop %v1680
    %v1682 = vmul.f32 %v1514, 1.442695
    %v1683 = vpow.pop %v1682
    %v1684 = vmul.f32 %v1515, 1.442695
    %v1685 = vpow.pop %v1684
    %v1686 = vmul.f32 %v1516, 1.442695
    %v1687 = vpow.pop %v1686
    %v1688 = vmul.f32 %v1517, 1.442695
    %v1689 = vpow.pop %v1688
    %v1690 = vmul.f32 %v1518, 1.442695
    %v1691 = vpow.pop %v1690
    %v1692 = vmul.f32 %v1519, 1.442695
    %v1693 = vpow.pop %v1692
    %v1694 = vmul.f32 %v1520, 1.442695
    %v1695 = vpow.pop %v1694
    %v1696 = vmul.f32 %v1521, 1.442695
    %v1697 = vpow.pop %v1696
    %v1698 = vmul.f32 %v1522, 1.442695
    %v1699 = vpow.pop %v1698
    %v1700 = vmul.f32 %v1523, 1.442695
    %v1701 = vpow.pop %v1700
    %v1702 = vmul.f32 %v1524, 1.442695
    %v1703 = vpow.pop %v1702
    %v1704 = vmul.f32 %v1525, 1.442695
    %v1705 = vpow.pop %v1704
    %v1706 = vmul.f32 %v1526, 1.442695
    %v1707 = vpow.pop %v1706
    %v1708 = vmul.f32 %v1527, 1.442695
    %v1709 = vpow.pop %v1708
    %v1710 = vmul.f32 %v1528, 1.442695
    %v1711 = vpow.pop %v1710
    %v1712 = vmul.f32 %v1529, 1.442695
    %v1713 = vpow.pop %v1712
    %v1714 = vmul.f32 %v1530, 1.442695
    %v1715 = vpow.pop %v1714
    %v1716 = vmul.f32 %v1531, 1.442695
    %v1717 = vpow.pop %v1716
    %v1718 = vmul.f32 %v1532, 1.442695
    %v1719 = vpow.pop %v1718
    %v1720 = vmul.f32 %v1533, 1.442695
    %v1721 = vpow.pop %v1720
    %v1722 = vmul.f32 %v1534, 1.442695
    %v1723 = vpow.pop %v1722
    %v1724 = vmul.f32 %v1535, 1.442695
    %v1725 = vpow.pop %v1724
    %v1726 = vmul.f32 %v1536, 1.442695
    %v1727 = vpow.pop %v1726
    %v1728 = vmul.f32 %v1537, 1.442695
    %v1729 = vpow.pop %v1728
    %v1730 = vmul.f32 %v1538, 1.442695
    %v1731 = vpow.pop %v1730
    %v1732 = vmul.f32 %v1539, 1.442695
    %v1733 = vpow.pop %v1732
    %v1734 = vmul.f32 %v1540, 1.442695
    %v1735 = vpow.pop %v1734
    %v1736 = vmul.f32 %v1541, 1.442695
    %v1737 = vpow.pop %v1736
    %v1738 = vmul.f32 %v1542, 1.442695
    %v1739 = vpow.pop %v1738
    %v1740 = vmul.f32 %v1543, 1.442695
    %v1741 = vpow.pop %v1740
    %v1742 = vmul.f32 %v1544, 1.442695
    %v1743 = vpow.pop %v1742
    %v1744 = vmul.f32 %v1545, 1.442695
    %v1745 = vpow.pop %v1744
    %v1746 = vmul.f32 %v1546, 1.442695
    %v1747 = vpow.pop %v1746
    %v1748 = vmul.f32 %v1547, 1.442695
    %v1749 = vpow.pop %v1748
    %v1750 = vmul.f32 %v1548, 1.442695
    %v1751 = vpow.pop %v1750
    %v1752 = vmul.f32 %v1549, 1.442695
    %v1753 = vpow.pop %v1752
    %v1754 = vmul.f32 %v1550, 1.442695
    %v1755 = vpow.pop %v1754
    %v1756 = vmul.f32 %v1551, 1.442695
    %v1757 = vpow.pop %v1756
    %v1758 = vmul.f32 %v1552, 1.442695
    %v1759 = vpow.pop %v1758
    %v1760 = vmul.f32 %v1553, 1.442695
    %v1761 = vpow.pop %v1760
    %v1762 = vmul.f32 %v1554, 1.442695
    %v1763 = vpow.pop %v1762
    %v1764 = vmul.f32 %v1555, 1.442695
    %v1765 = vpow.pop %v1764
    %v1766 = vmul.f32 %v1556, 1.442695
    %v1767 = vpow.pop %v1766
    %v1768 = vmul.f32 %v1557, 1.442695
    %v1769 = vpow.pop %v1768
    %v1770 = vmul.f32 %v1558, 1.442695
    %v1771 = vpow.pop %v1770
    %v1772 = vmul.f32 %v1559, 1.442695
    %v1773 = vpow.pop %v1772
    %v1774 = vmul.f32 %v1560, 1.442695
    %v1775 = vpow.pop %v1774
    %v1776 = vmul.f32 %v1561, 1.442695
    %v1777 = vpow.pop %v1776
    %v1778 = vmul.f32 %v1562, 1.442695
    %v1779 = vpow.pop %v1778
    %v1780 = vmul.f32 %v1563, 1.442695
    %v1781 = vpow.pop %v1780
    %v1782 = vmul.f32 %v1564, 1.442695
    %v1783 = vpow.pop %v1782
    %v1784 = vmul.f32 %v1565, 1.442695
    %v1785 = vpow.pop %v1784
    %v1786 = vmul.f32 %v1566, 1.442695
    %v1787 = vpow.pop %v1786
    %v1788 = vmul.f32 %v1567, 1.442695
    %v1789 = vpow.pop %v1788
    %v1790 = vmul.f32 %v1568, 1.442695
    %v1791 = vpow.pop %v1790
    %v1792 = vmul.f32 %v1569, 1.442695
    %v1793 = vpow.pop %v1792
    %v1794 = vmul.f32 %v1570, 1.442695
    %v1795 = vpow.pop %v1794
    %v1796 = vmul.f32 %v1571, 1.442695
    %v1797 = vpow.pop %v1796
    %v1798 = vmul.f32 %v1572, 1.442695
    %v1799 = vpow.pop %v1798
    %v1800 = vmul.f32 %v1573, 1.442695
    %v1801 = vpow.pop %v1800
    %v1802 = vmul.f32 %v1574, 1.442695
    %v1803 = vpow.pop %v1802
    %v1804 = vmul.f32 %v1575, 1.442695
    %v1805 = vpow.pop %v1804
    %v1806 = vmul.f32 %v1576, 1.442695
    %v1807 = vpow.pop %v1806
    %v1808 = vmul.f32 %v1577, 1.442695
    %v1809 = vpow.pop %v1808
    %v1810 = vmul.f32 %v1578, 1.442695
    %v1811 = vpow.pop %v1810
    %v1812 = vmul.f32 %v1579, 1.442695
    %v1813 = vpow.pop %v1812
    %v1814 = vmul.f32 %v1580, 1.442695
    %v1815 = vpow.pop %v1814
    %v1816 = vmul.f32 %v1581, 1.442695
    %v1817 = vpow.pop %v1816
    %v1818 = vmul.f32 %v1582, 1.442695
    %v1819 = vpow.pop %v1818
    %v1820 = vmul.f32 %v1583, 1.442695
    %v1821 = vpow.pop %v1820
    %v1822 = vmul.f32 %v1584, 1.442695
    %v1823 = vpow.pop %v1822
    %v1824 = vmul.f32 %v1585, 1.442695
    %v1825 = vpow.pop %v1824
    %v1826 = vmul.f32 %v1586, 1.442695
    %v1827 = vpow.pop %v1826
    %v1828 = vmul.f32 %v1587, 1.442695
    %v1829 = vpow.pop %v1828
    %v1830 = vmul.f32 %v1588, 1.442695
    %v1831 = vpow.pop %v1830
    %v1832 = vmul.f32 %v1589, 1.442695
    %v1833 = vpow.pop %v1832
    %v1834 = vmul.f32 %v1590, 1.442695
    %v1835 = vpow.pop %v1834
    %v1836 = vmul.f32 %v1591, 1.442695
    %v1837 = vpow.pop %v1836
    %v1838 = vmul.f32 %v1592, 1.442695
    %v1839 = vpow.pop %v1838
    %v1840 = vmul.f32 %v1593, 1.442695
    %v1841 = vpow.pop %v1840
    %v1842 = vmul.f32 %v1594, 1.442695
    %v1843 = vpow.pop %v1842
    %v1844 = vmul.f32 %v1595, 1.442695
    %v1845 = vpow.pop %v1844
    %v1846 = vmul.f32 %v1596, 1.442695
    %v1847 = vpow.pop %v1846
    %v1848 = vmul.f32 %v1597, 1.442695
    %v1849 = vpow.pop %v1848
    %v1850 = vmul.f32 %v1598, 1.442695
    %v1851 = vpow.pop %v1850
    %v1852 = vmul.f32 %v1599, 1.442695
    %v1853 = vpow.pop %v1852
    %v1854 = vmul.f32 %v1600, 1.442695
    %v1855 = vpow.pop %v1854
    %v1856 = vmul.f32 %v1601, 1.442695
    %v1857 = vpow.pop %v1856
    %v1858 = vadd.f32 %v1603, 1.0
    %v1859 = vadd.f32 %v1605, 1.0
    %v1860 = vadd.f32 %v1607, 1.0
    %v1861 = vadd.f32 %v1609, 1.0
    %v1862 = vadd.f32 %v1611, 1.0
    %v1863 = vadd.f32 %v1613, 1.0
    %v1864 = vadd.f32 %v1615, 1.0
    %v1865 = vadd.f32 %v1617, 1.0
    %v1866 = vadd.f32 %v1619, 1.0
    %v1867 = vadd.f32 %v1621, 1.0
    %v1868 = vadd.f32 %v1623, 1.0
    %v1869 = vadd.f32 %v1625, 1.0
    %v1870 = vadd.f32 %v1627, 1.0
    %v1871 = vadd.f32 %v1629, 1.0
    %v1872 = vadd.f32 %v1631, 1.0
    %v1873 = vadd.f32 %v1633, 1.0
    %v1874 = vadd.f32 %v1635, 1.0
    %v1875 = vadd.f32 %v1637, 1.0
    %v1876 = vadd.f32 %v1639, 1.0
    %v1877 = vadd.f32 %v1641, 1.0
    %v1878 = vadd.f32 %v1643, 1.0
    %v1879 = vadd.f32 %v1645, 1.0
    %v1880 = vadd.f32 %v1647, 1.0
    %v1881 = vadd.f32 %v1649, 1.0
    %v1882 = vadd.f32 %v1651, 1.0
    %v1883 = vadd.f32 %v1653, 1.0
    %v1884 = vadd.f32 %v1655, 1.0
    %v1885 = vadd.f32 %v1657, 1.0
    %v1886 = vadd.f32 %v1659, 1.0
    %v1887 = vadd.f32 %v1661, 1.0
    %v1888 = vadd.f32 %v1663, 1.0
    %v1889 = vadd.f32 %v1665, 1.0
    %v1890 = vadd.f32 %v1667, 1.0
    %v1891 = vadd.f32 %v1669, 1.0
    %v1892 = vadd.f32 %v1671, 1.0
    %v1893 = vadd.f32 %v1673, 1.0
    %v1894 = vadd.f32 %v1675, 1.0
    %v1895 = vadd.f32 %v1677, 1.0
    %v1896 = vadd.f32 %v1679, 1.0
    %v1897 = vadd.f32 %v1681, 1.0
    %v1898 = vadd.f32 %v1683, 1.0
    %v1899 = vadd.f32 %v1685, 1.0
    %v1900 = vadd.f32 %v1687, 1.0
    %v1901 = vadd.f32 %v1689, 1.0
    %v1902 = vadd.f32 %v1691, 1.0
    %v1903 = vadd.f32 %v1693, 1.0
    %v1904 = vadd.f32 %v1695, 1.0
    %v1905 = vadd.f32 %v1697, 1.0
    %v1906 = vadd.f32 %v1699, 1.0
    %v1907 = vadd.f32 %v1701, 1.0
    %v1908 = vadd.f32 %v1703, 1.0
    %v1909 = vadd.f32 %v1705, 1.0
    %v1910 = vadd.f32 %v1707, 1.0
    %v1911 = vadd.f32 %v1709, 1.0
    %v1912 = vadd.f32 %v1711, 1.0
    %v1913 = vadd.f32 %v1713, 1.0
    %v1914 = vadd.f32 %v1715, 1.0
    %v1915 = vadd.f32 %v1717, 1.0
    %v1916 = vadd.f32 %v1719, 1.0
    %v1917 = vadd.f32 %v1721, 1.0
    %v1918 = vadd.f32 %v1723, 1.0
    %v1919 = vadd.f32 %v1725, 1.0
    %v1920 = vadd.f32 %v1727, 1.0
    %v1921 = vadd.f32 %v1729, 1.0
    %v1922 = vadd.f32 %v1731, 1.0
    %v1923 = vadd.f32 %v1733, 1.0
    %v1924 = vadd.f32 %v1735, 1.0
    %v1925 = vadd.f32 %v1737, 1.0
    %v1926 = vadd.f32 %v1739, 1.0
    %v1927 = vadd.f32 %v1741, 1.0
    %v1928 = vadd.f32 %v1743, 1.0
    %v1929 = vadd.f32 %v1745, 1.0
    %v1930 = vadd.f32 %v1747, 1.0
    %v1931 = vadd.f32 %v1749, 1.0
    %v1932 = vadd.f32 %v1751, 1.0
    %v1933 = vadd.f32 %v1753, 1.0
    %v1934 = vadd.f32 %v1755, 1.0
    %v1935 = vadd.f32 %v1757, 1.0
    %v1936 = vadd.f32 %v1759, 1.0
    %v1937 = vadd.f32 %v1761, 1.0
    %v1938 = vadd.f32 %v1763, 1.0
    %v1939 = vadd.f32 %v1765, 1.0
    %v1940 = vadd.f32 %v1767, 1.0
    %v1941 = vadd.f32 %v1769, 1.0
    %v1942 = vadd.f32 %v1771, 1.0
    %v1943 = vadd.f32 %v1773, 1.0
    %v1944 = vadd.f32 %v1775, 1.0
    %v1945 = vadd.f32 %v1777, 1.0
    %v1946 = vadd.f32 %v1779, 1.0
    %v1947 = vadd.f32 %v1781, 1.0
    %v1948 = vadd.f32 %v1783, 1.0
    %v1949 = vadd.f32 %v1785, 1.0
    %v1950 = vadd.f32 %v1787, 1.0
    %v1951 = vadd.f32 %v1789, 1.0
    %v1952 = vadd.f32 %v1791, 1.0
    %v1953 = vadd.f32 %v1793, 1.0
    %v1954 = vadd.f32 %v1795, 1.0
    %v1955 = vadd.f32 %v1797, 1.0
    %v1956 = vadd.f32 %v1799, 1.0
    %v1957 = vadd.f32 %v1801, 1.0
    %v1958 = vadd.f32 %v1803, 1.0
    %v1959 = vadd.f32 %v1805, 1.0
    %v1960 = vadd.f32 %v1807, 1.0
    %v1961 = vadd.f32 %v1809, 1.0
    %v1962 = vadd.f32 %v1811, 1.0
    %v1963 = vadd.f32 %v1813, 1.0
    %v1964 = vadd.f32 %v1815, 1.0
    %v1965 = vadd.f32 %v1817, 1.0
    %v1966 = vadd.f32 %v1819, 1.0
    %v1967 = vadd.f32 %v1821, 1.0
    %v1968 = vadd.f32 %v1823, 1.0
    %v1969 = vadd.f32 %v1825, 1.0
    %v1970 = vadd.f32 %v1827, 1.0
    %v1971 = vadd.f32 %v1829, 1.0
    %v1972 = vadd.f32 %v1831, 1.0
    %v1973 = vadd.f32 %v1833, 1.0
    %v1974 = vadd.f32 %v1835, 1.0
    %v1975 = vadd.f32 %v1837, 1.0
    %v1976 = vadd.f32 %v1839, 1.0
    %v1977 = vadd.f32 %v1841, 1.0
    %v1978 = vadd.f32 %v1843, 1.0
    %v1979 = vadd.f32 %v1845, 1.0
    %v1980 = vadd.f32 %v1847, 1.0
    %v1981 = vadd.f32 %v1849, 1.0
    %v1982 = vadd.f32 %v1851, 1.0
    %v1983 = vadd.f32 %v1853, 1.0
    %v1984 = vadd.f32 %v1855, 1.0
    %v1985 = vadd.f32 %v1857, 1.0
    %v1986 = vrcp.pop %v1858
    %v1987 = vrcp.pop %v1859
    %v1988 = vrcp.pop %v1860
    %v1989 = vrcp.pop %v1861
    %v1990 = vrcp.pop %v1862
    %v1991 = vrcp.pop %v1863
    %v1992 = vrcp.pop %v1864
    %v1993 = vrcp.pop %v1865
    %v1994 = vrcp.pop %v1866
    %v1995 = vrcp.pop %v1867
    %v1996 = vrcp.pop %v1868
    %v1997 = vrcp.pop %v1869
    %v1998 = vrcp.pop %v1870
    %v1999 = vrcp.pop %v1871
    %v2000 = vrcp.pop %v1872
    %v2001 = vrcp.pop %v1873
    %v2002 = vrcp.pop %v1874
    %v2003 = vrcp.pop %v1875
    %v2004 = vrcp.pop %v1876
    %v2005 = vrcp.pop %v1877
    %v2006 = vrcp.pop %v1878
    %v2007 = vrcp.pop %v1879
    %v2008 = vrcp.pop %v1880
    %v2009 = vrcp.pop %v1881
    %v2010 = vrcp.pop %v1882
    %v2011 = vrcp.pop %v1883
    %v2012 = vrcp.pop %v1884
    %v2013 = vrcp.pop %v1885
    %v2014 = vrcp.pop %v1886
    %v2015 = vrcp.pop %v1887
    %v2016 = vrcp.pop %v1888
    %v2017 = vrcp.pop %v1889
    %v2018 = vrcp.pop %v1890
    %v2019 = vrcp.pop %v1891
    %v2020 = vrcp.pop %v1892
    %v2021 = vrcp.pop %v1893
    %v2022 = vrcp.pop %v1894
    %v2023 = vrcp.pop %v1895
    %v2024 = vrcp.pop %v1896
    %v2025 = vrcp.pop %v1897
    %v2026 = vrcp.pop %v1898
    %v2027 = vrcp.pop %v1899
    %v2028 = vrcp.pop %v1900
    %v2029 = vrcp.pop %v1901
    %v2030 = vrcp.pop %v1902
    %v2031 = vrcp.pop %v1903
    %v2032 = vrcp.pop %v1904
    %v2033 = vrcp.pop %v1905
    %v2034 = vrcp.pop %v1906
    %v2035 = vrcp.pop %v1907
    %v2036 = vrcp.pop %v1908
    %v2037 = vrcp.pop %v1909
    %v2038 = vrcp.pop %v1910
    %v2039 = vrcp.pop %v1911
    %v2040 = vrcp.pop %v1912
    %v2041 = vrcp.pop %v1913
    %v2042 = vrcp.pop %v1914
    %v2043 = vrcp.pop %v1915
    %v2044 = vrcp.pop %v1916
    %v2045 = vrcp.pop %v1917
    %v2046 = vrcp.pop %v1918
    %v2047 = vrcp.pop %v1919
    %v2048 = vrcp.pop %v1920
    %v2049 = vrcp.pop %v1921
    %v2050 = vrcp.pop %v1922
    %v2051 = vrcp.pop %v1923
    %v2052 = vrcp.pop %v1924
    %v2053 = vrcp.pop %v1925
    %v2054 = vrcp.pop %v1926
    %v2055 = vrcp.pop %v1927
    %v2056 = vrcp.pop %v1928
    %v2057 = vrcp.pop %v1929
    %v2058 = vrcp.pop %v1930
    %v2059 = vrcp.pop %v1931
    %v2060 = vrcp.pop %v1932
    %v2061 = vrcp.pop %v1933
    %v2062 = vrcp.pop %v1934
    %v2063 = vrcp.pop %v1935
    %v2064 = vrcp.pop %v1936
    %v2065 = vrcp.pop %v1937
    %v2066 = vrcp.pop %v1938
    %v2067 = vrcp.pop %v1939
    %v2068 = vrcp.pop %v1940
    %v2069 = vrcp.pop %v1941
    %v2070 = vrcp.pop %v1942
    %v2071 = vrcp.pop %v1943
    %v2072 = vrcp.pop %v1944
    %v2073 = vrcp.pop %v1945
    %v2074 = vrcp.pop %v1946
    %v2075 = vrcp.pop %v1947
    %v2076 = vrcp.pop %v1948
    %v2077 = vrcp.pop %v1949
    %v2078 = vrcp.pop %v1950
    %v2079 = vrcp.pop %v1951
    %v2080 = vrcp.pop %v1952
    %v2081 = vrcp.pop %v1953
    %v2082 = vrcp.pop %v1954
    %v2083 = vrcp.pop %v1955
    %v2084 = vrcp.pop %v1956
    %v2085 = vrcp.pop %v1957
    %v2086 = vrcp.pop %v1958
    %v2087 = vrcp.pop %v1959
    %v2088 = vrcp.pop %v1960
    %v2089 = vrcp.pop %v1961
    %v2090 = vrcp.pop %v1962
    %v2091 = vrcp.pop %v1963
    %v2092 = vrcp.pop %v1964
    %v2093 = vrcp.pop %v1965
    %v2094 = vrcp.pop %v1966
    %v2095 = vrcp.pop %v1967
    %v2096 = vrcp.pop %v1968
    %v2097 = vrcp.pop %v1969
    %v2098 = vrcp.pop %v1970
    %v2099 = vrcp.pop %v1971
    %v2100 = vrcp.pop %v1972
    %v2101 = vrcp.pop %v1973
    %v2102 = vrcp.pop %v1974
    %v2103 = vrcp.pop %v1975
    %v2104 = vrcp.pop %v1976
    %v2105 = vrcp.pop %v1977
    %v2106 = vrcp.pop %v1978
    %v2107 = vrcp.pop %v1979
    %v2108 = vrcp.pop %v1980
    %v2109 = vrcp.pop %v1981
    %v2110 = vrcp.pop %v1982
    %v2111 = vrcp.pop %v1983
    %v2112 = vrcp.pop %v1984
    %v2113 = vrcp.pop %v1985
    %v2114 = vmul.f32 %v385, %v1986
    %v2115 = vmul.f32 %v387, %v1987
    %v2116 = vmul.f32 %v642, %v1988
    %v2117 = vmul.f32 %v644, %v1989
    %v2118 = vmul.f32 %v391, %v1990
    %v2119 = vmul.f32 %v393, %v1991
    %v2120 = vmul.f32 %v648, %v1992
    %v2121 = vmul.f32 %v650, %v1993
    %v2122 = vmul.f32 %v397, %v1994
    %v2123 = vmul.f32 %v399, %v1995
    %v2124 = vmul.f32 %v654, %v1996
    %v2125 = vmul.f32 %v656, %v1997
    %v2126 = vmul.f32 %v403, %v1998
    %v2127 = vmul.f32 %v405, %v1999
    %v2128 = vmul.f32 %v660, %v2000
    %v2129 = vmul.f32 %v662, %v2001
    %v2130 = vmul.f32 %v409, %v2002
    %v2131 = vmul.f32 %v411, %v2003
    %v2132 = vmul.f32 %v666, %v2004
    %v2133 = vmul.f32 %v668, %v2005
    %v2134 = vmul.f32 %v415, %v2006
    %v2135 = vmul.f32 %v417, %v2007
    %v2136 = vmul.f32 %v672, %v2008
    %v2137 = vmul.f32 %v674, %v2009
    %v2138 = vmul.f32 %v421, %v2010
    %v2139 = vmul.f32 %v423, %v2011
    %v2140 = vmul.f32 %v678, %v2012
    %v2141 = vmul.f32 %v680, %v2013
    %v2142 = vmul.f32 %v427, %v2014
    %v2143 = vmul.f32 %v429, %v2015
    %v2144 = vmul.f32 %v684, %v2016
    %v2145 = vmul.f32 %v686, %v2017
    %v2146 = vmul.f32 %v433, %v2018
    %v2147 = vmul.f32 %v435, %v2019
    %v2148 = vmul.f32 %v690, %v2020
    %v2149 = vmul.f32 %v692, %v2021
    %v2150 = vmul.f32 %v439, %v2022
    %v2151 = vmul.f32 %v441, %v2023
    %v2152 = vmul.f32 %v696, %v2024
    %v2153 = vmul.f32 %v698, %v2025
    %v2154 = vmul.f32 %v445, %v2026
    %v2155 = vmul.f32 %v447, %v2027
    %v2156 = vmul.f32 %v702, %v2028
    %v2157 = vmul.f32 %v704, %v2029
    %v2158 = vmul.f32 %v451, %v2030
    %v2159 = vmul.f32 %v453, %v2031
    %v2160 = vmul.f32 %v708, %v2032
    %v2161 = vmul.f32 %v710, %v2033
    %v2162 = vmul.f32 %v457, %v2034
    %v2163 = vmul.f32 %v459, %v2035
    %v2164 = vmul.f32 %v714, %v2036
    %v2165 = vmul.f32 %v716, %v2037
    %v2166 = vmul.f32 %v463, %v2038
    %v2167 = vmul.f32 %v465, %v2039
    %v2168 = vmul.f32 %v720, %v2040
    %v2169 = vmul.f32 %v722, %v2041
    %v2170 = vmul.f32 %v469, %v2042
    %v2171 = vmul.f32 %v471, %v2043
    %v2172 = vmul.f32 %v726, %v2044
    %v2173 = vmul.f32 %v728, %v2045
    %v2174 = vmul.f32 %v475, %v2046
    %v2175 = vmul.f32 %v477, %v2047
    %v2176 = vmul.f32 %v732, %v2048
    %v2177 = vmul.f32 %v734, %v2049
    %v2178 = vmul.f32 %v481, %v2050
    %v2179 = vmul.f32 %v483, %v2051
    %v2180 = vmul.f32 %v738, %v2052
    %v2181 = vmul.f32 %v740, %v2053
    %v2182 = vmul.f32 %v487, %v2054
    %v2183 = vmul.f32 %v489, %v2055
    %v2184 = vmul.f32 %v744, %v2056
    %v2185 = vmul.f32 %v746, %v2057
    %v2186 = vmul.f32 %v493, %v2058
    %v2187 = vmul.f32 %v495, %v2059
    %v2188 = vmul.f32 %v750, %v2060
    %v2189 = vmul.f32 %v752, %v2061
    %v2190 = vmul.f32 %v499, %v2062
    %v2191 = vmul.f32 %v501, %v2063
    %v2192 = vmul.f32 %v756, %v2064
    %v2193 = vmul.f32 %v758, %v2065
    %v2194 = vmul.f32 %v505, %v2066
    %v2195 = vmul.f32 %v507, %v2067
    %v2196 = vmul.f32 %v762, %v2068
    %v2197 = vmul.f32 %v764, %v2069
    %v2198 = vmul.f32 %v511, %v2070
    %v2199 = vmul.f32 %v513, %v2071
    %v2200 = vmul.f32 %v768, %v2072
    %v2201 = vmul.f32 %v770, %v2073
    %v2202 = vmul.f32 %v517, %v2074
    %v2203 = vmul.f32 %v519, %v2075
    %v2204 = vmul.f32 %v774, %v2076
    %v2205 = vmul.f32 %v776, %v2077
    %v2206 = vmul.f32 %v523, %v2078
    %v2207 = vmul.f32 %v525, %v2079
    %v2208 = vmul.f32 %v780, %v2080
    %v2209 = vmul.f32 %v782, %v2081
    %v2210 = vmul.f32 %v529, %v2082
    %v2211 = vmul.f32 %v531, %v2083
    %v2212 = vmul.f32 %v786, %v2084
    %v2213 = vmul.f32 %v788, %v2085
    %v2214 = vmul.f32 %v535, %v2086
    %v2215 = vmul.f32 %v537, %v2087
    %v2216 = vmul.f32 %v792, %v2088
    %v2217 = vmul.f32 %v794, %v2089
    %v2218 = vmul.f32 %v541, %v2090
    %v2219 = vmul.f32 %v543, %v2091
    %v2220 = vmul.f32 %v798, %v2092
    %v2221 = vmul.f32 %v800, %v2093
    %v2222 = vmul.f32 %v547, %v2094
    %v2223 = vmul.f32 %v549, %v2095
    %v2224 = vmul.f32 %v804, %v2096
    %v2225 = vmul.f32 %v806, %v2097
    %v2226 = vmul.f32 %v553, %v2098
    %v2227 = vmul.f32 %v555, %v2099
    %v2228 = vmul.f32 %v810, %v2100
    %v2229 = vmul.f32 %v812, %v2101
    %v2230 = vmul.f32 %v559, %v2102
    %v2231 = vmul.f32 %v561, %v2103
    %v2232 = vmul.f32 %v816, %v2104
    %v2233 = vmul.f32 %v818, %v2105
    %v2234 = vmul.f32 %v565, %v2106
    %v2235 = vmul.f32 %v567, %v2107
    %v2236 = vmul.f32 %v822, %v2108
    %v2237 = vmul.f32 %v824, %v2109
    %v2238 = vmul.f32 %v571, %v2110
    %v2239 = vmul.f32 %v573, %v2111
    %v2240 = vmul.f32 %v828, %v2112
    %v2241 = vmul.f32 %v830, %v2113
    %v2242 = vmul.f32 %v2114, %v1027
    %v2243 = vmul.f32 %v2115, %v1029
    %v2244 = vmul.f32 %v2116, %v1284
    %v2245 = vmul.f32 %v2117, %v1286
    %v2246 = vmul.f32 %v2118, %v1033
    %v2247 = vmul.f32 %v2119, %v1035
    %v2248 = vmul.f32 %v2120, %v1290
    %v2249 = vmul.f32 %v2121, %v1292
    %v2250 = vmul.f32 %v2122, %v1039
    %v2251 = vmul.f32 %v2123, %v1041
    %v2252 = vmul.f32 %v2124, %v1296
    %v2253 = vmul.f32 %v2125, %v1298
    %v2254 = vmul.f32 %v2126, %v1045
    %v2255 = vmul.f32 %v2127, %v1047
    %v2256 = vmul.f32 %v2128, %v1302
    %v2257 = vmul.f32 %v2129, %v1304
    %v2258 = vmul.f32 %v2130, %v1051
    %v2259 = vmul.f32 %v2131, %v1053
    %v2260 = vmul.f32 %v2132, %v1308
    %v2261 = vmul.f32 %v2133, %v1310
    %v2262 = vmul.f32 %v2134, %v1057
    %v2263 = vmul.f32 %v2135, %v1059
    %v2264 = vmul.f32 %v2136, %v1314
    %v2265 = vmul.f32 %v2137, %v1316
    %v2266 = vmul.f32 %v2138, %v1063
    %v2267 = vmul.f32 %v2139, %v1065
    %v2268 = vmul.f32 %v2140, %v1320
    %v2269 = vmul.f32 %v2141, %v1322
    %v2270 = vmul.f32 %v2142, %v1069
    %v2271 = vmul.f32 %v2143, %v1071
    %v2272 = vmul.f32 %v2144, %v1326
    %v2273 = vmul.f32 %v2145, %v1328
    %v2274 = vmul.f32 %v2146, %v1075
    %v2275 = vmul.f32 %v2147, %v1077
    %v2276 = vmul.f32 %v2148, %v1332
    %v2277 = vmul.f32 %v2149, %v1334
    %v2278 = vmul.f32 %v2150, %v1081
    %v2279 = vmul.f32 %v2151, %v1083
    %v2280 = vmul.f32 %v2152, %v1338
    %v2281 = vmul.f32 %v2153, %v1340
    %v2282 = vmul.f32 %v2154, %v1087
    %v2283 = vmul.f32 %v2155, %v1089
    %v2284 = vmul.f32 %v2156, %v1344
    %v2285 = vmul.f32 %v2157, %v1346
    %v2286 = vmul.f32 %v2158, %v1093
    %v2287 = vmul.f32 %v2159, %v1095
    %v2288 = vmul.f32 %v2160, %v1350
    %v2289 = vmul.f32 %v2161, %v1352
    %v2290 = vmul.f32 %v2162, %v1099
    %v2291 = vmul.f32 %v2163, %v1101
    %v2292 = vmul.f32 %v2164, %v1356
    %v2293 = vmul.f32 %v2165, %v1358
    %v2294 = vmul.f32 %v2166, %v1105
    %v2295 = vmul.f32 %v2167, %v1107
    %v2296 = vmul.f32 %v2168, %v1362
    %v2297 = vmul.f32 %v2169, %v1364
    %v2298 = vmul.f32 %v2170, %v1111
    %v2299 = vmul.f32 %v2171, %v1113
    %v2300 = vmul.f32 %v2172, %v1368
    %v2301 = vmul.f32 %v2173, %v1370
    %v2302 = vmul.f32 %v2174, %v1117
    %v2303 = vmul.f32 %v2175, %v1119
    %v2304 = vmul.f32 %v2176, %v1374
    %v2305 = vmul.f32 %v2177, %v1376
    %v2306 = vmul.f32 %v2178, %v1123
    %v2307 = vmul.f32 %v2179, %v1125
    %v2308 = vmul.f32 %v2180, %v1380
    %v2309 = vmul.f32 %v2181, %v1382
    %v2310 = vmul.f32 %v2182, %v1129
    %v2311 = vmul.f32 %v2183, %v1131
    %v2312 = vmul.f32 %v2184, %v1386
    %v2313 = vmul.f32 %v2185, %v1388
    %v2314 = vmul.f32 %v2186, %v1135
    %v2315 = vmul.f32 %v2187, %v1137
    %v2316 = vmul.f32 %v2188, %v1392
    %v2317 = vmul.f32 %v2189, %v1394
    %v2318 = vmul.f32 %v2190, %v1141
    %v2319 = vmul.f32 %v2191, %v1143
    %v2320 = vmul.f32 %v2192, %v1398
    %v2321 = vmul.f32 %v2193, %v1400
    %v2322 = vmul.f32 %v2194, %v1147
    %v2323 = vmul.f32 %v2195, %v1149
    %v2324 = vmul.f32 %v2196, %v1404
    %v2325 = vmul.f32 %v2197, %v1406
    %v2326 = vmul.f32 %v2198, %v1153
    %v2327 = vmul.f32 %v2199, %v1155
    %v2328 = vmul.f32 %v2200, %v1410
    %v2329 = vmul.f32 %v2201, %v1412
    %v2330 = vmul.f32 %v2202, %v1159
    %v2331 = vmul.f32 %v2203, %v1161
    %v2332 = vmul.f32 %v2204, %v1416
    %v2333 = vmul.f32 %v2205, %v1418
    %v2334 = vmul.f32 %v2206, %v1165
    %v2335 = vmul.f32 %v2207, %v1167
    %v2336 = vmul.f32 %v2208, %v1422
    %v2337 = vmul.f32 %v2209, %v1424
    %v2338 = vmul.f32 %v2210, %v1171
    %v2339 = vmul.f32 %v2211, %v1173
    %v2340 = vmul.f32 %v2212, %v1428
    %v2341 = vmul.f32 %v2213, %v1430
    %v2342 = vmul.f32 %v2214, %v1177
    %v2343 = vmul.f32 %v2215, %v1179
    %v2344 = vmul.f32 %v2216, %v1434
    %v2345 = vmul.f32 %v2217, %v1436
    %v2346 = vmul.f32 %v2218, %v1183
    %v2347 = vmul.f32 %v2219, %v1185
    %v2348 = vmul.f32 %v2220, %v1440
    %v2349 = vmul.f32 %v2221, %v1442
    %v2350 = vmul.f32 %v2222, %v1189
    %v2351 = vmul.f32 %v2223, %v1191
    %v2352 = vmul.f32 %v2224, %v1446
    %v2353 = vmul.f32 %v2225, %v1448
    %v2354 = vmul.f32 %v2226, %v1195
    %v2355 = vmul.f32 %v2227, %v1197
    %v2356 = vmul.f32 %v2228, %v1452
    %v2357 = vmul.f32 %v2229, %v1454
    %v2358 = vmul.f32 %v2230, %v1201
    %v2359 = vmul.f32 %v2231, %v1203
    %v2360 = vmul.f32 %v2232, %v1458
    %v2361 = vmul.f32 %v2233, %v1460
    %v2362 = vmul.f32 %v2234, %v1207
    %v2363 = vmul.f32 %v2235, %v1209
    %v2364 = vmul.f32 %v2236, %v1464
    %v2365 = vmul.f32 %v2237, %v1466
    %v2366 = vmul.f32 %v2238, %v1213
    %v2367 = vmul.f32 %v2239, %v1215
    %v2368 = vmul.f32 %v2240, %v1470
    %v2369 = vmul.f32 %v2241, %v1472
    %v2370 = vld [vmem:[#allocation2] sm:$0xff]
    %v2371 = vld [vmem:[#allocation2 + $0x8] sm:$0xff]
    %v2372 = vld [vmem:[#allocation2 + $0x10] sm:$0xff]
    %v2373 = vld [vmem:[#allocation2 + $0x18] sm:$0xff]
    %v2374 = vld [vmem:[#allocation2 + $0x20] sm:$0xff]
    %v2375 = vld [vmem:[#allocation2 + $0x28] sm:$0xff]
    %v2376 = vld [vmem:[#allocation2 + $0x30] sm:$0xff]
    %v2377 = vld [vmem:[#allocation2 + $0x38] sm:$0xff]
    %v2378 = vld [vmem:[#allocation2 + $0x40] sm:$0xff]
    %v2379 = vld [vmem:[#allocation2 + $0x48] sm:$0xff]
    %v2380 = vld [vmem:[#allocation2 + $0x50] sm:$0xff]
    %v2381 = vld [vmem:[#allocation2 + $0x58] sm:$0xff]
    %v2382 = vld [vmem:[#allocation2 + $0x60] sm:$0xff]
    %v2383 = vld [vmem:[#allocation2 + $0x68] sm:$0xff]
    %v2384 = vld [vmem:[#allocation2 + $0x70] sm:$0xff]
    %v2385 = vld [vmem:[#allocation2 + $0x78] sm:$0xff]
    %v2386 = vld [vmem:[#allocation2 + $0x80] sm:$0xff]
    %v2387 = vld [vmem:[#allocation2 + $0x88] sm:$0xff]
    %v2388 = vld [vmem:[#allocation2 + $0x90] sm:$0xff]
    %v2389 = vld [vmem:[#allocation2 + $0x98] sm:$0xff]
    %v2390 = vld [vmem:[#allocation2 + $0xa0] sm:$0xff]
    %v2391 = vld [vmem:[#allocation2 + $0xa8] sm:$0xff]
    %v2392 = vld [vmem:[#allocation2 + $0xb0] sm:$0xff]
    %v2393 = vld [vmem:[#allocation2 + $0xb8] sm:$0xff]
    %v2394 = vld [vmem:[#allocation2 + $0xc0] sm:$0xff]
    %v2395 = vld [vmem:[#allocation2 + $0xc8] sm:$0xff]
    %v2396 = vld [vmem:[#allocation2 + $0xd0] sm:$0xff]
    %v2397 = vld [vmem:[#allocation2 + $0xd8] sm:$0xff]
    %v2398 = vld [vmem:[#allocation2 + $0xe0] sm:$0xff]
    %v2399 = vld [vmem:[#allocation2 + $0xe8] sm:$0xff]
    %v2400 = vld [vmem:[#allocation2 + $0xf0] sm:$0xff]
    %v2401 = vld [vmem:[#allocation2 + $0xf8] sm:$0xff]
    %v2402 = vld [vmem:[#allocation2 + $0x100] sm:$0xff]
    %v2403 = vld [vmem:[#allocation2 + $0x108] sm:$0xff]
    %v2404 = vld [vmem:[#allocation2 + $0x110] sm:$0xff]
    %v2405 = vld [vmem:[#allocation2 + $0x118] sm:$0xff]
    %v2406 = vld [vmem:[#allocation2 + $0x120] sm:$0xff]
    %v2407 = vld [vmem:[#allocation2 + $0x128] sm:$0xff]
    %v2408 = vld [vmem:[#allocation2 + $0x130] sm:$0xff]
    %v2409 = vld [vmem:[#allocation2 + $0x138] sm:$0xff]
    %v2410 = vld [vmem:[#allocation2 + $0x140] sm:$0xff]
    %v2411 = vld [vmem:[#allocation2 + $0x148] sm:$0xff]
    %v2412 = vld [vmem:[#allocation2 + $0x150] sm:$0xff]
    %v2413 = vld [vmem:[#allocation2 + $0x158] sm:$0xff]
    %v2414 = vld [vmem:[#allocation2 + $0x160] sm:$0xff]
    %v2415 = vld [vmem:[#allocation2 + $0x168] sm:$0xff]
    %v2416 = vld [vmem:[#allocation2 + $0x170] sm:$0xff]
    %v2417 = vld [vmem:[#allocation2 + $0x178] sm:$0xff]
    %v2418 = vld [vmem:[#allocation2 + $0x180] sm:$0xff]
    %v2419 = vld [vmem:[#allocation2 + $0x188] sm:$0xff]
    %v2420 = vld [vmem:[#allocation2 + $0x190] sm:$0xff]
    %v2421 = vld [vmem:[#allocation2 + $0x198] sm:$0xff]
    %v2422 = vld [vmem:[#allocation2 + $0x1a0] sm:$0xff]
    %v2423 = vld [vmem:[#allocation2 + $0x1a8] sm:$0xff]
    %v2424 = vld [vmem:[#allocation2 + $0x1b0] sm:$0xff]
    %v2425 = vld [vmem:[#allocation2 + $0x1b8] sm:$0xff]
    %v2426 = vld [vmem:[#allocation2 + $0x1c0] sm:$0xff]
    %v2427 = vld [vmem:[#allocation2 + $0x1c8] sm:$0xff]
    %v2428 = vld [vmem:[#allocation2 + $0x1d0] sm:$0xff]
    %v2429 = vld [vmem:[#allocation2 + $0x1d8] sm:$0xff]
    %v2430 = vld [vmem:[#allocation2 + $0x1e0] sm:$0xff]
    %v2431 = vld [vmem:[#allocation2 + $0x1e8] sm:$0xff]
    %v2432 = vld [vmem:[#allocation2 + $0x1f0] sm:$0xff]
    %v2433 = vld [vmem:[#allocation2 + $0x1f8] sm:$0xff]
    %v2434 = vld [vmem:[#allocation7] sm:$0xff]
    %v2435 = vld [vmem:[#allocation7 + $0x8] sm:$0xff]
    %v2436 = vld [vmem:[#allocation7 + $0x10] sm:$0xff]
    %v2437 = vld [vmem:[#allocation7 + $0x18] sm:$0xff]
    %v2438 = vld [vmem:[#allocation7 + $0x20] sm:$0xff]
    %v2439 = vld [vmem:[#allocation7 + $0x28] sm:$0xff]
    %v2440 = vld [vmem:[#allocation7 + $0x30] sm:$0xff]
    %v2441 = vld [vmem:[#allocation7 + $0x38] sm:$0xff]
    %v2442 = vld [vmem:[#allocation7 + $0x40] sm:$0xff]
    %v2443 = vld [vmem:[#allocation7 + $0x48] sm:$0xff]
    %v2444 = vld [vmem:[#allocation7 + $0x50] sm:$0xff]
    %v2445 = vld [vmem:[#allocation7 + $0x58] sm:$0xff]
    %v2446 = vld [vmem:[#allocation7 + $0x60] sm:$0xff]
    %v2447 = vld [vmem:[#allocation7 + $0x68] sm:$0xff]
    %v2448 = vld [vmem:[#allocation7 + $0x70] sm:$0xff]
    %v2449 = vld [vmem:[#allocation7 + $0x78] sm:$0xff]
    %v2450 = vld [vmem:[#allocation7 + $0x80] sm:$0xff]
    %v2451 = vld [vmem:[#allocation7 + $0x88] sm:$0xff]
    %v2452 = vld [vmem:[#allocation7 + $0x90] sm:$0xff]
    %v2453 = vld [vmem:[#allocation7 + $0x98] sm:$0xff]
    %v2454 = vld [vmem:[#allocation7 + $0xa0] sm:$0xff]
    %v2455 = vld [vmem:[#allocation7 + $0xa8] sm:$0xff]
    %v2456 = vld [vmem:[#allocation7 + $0xb0] sm:$0xff]
    %v2457 = vld [vmem:[#allocation7 + $0xb8] sm:$0xff]
    %v2458 = vld [vmem:[#allocation7 + $0xc0] sm:$0xff]
    %v2459 = vld [vmem:[#allocation7 + $0xc8] sm:$0xff]
    %v2460 = vld [vmem:[#allocation7 + $0xd0] sm:$0xff]
    %v2461 = vld [vmem:[#allocation7 + $0xd8] sm:$0xff]
    %v2462 = vld [vmem:[#allocation7 + $0xe0] sm:$0xff]
    %v2463 = vld [vmem:[#allocation7 + $0xe8] sm:$0xff]
    %v2464 = vld [vmem:[#allocation7 + $0xf0] sm:$0xff]
    %v2465 = vld [vmem:[#allocation7 + $0xf8] sm:$0xff]
    %v2466 = vld [vmem:[#allocation7 + $0x100] sm:$0xff]
    %v2467 = vld [vmem:[#allocation7 + $0x108] sm:$0xff]
    %v2468 = vld [vmem:[#allocation7 + $0x110] sm:$0xff]
    %v2469 = vld [vmem:[#allocation7 + $0x118] sm:$0xff]
    %v2470 = vld [vmem:[#allocation7 + $0x120] sm:$0xff]
    %v2471 = vld [vmem:[#allocation7 + $0x128] sm:$0xff]
    %v2472 = vld [vmem:[#allocation7 + $0x130] sm:$0xff]
    %v2473 = vld [vmem:[#allocation7 + $0x138] sm:$0xff]
    %v2474 = vld [vmem:[#allocation7 + $0x140] sm:$0xff]
    %v2475 = vld [vmem:[#allocation7 + $0x148] sm:$0xff]
    %v2476 = vld [vmem:[#allocation7 + $0x150] sm:$0xff]
    %v2477 = vld [vmem:[#allocation7 + $0x158] sm:$0xff]
    %v2478 = vld [vmem:[#allocation7 + $0x160] sm:$0xff]
    %v2479 = vld [vmem:[#allocation7 + $0x168] sm:$0xff]
    %v2480 = vld [vmem:[#allocation7 + $0x170] sm:$0xff]
    %v2481 = vld [vmem:[#allocation7 + $0x178] sm:$0xff]
    %v2482 = vld [vmem:[#allocation7 + $0x180] sm:$0xff]
    %v2483 = vld [vmem:[#allocation7 + $0x188] sm:$0xff]
    %v2484 = vld [vmem:[#allocation7 + $0x190] sm:$0xff]
    %v2485 = vld [vmem:[#allocation7 + $0x198] sm:$0xff]
    %v2486 = vld [vmem:[#allocation7 + $0x1a0] sm:$0xff]
    %v2487 = vld [vmem:[#allocation7 + $0x1a8] sm:$0xff]
    %v2488 = vld [vmem:[#allocation7 + $0x1b0] sm:$0xff]
    %v2489 = vld [vmem:[#allocation7 + $0x1b8] sm:$0xff]
    %v2490 = vld [vmem:[#allocation7 + $0x1c0] sm:$0xff]
    %v2491 = vld [vmem:[#allocation7 + $0x1c8] sm:$0xff]
    %v2492 = vld [vmem:[#allocation7 + $0x1d0] sm:$0xff]
    %v2493 = vld [vmem:[#allocation7 + $0x1d8] sm:$0xff]
    %v2494 = vld [vmem:[#allocation7 + $0x1e0] sm:$0xff]
    %v2495 = vld [vmem:[#allocation7 + $0x1e8] sm:$0xff]
    %v2496 = vld [vmem:[#allocation7 + $0x1f0] sm:$0xff]
    %v2497 = vld [vmem:[#allocation7 + $0x1f8] sm:$0xff]
    %v2498 = vld [vmem:[#allocation7 + $0x200] sm:$0xff]
    %v2499 = vld [vmem:[#allocation7 + $0x208] sm:$0xff]
    %v2500 = vld [vmem:[#allocation7 + $0x210] sm:$0xff]
    %v2501 = vld [vmem:[#allocation7 + $0x218] sm:$0xff]
    %v2502 = vld [vmem:[#allocation7 + $0x220] sm:$0xff]
    %v2503 = vld [vmem:[#allocation7 + $0x228] sm:$0xff]
    %v2504 = vld [vmem:[#allocation7 + $0x230] sm:$0xff]
    %v2505 = vld [vmem:[#allocation7 + $0x238] sm:$0xff]
    %v2506 = vld [vmem:[#allocation7 + $0x240] sm:$0xff]
    %v2507 = vld [vmem:[#allocation7 + $0x248] sm:$0xff]
    %v2508 = vld [vmem:[#allocation7 + $0x250] sm:$0xff]
    %v2509 = vld [vmem:[#allocation7 + $0x258] sm:$0xff]
    %v2510 = vld [vmem:[#allocation7 + $0x260] sm:$0xff]
    %v2511 = vld [vmem:[#allocation7 + $0x268] sm:$0xff]
    %v2512 = vld [vmem:[#allocation7 + $0x270] sm:$0xff]
    %v2513 = vld [vmem:[#allocation7 + $0x278] sm:$0xff]
    %v2514 = vld [vmem:[#allocation7 + $0x280] sm:$0xff]
    %v2515 = vld [vmem:[#allocation7 + $0x288] sm:$0xff]
    %v2516 = vld [vmem:[#allocation7 + $0x290] sm:$0xff]
    %v2517 = vld [vmem:[#allocation7 + $0x298] sm:$0xff]
    %v2518 = vld [vmem:[#allocation7 + $0x2a0] sm:$0xff]
    %v2519 = vld [vmem:[#allocation7 + $0x2a8] sm:$0xff]
    %v2520 = vld [vmem:[#allocation7 + $0x2b0] sm:$0xff]
    %v2521 = vld [vmem:[#allocation7 + $0x2b8] sm:$0xff]
    %v2522 = vld [vmem:[#allocation7 + $0x2c0] sm:$0xff]
    %v2523 = vld [vmem:[#allocation7 + $0x2c8] sm:$0xff]
    %v2524 = vld [vmem:[#allocation7 + $0x2d0] sm:$0xff]
    %v2525 = vld [vmem:[#allocation7 + $0x2d8] sm:$0xff]
    %v2526 = vld [vmem:[#allocation7 + $0x2e0] sm:$0xff]
    %v2527 = vld [vmem:[#allocation7 + $0x2e8] sm:$0xff]
    %v2528 = vld [vmem:[#allocation7 + $0x2f0] sm:$0xff]
    %v2529 = vld [vmem:[#allocation7 + $0x2f8] sm:$0xff]
    %v2530 = vld [vmem:[#allocation7 + $0x300] sm:$0xff]
    %v2531 = vld [vmem:[#allocation7 + $0x308] sm:$0xff]
    %v2532 = vld [vmem:[#allocation7 + $0x310] sm:$0xff]
    %v2533 = vld [vmem:[#allocation7 + $0x318] sm:$0xff]
    %v2534 = vld [vmem:[#allocation7 + $0x320] sm:$0xff]
    %v2535 = vld [vmem:[#allocation7 + $0x328] sm:$0xff]
    %v2536 = vld [vmem:[#allocation7 + $0x330] sm:$0xff]
    %v2537 = vld [vmem:[#allocation7 + $0x338] sm:$0xff]
    %v2538 = vld [vmem:[#allocation7 + $0x340] sm:$0xff]
    %v2539 = vld [vmem:[#allocation7 + $0x348] sm:$0xff]
    %v2540 = vld [vmem:[#allocation7 + $0x350] sm:$0xff]
    %v2541 = vld [vmem:[#allocation7 + $0x358] sm:$0xff]
    %v2542 = vld [vmem:[#allocation7 + $0x360] sm:$0xff]
    %v2543 = vld [vmem:[#allocation7 + $0x368] sm:$0xff]
    %v2544 = vld [vmem:[#allocation7 + $0x370] sm:$0xff]
    %v2545 = vld [vmem:[#allocation7 + $0x378] sm:$0xff]
    %v2546 = vld [vmem:[#allocation7 + $0x380] sm:$0xff]
    %v2547 = vld [vmem:[#allocation7 + $0x388] sm:$0xff]
    %v2548 = vld [vmem:[#allocation7 + $0x390] sm:$0xff]
    %v2549 = vld [vmem:[#allocation7 + $0x398] sm:$0xff]
    %v2550 = vld [vmem:[#allocation7 + $0x3a0] sm:$0xff]
    %v2551 = vld [vmem:[#allocation7 + $0x3a8] sm:$0xff]
    %v2552 = vld [vmem:[#allocation7 + $0x3b0] sm:$0xff]
    %v2553 = vld [vmem:[#allocation7 + $0x3b8] sm:$0xff]
    %v2554 = vld [vmem:[#allocation7 + $0x3c0] sm:$0xff]
    %v2555 = vld [vmem:[#allocation7 + $0x3c8] sm:$0xff]
    %v2556 = vld [vmem:[#allocation7 + $0x3d0] sm:$0xff]
    %v2557 = vld [vmem:[#allocation7 + $0x3d8] sm:$0xff]
    %v2558 = vld [vmem:[#allocation7 + $0x3e0] sm:$0xff]
    %v2559 = vld [vmem:[#allocation7 + $0x3e8] sm:$0xff]
    %v2560 = vld [vmem:[#allocation7 + $0x3f0] sm:$0xff]
    %v2561 = vld [vmem:[#allocation7 + $0x3f8] sm:$0xff]
    %2562 = vmatprep.subr.mxu0 %v2465
    %2563 = vmatpush1.msra.mxu0 %v2464
    %2564 = vmatprep.subr.mxu0 %v2463
    %2565 = vmatpush1.msra.mxu0 %v2462
    %2566 = vmatprep.subr.mxu0 %v2461
    %2567 = vmatpush1.msra.mxu0 %v2460
    %2568 = vmatprep.subr.mxu0 %v2459
    %2569 = vmatpush1.msra.mxu0 %v2458
    %2570 = vmatprep.subr.mxu0 %v2457
    %2571 = vmatpush1.msra.mxu0 %v2456
    %2572 = vmatprep.subr.mxu0 %v2455
    %2573 = vmatpush1.msra.mxu0 %v2454
    %2574 = vmatprep.subr.mxu0 %v2453
    %2575 = vmatpush1.msra.mxu0 %v2452
    %2576 = vmatprep.subr.mxu0 %v2451
    %2577 = vmatpush1.msra.mxu0 %v2450
    %2578 = vmatprep.subr.mxu0 %v2449
    %2579 = vmatpush1.msra.mxu0 %v2448
    %2580 = vmatprep.subr.mxu0 %v2447
    %2581 = vmatpush1.msra.mxu0 %v2446
    %2582 = vmatprep.subr.mxu0 %v2445
    %2583 = vmatpush1.msra.mxu0 %v2444
    %2584 = vmatprep.subr.mxu0 %v2443
    %2585 = vmatpush1.msra.mxu0 %v2442
    %2586 = vmatprep.subr.mxu0 %v2441
    %2587 = vmatpush1.msra.mxu0 %v2440
    %2588 = vmatprep.subr.mxu0 %v2439
    %2589 = vmatpush1.msra.mxu0 %v2438
    %2590 = vmatprep.subr.mxu0 %v2437
    %2591 = vmatpush1.msra.mxu0 %v2436
    %2592 = vmatprep.subr.mxu0 %v2435
    %2593 = vmatpush1.msra.mxu0 %v2434
    %2594 = vmatprep.subr.mxu0 %v2497
    %2595 = vmatpush2.msra.mxu0 %v2496
    %2596 = vmatprep.subr.mxu0 %v2495
    %2597 = vmatpush2.msra.mxu0 %v2494
    %2598 = vmatprep.subr.mxu0 %v2493
    %2599 = vmatpush2.msra.mxu0 %v2492
    %2600 = vmatprep.subr.mxu0 %v2491
    %2601 = vmatpush2.msra.mxu0 %v2490
    %2602 = vmatprep.subr.mxu0 %v2489
    %2603 = vmatpush2.msra.mxu0 %v2488
    %2604 = vmatprep.subr.mxu0 %v2487
    %2605 = vmatpush2.msra.mxu0 %v2486
    %2606 = vmatprep.subr.mxu0 %v2485
    %2607 = vmatpush2.msra.mxu0 %v2484
    %2608 = vmatprep.subr.mxu0 %v2483
    %2609 = vmatpush2.msra.mxu0 %v2482
    %2610 = vmatprep.subr.mxu0 %v2481
    %2611 = vmatpush2.msra.mxu0 %v2480
    %2612 = vmatprep.subr.mxu0 %v2479
    %2613 = vmatpush2.msra.mxu0 %v2478
    %2614 = vmatprep.subr.mxu0 %v2477
    %2615 = vmatpush2.msra.mxu0 %v2476
    %2616 = vmatprep.subr.mxu0 %v2475
    %2617 = vmatpush2.msra.mxu0 %v2474
    %2618 = vmatprep.subr.mxu0 %v2473
    %2619 = vmatpush2.msra.mxu0 %v2472
    %2620 = vmatprep.subr.mxu0 %v2471
    %2621 = vmatpush2.msra.mxu0 %v2470
    %2622 = vmatprep.subr.mxu0 %v2469
    %2623 = vmatpush2.msra.mxu0 %v2468
    %2624 = vmatprep.subr.mxu0 %v2467
    %2625 = vmatpush2.msra.mxu0 %v2466
    %2626 = vmatprep.mubr.f32.mxu0 %v2243
    %2627 = vmatmul.mubr.f32.gmra.mxu0 %v2242
    %v2628 = vpop.f32.mrf.mxu0
    %v2629 = vadd.f32 0.0, %v2628
    %v2630 = vpop.f32.mrf.mxu0
    %v2631 = vadd.f32 0.0, %v2630
    %2632 = vmatprep.mubr.f32.mxu0 %v2247
    %2633 = vmatmul.mubr.f32.gmra.mxu0 %v2246
    %v2634 = vpop.f32.mrf.mxu0
    %v2635 = vadd.f32 0.0, %v2634
    %v2636 = vpop.f32.mrf.mxu0
    %v2637 = vadd.f32 0.0, %v2636
    %2638 = vmatprep.mubr.f32.mxu0 %v2251
    %2639 = vmatmul.mubr.f32.gmra.mxu0 %v2250
    %v2640 = vpop.f32.mrf.mxu0
    %v2641 = vadd.f32 0.0, %v2640
    %v2642 = vpop.f32.mrf.mxu0
    %v2643 = vadd.f32 0.0, %v2642
    %2644 = vmatprep.mubr.f32.mxu0 %v2255
    %2645 = vmatmul.mubr.f32.gmra.mxu0 %v2254
    %v2646 = vpop.f32.mrf.mxu0
    %v2647 = vadd.f32 0.0, %v2646
    %v2648 = vpop.f32.mrf.mxu0
    %v2649 = vadd.f32 0.0, %v2648
    %2650 = vmatprep.mubr.f32.mxu0 %v2259
    %2651 = vmatmul.mubr.f32.gmra.mxu0 %v2258
    %v2652 = vpop.f32.mrf.mxu0
    %v2653 = vadd.f32 0.0, %v2652
    %v2654 = vpop.f32.mrf.mxu0
    %v2655 = vadd.f32 0.0, %v2654
    %2656 = vmatprep.mubr.f32.mxu0 %v2263
    %2657 = vmatmul.mubr.f32.gmra.mxu0 %v2262
    %v2658 = vpop.f32.mrf.mxu0
    %v2659 = vadd.f32 0.0, %v2658
    %v2660 = vpop.f32.mrf.mxu0
    %v2661 = vadd.f32 0.0, %v2660
    %2662 = vmatprep.mubr.f32.mxu0 %v2267
    %2663 = vmatmul.mubr.f32.gmra.mxu0 %v2266
    %v2664 = vpop.f32.mrf.mxu0
    %v2665 = vadd.f32 0.0, %v2664
    %v2666 = vpop.f32.mrf.mxu0
    %v2667 = vadd.f32 0.0, %v2666
    %2668 = vmatprep.mubr.f32.mxu0 %v2271
    %2669 = vmatmul.mubr.f32.gmra.mxu0 %v2270
    %v2670 = vpop.f32.mrf.mxu0
    %v2671 = vadd.f32 0.0, %v2670
    %v2672 = vpop.f32.mrf.mxu0
    %v2673 = vadd.f32 0.0, %v2672
    %2674 = vmatprep.mubr.f32.mxu0 %v2275
    %2675 = vmatmul.mubr.f32.gmra.mxu0 %v2274
    %v2676 = vpop.f32.mrf.mxu0
    %v2677 = vadd.f32 0.0, %v2676
    %v2678 = vpop.f32.mrf.mxu0
    %v2679 = vadd.f32 0.0, %v2678
    %2680 = vmatprep.mubr.f32.mxu0 %v2279
    %2681 = vmatmul.mubr.f32.gmra.mxu0 %v2278
    %v2682 = vpop.f32.mrf.mxu0
    %v2683 = vadd.f32 0.0, %v2682
    %v2684 = vpop.f32.mrf.mxu0
    %v2685 = vadd.f32 0.0, %v2684
    %2686 = vmatprep.mubr.f32.mxu0 %v2283
    %2687 = vmatmul.mubr.f32.gmra.mxu0 %v2282
    %v2688 = vpop.f32.mrf.mxu0
    %v2689 = vadd.f32 0.0, %v2688
    %v2690 = vpop.f32.mrf.mxu0
    %v2691 = vadd.f32 0.0, %v2690
    %2692 = vmatprep.mubr.f32.mxu0 %v2287
    %2693 = vmatmul.mubr.f32.gmra.mxu0 %v2286
    %v2694 = vpop.f32.mrf.mxu0
    %v2695 = vadd.f32 0.0, %v2694
    %v2696 = vpop.f32.mrf.mxu0
    %v2697 = vadd.f32 0.0, %v2696
    %2698 = vmatprep.mubr.f32.mxu0 %v2291
    %2699 = vmatmul.mubr.f32.gmra.mxu0 %v2290
    %v2700 = vpop.f32.mrf.mxu0
    %v2701 = vadd.f32 0.0, %v2700
    %v2702 = vpop.f32.mrf.mxu0
    %v2703 = vadd.f32 0.0, %v2702
    %2704 = vmatprep.mubr.f32.mxu0 %v2295
    %2705 = vmatmul.mubr.f32.gmra.mxu0 %v2294
    %v2706 = vpop.f32.mrf.mxu0
    %v2707 = vadd.f32 0.0, %v2706
    %v2708 = vpop.f32.mrf.mxu0
    %v2709 = vadd.f32 0.0, %v2708
    %2710 = vmatprep.mubr.f32.mxu0 %v2299
    %2711 = vmatmul.mubr.f32.gmra.mxu0 %v2298
    %v2712 = vpop.f32.mrf.mxu0
    %v2713 = vadd.f32 0.0, %v2712
    %v2714 = vpop.f32.mrf.mxu0
    %v2715 = vadd.f32 0.0, %v2714
    %2716 = vmatprep.mubr.f32.mxu0 %v2303
    %2717 = vmatmul.mubr.f32.gmra.mxu0 %v2302
    %v2718 = vpop.f32.mrf.mxu0
    %v2719 = vadd.f32 0.0, %v2718
    %v2720 = vpop.f32.mrf.mxu0
    %v2721 = vadd.f32 0.0, %v2720
    %2722 = vmatprep.mubr.f32.mxu0 %v2307
    %2723 = vmatmul.mubr.f32.gmra.mxu0 %v2306
    %v2724 = vpop.f32.mrf.mxu0
    %v2725 = vadd.f32 0.0, %v2724
    %v2726 = vpop.f32.mrf.mxu0
    %v2727 = vadd.f32 0.0, %v2726
    %2728 = vmatprep.mubr.f32.mxu0 %v2311
    %2729 = vmatmul.mubr.f32.gmra.mxu0 %v2310
    %v2730 = vpop.f32.mrf.mxu0
    %v2731 = vadd.f32 0.0, %v2730
    %v2732 = vpop.f32.mrf.mxu0
    %v2733 = vadd.f32 0.0, %v2732
    %2734 = vmatprep.mubr.f32.mxu0 %v2315
    %2735 = vmatmul.mubr.f32.gmra.mxu0 %v2314
    %v2736 = vpop.f32.mrf.mxu0
    %v2737 = vadd.f32 0.0, %v2736
    %v2738 = vpop.f32.mrf.mxu0
    %v2739 = vadd.f32 0.0, %v2738
    %2740 = vmatprep.mubr.f32.mxu0 %v2319
    %2741 = vmatmul.mubr.f32.gmra.mxu0 %v2318
    %v2742 = vpop.f32.mrf.mxu0
    %v2743 = vadd.f32 0.0, %v2742
    %v2744 = vpop.f32.mrf.mxu0
    %v2745 = vadd.f32 0.0, %v2744
    %2746 = vmatprep.mubr.f32.mxu0 %v2323
    %2747 = vmatmul.mubr.f32.gmra.mxu0 %v2322
    %v2748 = vpop.f32.mrf.mxu0
    %v2749 = vadd.f32 0.0, %v2748
    %v2750 = vpop.f32.mrf.mxu0
    %v2751 = vadd.f32 0.0, %v2750
    %2752 = vmatprep.mubr.f32.mxu0 %v2327
    %2753 = vmatmul.mubr.f32.gmra.mxu0 %v2326
    %v2754 = vpop.f32.mrf.mxu0
    %v2755 = vadd.f32 0.0, %v2754
    %v2756 = vpop.f32.mrf.mxu0
    %v2757 = vadd.f32 0.0, %v2756
    %2758 = vmatprep.mubr.f32.mxu0 %v2331
    %2759 = vmatmul.mubr.f32.gmra.mxu0 %v2330
    %v2760 = vpop.f32.mrf.mxu0
    %v2761 = vadd.f32 0.0, %v2760
    %v2762 = vpop.f32.mrf.mxu0
    %v2763 = vadd.f32 0.0, %v2762
    %2764 = vmatprep.mubr.f32.mxu0 %v2335
    %2765 = vmatmul.mubr.f32.gmra.mxu0 %v2334
    %v2766 = vpop.f32.mrf.mxu0
    %v2767 = vadd.f32 0.0, %v2766
    %v2768 = vpop.f32.mrf.mxu0
    %v2769 = vadd.f32 0.0, %v2768
    %2770 = vmatprep.mubr.f32.mxu0 %v2339
    %2771 = vmatmul.mubr.f32.gmra.mxu0 %v2338
    %v2772 = vpop.f32.mrf.mxu0
    %v2773 = vadd.f32 0.0, %v2772
    %v2774 = vpop.f32.mrf.mxu0
    %v2775 = vadd.f32 0.0, %v2774
    %2776 = vmatprep.mubr.f32.mxu0 %v2343
    %2777 = vmatmul.mubr.f32.gmra.mxu0 %v2342
    %v2778 = vpop.f32.mrf.mxu0
    %v2779 = vadd.f32 0.0, %v2778
    %v2780 = vpop.f32.mrf.mxu0
    %v2781 = vadd.f32 0.0, %v2780
    %2782 = vmatprep.mubr.f32.mxu0 %v2347
    %2783 = vmatmul.mubr.f32.gmra.mxu0 %v2346
    %v2784 = vpop.f32.mrf.mxu0
    %v2785 = vadd.f32 0.0, %v2784
    %v2786 = vpop.f32.mrf.mxu0
    %v2787 = vadd.f32 0.0, %v2786
    %2788 = vmatprep.mubr.f32.mxu0 %v2351
    %2789 = vmatmul.mubr.f32.gmra.mxu0 %v2350
    %v2790 = vpop.f32.mrf.mxu0
    %v2791 = vadd.f32 0.0, %v2790
    %v2792 = vpop.f32.mrf.mxu0
    %v2793 = vadd.f32 0.0, %v2792
    %2794 = vmatprep.mubr.f32.mxu0 %v2355
    %2795 = vmatmul.mubr.f32.gmra.mxu0 %v2354
    %v2796 = vpop.f32.mrf.mxu0
    %v2797 = vadd.f32 0.0, %v2796
    %v2798 = vpop.f32.mrf.mxu0
    %v2799 = vadd.f32 0.0, %v2798
    %2800 = vmatprep.mubr.f32.mxu0 %v2359
    %2801 = vmatmul.mubr.f32.gmra.mxu0 %v2358
    %v2802 = vpop.f32.mrf.mxu0
    %v2803 = vadd.f32 0.0, %v2802
    %v2804 = vpop.f32.mrf.mxu0
    %v2805 = vadd.f32 0.0, %v2804
    %2806 = vmatprep.mubr.f32.mxu0 %v2363
    %2807 = vmatmul.mubr.f32.gmra.mxu0 %v2362
    %v2808 = vpop.f32.mrf.mxu0
    %v2809 = vadd.f32 0.0, %v2808
    %v2810 = vpop.f32.mrf.mxu0
    %v2811 = vadd.f32 0.0, %v2810
    %2812 = vmatprep.mubr.f32.mxu0 %v2367
    %2813 = vmatmul.mubr.f32.gmra.mxu0 %v2366
    %v2814 = vpop.f32.mrf.mxu0
    %v2815 = vadd.f32 0.0, %v2814
    %v2816 = vpop.f32.mrf.mxu0
    %v2817 = vadd.f32 0.0, %v2816
    %2818 = vdwg.mxu0
    %2819 = vmatprep.subr.mxu0 %v2529
    %2820 = vmatpush1.msra.mxu0 %v2528
    %2821 = vmatprep.subr.mxu0 %v2527
    %2822 = vmatpush1.msra.mxu0 %v2526
    %2823 = vmatprep.subr.mxu0 %v2525
    %2824 = vmatpush1.msra.mxu0 %v2524
    %2825 = vmatprep.subr.mxu0 %v2523
    %2826 = vmatpush1.msra.mxu0 %v2522
    %2827 = vmatprep.subr.mxu0 %v2521
    %2828 = vmatpush1.msra.mxu0 %v2520
    %2829 = vmatprep.subr.mxu0 %v2519
    %2830 = vmatpush1.msra.mxu0 %v2518
    %2831 = vmatprep.subr.mxu0 %v2517
    %2832 = vmatpush1.msra.mxu0 %v2516
    %2833 = vmatprep.subr.mxu0 %v2515
    %2834 = vmatpush1.msra.mxu0 %v2514
    %2835 = vmatprep.subr.mxu0 %v2513
    %2836 = vmatpush1.msra.mxu0 %v2512
    %2837 = vmatprep.subr.mxu0 %v2511
    %2838 = vmatpush1.msra.mxu0 %v2510
    %2839 = vmatprep.subr.mxu0 %v2509
    %2840 = vmatpush1.msra.mxu0 %v2508
    %2841 = vmatprep.subr.mxu0 %v2507
    %2842 = vmatpush1.msra.mxu0 %v2506
    %2843 = vmatprep.subr.mxu0 %v2505
    %2844 = vmatpush1.msra.mxu0 %v2504
    %2845 = vmatprep.subr.mxu0 %v2503
    %2846 = vmatpush1.msra.mxu0 %v2502
    %2847 = vmatprep.subr.mxu0 %v2501
    %2848 = vmatpush1.msra.mxu0 %v2500
    %2849 = vmatprep.subr.mxu0 %v2499
    %2850 = vmatpush1.msra.mxu0 %v2498
    %2851 = vmatprep.subr.mxu0 %v2561
    %2852 = vmatpush2.msra.mxu0 %v2560
    %2853 = vmatprep.subr.mxu0 %v2559
    %2854 = vmatpush2.msra.mxu0 %v2558
    %2855 = vmatprep.subr.mxu0 %v2557
    %2856 = vmatpush2.msra.mxu0 %v2556
    %2857 = vmatprep.subr.mxu0 %v2555
    %2858 = vmatpush2.msra.mxu0 %v2554
    %2859 = vmatprep.subr.mxu0 %v2553
    %2860 = vmatpush2.msra.mxu0 %v2552
    %2861 = vmatprep.subr.mxu0 %v2551
    %2862 = vmatpush2.msra.mxu0 %v2550
    %2863 = vmatprep.subr.mxu0 %v2549
    %2864 = vmatpush2.msra.mxu0 %v2548
    %2865 = vmatprep.subr.mxu0 %v2547
    %2866 = vmatpush2.msra.mxu0 %v2546
    %2867 = vmatprep.subr.mxu0 %v2545
    %2868 = vmatpush2.msra.mxu0 %v2544
    %2869 = vmatprep.subr.mxu0 %v2543
    %2870 = vmatpush2.msra.mxu0 %v2542
    %2871 = vmatprep.subr.mxu0 %v2541
    %2872 = vmatpush2.msra.mxu0 %v2540
    %2873 = vmatprep.subr.mxu0 %v2539
    %2874 = vmatpush2.msra.mxu0 %v2538
    %2875 = vmatprep.subr.mxu0 %v2537
    %2876 = vmatpush2.msra.mxu0 %v2536
    %2877 = vmatprep.subr.mxu0 %v2535
    %2878 = vmatpush2.msra.mxu0 %v2534
    %2879 = vmatprep.subr.mxu0 %v2533
    %2880 = vmatpush2.msra.mxu0 %v2532
    %2881 = vmatprep.subr.mxu0 %v2531
    %2882 = vmatpush2.msra.mxu0 %v2530
    %2883 = vmatprep.mubr.f32.mxu0 %v2245
    %2884 = vmatmul.mubr.f32.gmra.mxu0 %v2244
    %v2885 = vpop.f32.mrf.mxu0
    %v2886 = vadd.f32 %v2629, %v2885
    %v2887 = vpop.f32.mrf.mxu0
    %v2888 = vadd.f32 %v2631, %v2887
    %2889 = vmatprep.mubr.f32.mxu0 %v2249
    %2890 = vmatmul.mubr.f32.gmra.mxu0 %v2248
    %v2891 = vpop.f32.mrf.mxu0
    %v2892 = vadd.f32 %v2635, %v2891
    %v2893 = vpop.f32.mrf.mxu0
    %v2894 = vadd.f32 %v2637, %v2893
    %2895 = vmatprep.mubr.f32.mxu0 %v2253
    %2896 = vmatmul.mubr.f32.gmra.mxu0 %v2252
    %v2897 = vpop.f32.mrf.mxu0
    %v2898 = vadd.f32 %v2641, %v2897
    %v2899 = vpop.f32.mrf.mxu0
    %v2900 = vadd.f32 %v2643, %v2899
    %2901 = vmatprep.mubr.f32.mxu0 %v2257
    %2902 = vmatmul.mubr.f32.gmra.mxu0 %v2256
    %v2903 = vpop.f32.mrf.mxu0
    %v2904 = vadd.f32 %v2647, %v2903
    %v2905 = vpop.f32.mrf.mxu0
    %v2906 = vadd.f32 %v2649, %v2905
    %2907 = vmatprep.mubr.f32.mxu0 %v2261
    %2908 = vmatmul.mubr.f32.gmra.mxu0 %v2260
    %v2909 = vpop.f32.mrf.mxu0
    %v2910 = vadd.f32 %v2653, %v2909
    %v2911 = vpop.f32.mrf.mxu0
    %v2912 = vadd.f32 %v2655, %v2911
    %2913 = vmatprep.mubr.f32.mxu0 %v2265
    %2914 = vmatmul.mubr.f32.gmra.mxu0 %v2264
    %v2915 = vpop.f32.mrf.mxu0
    %v2916 = vadd.f32 %v2659, %v2915
    %v2917 = vpop.f32.mrf.mxu0
    %v2918 = vadd.f32 %v2661, %v2917
    %2919 = vmatprep.mubr.f32.mxu0 %v2269
    %2920 = vmatmul.mubr.f32.gmra.mxu0 %v2268
    %v2921 = vpop.f32.mrf.mxu0
    %v2922 = vadd.f32 %v2665, %v2921
    %v2923 = vpop.f32.mrf.mxu0
    %v2924 = vadd.f32 %v2667, %v2923
    %2925 = vmatprep.mubr.f32.mxu0 %v2273
    %2926 = vmatmul.mubr.f32.gmra.mxu0 %v2272
    %v2927 = vpop.f32.mrf.mxu0
    %v2928 = vadd.f32 %v2671, %v2927
    %v2929 = vpop.f32.mrf.mxu0
    %v2930 = vadd.f32 %v2673, %v2929
    %2931 = vmatprep.mubr.f32.mxu0 %v2277
    %2932 = vmatmul.mubr.f32.gmra.mxu0 %v2276
    %v2933 = vpop.f32.mrf.mxu0
    %v2934 = vadd.f32 %v2677, %v2933
    %v2935 = vpop.f32.mrf.mxu0
    %v2936 = vadd.f32 %v2679, %v2935
    %2937 = vmatprep.mubr.f32.mxu0 %v2281
    %2938 = vmatmul.mubr.f32.gmra.mxu0 %v2280
    %v2939 = vpop.f32.mrf.mxu0
    %v2940 = vadd.f32 %v2683, %v2939
    %v2941 = vpop.f32.mrf.mxu0
    %v2942 = vadd.f32 %v2685, %v2941
    %2943 = vmatprep.mubr.f32.mxu0 %v2285
    %2944 = vmatmul.mubr.f32.gmra.mxu0 %v2284
    %v2945 = vpop.f32.mrf.mxu0
    %v2946 = vadd.f32 %v2689, %v2945
    %v2947 = vpop.f32.mrf.mxu0
    %v2948 = vadd.f32 %v2691, %v2947
    %2949 = vmatprep.mubr.f32.mxu0 %v2289
    %2950 = vmatmul.mubr.f32.gmra.mxu0 %v2288
    %v2951 = vpop.f32.mrf.mxu0
    %v2952 = vadd.f32 %v2695, %v2951
    %v2953 = vpop.f32.mrf.mxu0
    %v2954 = vadd.f32 %v2697, %v2953
    %2955 = vmatprep.mubr.f32.mxu0 %v2293
    %2956 = vmatmul.mubr.f32.gmra.mxu0 %v2292
    %v2957 = vpop.f32.mrf.mxu0
    %v2958 = vadd.f32 %v2701, %v2957
    %v2959 = vpop.f32.mrf.mxu0
    %v2960 = vadd.f32 %v2703, %v2959
    %2961 = vmatprep.mubr.f32.mxu0 %v2297
    %2962 = vmatmul.mubr.f32.gmra.mxu0 %v2296
    %v2963 = vpop.f32.mrf.mxu0
    %v2964 = vadd.f32 %v2707, %v2963
    %v2965 = vpop.f32.mrf.mxu0
    %v2966 = vadd.f32 %v2709, %v2965
    %2967 = vmatprep.mubr.f32.mxu0 %v2301
    %2968 = vmatmul.mubr.f32.gmra.mxu0 %v2300
    %v2969 = vpop.f32.mrf.mxu0
    %v2970 = vadd.f32 %v2713, %v2969
    %v2971 = vpop.f32.mrf.mxu0
    %v2972 = vadd.f32 %v2715, %v2971
    %2973 = vmatprep.mubr.f32.mxu0 %v2305
    %2974 = vmatmul.mubr.f32.gmra.mxu0 %v2304
    %v2975 = vpop.f32.mrf.mxu0
    %v2976 = vadd.f32 %v2719, %v2975
    %v2977 = vpop.f32.mrf.mxu0
    %v2978 = vadd.f32 %v2721, %v2977
    %2979 = vmatprep.mubr.f32.mxu0 %v2309
    %2980 = vmatmul.mubr.f32.gmra.mxu0 %v2308
    %v2981 = vpop.f32.mrf.mxu0
    %v2982 = vadd.f32 %v2725, %v2981
    %v2983 = vpop.f32.mrf.mxu0
    %v2984 = vadd.f32 %v2727, %v2983
    %2985 = vmatprep.mubr.f32.mxu0 %v2313
    %2986 = vmatmul.mubr.f32.gmra.mxu0 %v2312
    %v2987 = vpop.f32.mrf.mxu0
    %v2988 = vadd.f32 %v2731, %v2987
    %v2989 = vpop.f32.mrf.mxu0
    %v2990 = vadd.f32 %v2733, %v2989
    %2991 = vmatprep.mubr.f32.mxu0 %v2317
    %2992 = vmatmul.mubr.f32.gmra.mxu0 %v2316
    %v2993 = vpop.f32.mrf.mxu0
    %v2994 = vadd.f32 %v2737, %v2993
    %v2995 = vpop.f32.mrf.mxu0
    %v2996 = vadd.f32 %v2739, %v2995
    %2997 = vmatprep.mubr.f32.mxu0 %v2321
    %2998 = vmatmul.mubr.f32.gmra.mxu0 %v2320
    %v2999 = vpop.f32.mrf.mxu0
    %v3000 = vadd.f32 %v2743, %v2999
    %v3001 = vpop.f32.mrf.mxu0
    %v3002 = vadd.f32 %v2745, %v3001
    %3003 = vmatprep.mubr.f32.mxu0 %v2325
    %3004 = vmatmul.mubr.f32.gmra.mxu0 %v2324
    %v3005 = vpop.f32.mrf.mxu0
    %v3006 = vadd.f32 %v2749, %v3005
    %v3007 = vpop.f32.mrf.mxu0
    %v3008 = vadd.f32 %v2751, %v3007
    %3009 = vmatprep.mubr.f32.mxu0 %v2329
    %3010 = vmatmul.mubr.f32.gmra.mxu0 %v2328
    %v3011 = vpop.f32.mrf.mxu0
    %v3012 = vadd.f32 %v2755, %v3011
    %v3013 = vpop.f32.mrf.mxu0
    %v3014 = vadd.f32 %v2757, %v3013
    %3015 = vmatprep.mubr.f32.mxu0 %v2333
    %3016 = vmatmul.mubr.f32.gmra.mxu0 %v2332
    %v3017 = vpop.f32.mrf.mxu0
    %v3018 = vadd.f32 %v2761, %v3017
    %v3019 = vpop.f32.mrf.mxu0
    %v3020 = vadd.f32 %v2763, %v3019
    %3021 = vmatprep.mubr.f32.mxu0 %v2337
    %3022 = vmatmul.mubr.f32.gmra.mxu0 %v2336
    %v3023 = vpop.f32.mrf.mxu0
    %v3024 = vadd.f32 %v2767, %v3023
    %v3025 = vpop.f32.mrf.mxu0
    %v3026 = vadd.f32 %v2769, %v3025
    %3027 = vmatprep.mubr.f32.mxu0 %v2341
    %3028 = vmatmul.mubr.f32.gmra.mxu0 %v2340
    %v3029 = vpop.f32.mrf.mxu0
    %v3030 = vadd.f32 %v2773, %v3029
    %v3031 = vpop.f32.mrf.mxu0
    %v3032 = vadd.f32 %v2775, %v3031
    %3033 = vmatprep.mubr.f32.mxu0 %v2345
    %3034 = vmatmul.mubr.f32.gmra.mxu0 %v2344
    %v3035 = vpop.f32.mrf.mxu0
    %v3036 = vadd.f32 %v2779, %v3035
    %v3037 = vpop.f32.mrf.mxu0
    %v3038 = vadd.f32 %v2781, %v3037
    %3039 = vmatprep.mubr.f32.mxu0 %v2349
    %3040 = vmatmul.mubr.f32.gmra.mxu0 %v2348
    %v3041 = vpop.f32.mrf.mxu0
    %v3042 = vadd.f32 %v2785, %v3041
    %v3043 = vpop.f32.mrf.mxu0
    %v3044 = vadd.f32 %v2787, %v3043
    %3045 = vmatprep.mubr.f32.mxu0 %v2353
    %3046 = vmatmul.mubr.f32.gmra.mxu0 %v2352
    %v3047 = vpop.f32.mrf.mxu0
    %v3048 = vadd.f32 %v2791, %v3047
    %v3049 = vpop.f32.mrf.mxu0
    %v3050 = vadd.f32 %v2793, %v3049
    %3051 = vmatprep.mubr.f32.mxu0 %v2357
    %3052 = vmatmul.mubr.f32.gmra.mxu0 %v2356
    %v3053 = vpop.f32.mrf.mxu0
    %v3054 = vadd.f32 %v2797, %v3053
    %v3055 = vpop.f32.mrf.mxu0
    %v3056 = vadd.f32 %v2799, %v3055
    %3057 = vmatprep.mubr.f32.mxu0 %v2361
    %3058 = vmatmul.mubr.f32.gmra.mxu0 %v2360
    %v3059 = vpop.f32.mrf.mxu0
    %v3060 = vadd.f32 %v2803, %v3059
    %v3061 = vpop.f32.mrf.mxu0
    %v3062 = vadd.f32 %v2805, %v3061
    %3063 = vmatprep.mubr.f32.mxu0 %v2365
    %3064 = vmatmul.mubr.f32.gmra.mxu0 %v2364
    %v3065 = vpop.f32.mrf.mxu0
    %v3066 = vadd.f32 %v2809, %v3065
    %v3067 = vpop.f32.mrf.mxu0
    %v3068 = vadd.f32 %v2811, %v3067
    %3069 = vmatprep.mubr.f32.mxu0 %v2369
    %3070 = vmatmul.mubr.f32.gmra.mxu0 %v2368
    %v3071 = vpop.f32.mrf.mxu0
    %v3072 = vadd.f32 %v2815, %v3071
    %v3073 = vpop.f32.mrf.mxu0
    %v3074 = vadd.f32 %v2817, %v3073
    %3075 = vdwg.mxu0
    %v3076 = vadd.f32 %v2370, %v2886
    %v3077 = vadd.f32 %v2371, %v2888
    %v3078 = vadd.f32 %v2372, %v2892
    %v3079 = vadd.f32 %v2373, %v2894
    %v3080 = vadd.f32 %v2374, %v2898
    %v3081 = vadd.f32 %v2375, %v2900
    %v3082 = vadd.f32 %v2376, %v2904
    %v3083 = vadd.f32 %v2377, %v2906
    %v3084 = vadd.f32 %v2378, %v2910
    %v3085 = vadd.f32 %v2379, %v2912
    %v3086 = vadd.f32 %v2380, %v2916
    %v3087 = vadd.f32 %v2381, %v2918
    %v3088 = vadd.f32 %v2382, %v2922
    %v3089 = vadd.f32 %v2383, %v2924
    %v3090 = vadd.f32 %v2384, %v2928
    %v3091 = vadd.f32 %v2385, %v2930
    %v3092 = vadd.f32 %v2386, %v2934
    %v3093 = vadd.f32 %v2387, %v2936
    %v3094 = vadd.f32 %v2388, %v2940
    %v3095 = vadd.f32 %v2389, %v2942
    %v3096 = vadd.f32 %v2390, %v2946
    %v3097 = vadd.f32 %v2391, %v2948
    %v3098 = vadd.f32 %v2392, %v2952
    %v3099 = vadd.f32 %v2393, %v2954
    %v3100 = vadd.f32 %v2394, %v2958
    %v3101 = vadd.f32 %v2395, %v2960
    %v3102 = vadd.f32 %v2396, %v2964
    %v3103 = vadd.f32 %v2397, %v2966
    %v3104 = vadd.f32 %v2398, %v2970
    %v3105 = vadd.f32 %v2399, %v2972
    %v3106 = vadd.f32 %v2400, %v2976
    %v3107 = vadd.f32 %v2401, %v2978
    %v3108 = vadd.f32 %v2402, %v2982
    %v3109 = vadd.f32 %v2403, %v2984
    %v3110 = vadd.f32 %v2404, %v2988
    %v3111 = vadd.f32 %v2405, %v2990
    %v3112 = vadd.f32 %v2406, %v2994
    %v3113 = vadd.f32 %v2407, %v2996
    %v3114 = vadd.f32 %v2408, %v3000
    %v3115 = vadd.f32 %v2409, %v3002
    %v3116 = vadd.f32 %v2410, %v3006
    %v3117 = vadd.f32 %v2411, %v3008
    %v3118 = vadd.f32 %v2412, %v3012
    %v3119 = vadd.f32 %v2413, %v3014
    %v3120 = vadd.f32 %v2414, %v3018
    %v3121 = vadd.f32 %v2415, %v3020
    %v3122 = vadd.f32 %v2416, %v3024
    %v3123 = vadd.f32 %v2417, %v3026
    %v3124 = vadd.f32 %v2418, %v3030
    %v3125 = vadd.f32 %v2419, %v3032
    %v3126 = vadd.f32 %v2420, %v3036
    %v3127 = vadd.f32 %v2421, %v3038
    %v3128 = vadd.f32 %v2422, %v3042
    %v3129 = vadd.f32 %v2423, %v3044
    %v3130 = vadd.f32 %v2424, %v3048
    %v3131 = vadd.f32 %v2425, %v3050
    %v3132 = vadd.f32 %v2426, %v3054
    %v3133 = vadd.f32 %v2427, %v3056
    %v3134 = vadd.f32 %v2428, %v3060
    %v3135 = vadd.f32 %v2429, %v3062
    %v3136 = vadd.f32 %v2430, %v3066
    %v3137 = vadd.f32 %v2431, %v3068
    %v3138 = vadd.f32 %v2432, %v3072
    %v3139 = vadd.f32 %v2433, %v3074
    %3140 = vst [vmem:[#allocation2] sm:$0xff] %v3076
    %3141 = vst [vmem:[#allocation2 + $0x8] sm:$0xff] %v3077
    %3142 = vst [vmem:[#allocation2 + $0x10] sm:$0xff] %v3078
    %3143 = vst [vmem:[#allocation2 + $0x18] sm:$0xff] %v3079
    %3144 = vst [vmem:[#allocation2 + $0x20] sm:$0xff] %v3080
    %3145 = vst [vmem:[#allocation2 + $0x28] sm:$0xff] %v3081
    %3146 = vst [vmem:[#allocation2 + $0x30] sm:$0xff] %v3082
    %3147 = vst [vmem:[#allocation2 + $0x38] sm:$0xff] %v3083
    %3148 = vst [vmem:[#allocation2 + $0x40] sm:$0xff] %v3084
    %3149 = vst [vmem:[#allocation2 + $0x48] sm:$0xff] %v3085
    %3150 = vst [vmem:[#allocation2 + $0x50] sm:$0xff] %v3086
    %3151 = vst [vmem:[#allocation2 + $0x58] sm:$0xff] %v3087
    %3152 = vst [vmem:[#allocation2 + $0x60] sm:$0xff] %v3088
    %3153 = vst [vmem:[#allocation2 + $0x68] sm:$0xff] %v3089
    %3154 = vst [vmem:[#allocation2 + $0x70] sm:$0xff] %v3090
    %3155 = vst [vmem:[#allocation2 + $0x78] sm:$0xff] %v3091
    %3156 = vst [vmem:[#allocation2 + $0x80] sm:$0xff] %v3092
    %3157 = vst [vmem:[#allocation2 + $0x88] sm:$0xff] %v3093
    %3158 = vst [vmem:[#allocation2 + $0x90] sm:$0xff] %v3094
    %3159 = vst [vmem:[#allocation2 + $0x98] sm:$0xff] %v3095
    %3160 = vst [vmem:[#allocation2 + $0xa0] sm:$0xff] %v3096
    %3161 = vst [vmem:[#allocation2 + $0xa8] sm:$0xff] %v3097
    %3162 = vst [vmem:[#allocation2 + $0xb0] sm:$0xff] %v3098
    %3163 = vst [vmem:[#allocation2 + $0xb8] sm:$0xff] %v3099
    %3164 = vst [vmem:[#allocation2 + $0xc0] sm:$0xff] %v3100
    %3165 = vst [vmem:[#allocation2 + $0xc8] sm:$0xff] %v3101
    %3166 = vst [vmem:[#allocation2 + $0xd0] sm:$0xff] %v3102
    %3167 = vst [vmem:[#allocation2 + $0xd8] sm:$0xff] %v3103
    %3168 = vst [vmem:[#allocation2 + $0xe0] sm:$0xff] %v3104
    %3169 = vst [vmem:[#allocation2 + $0xe8] sm:$0xff] %v3105
    %3170 = vst [vmem:[#allocation2 + $0xf0] sm:$0xff] %v3106
    %3171 = vst [vmem:[#allocation2 + $0xf8] sm:$0xff] %v3107
    %3172 = vst [vmem:[#allocation2 + $0x100] sm:$0xff] %v3108
    %3173 = vst [vmem:[#allocation2 + $0x108] sm:$0xff] %v3109
    %3174 = vst [vmem:[#allocation2 + $0x110] sm:$0xff] %v3110
    %3175 = vst [vmem:[#allocation2 + $0x118] sm:$0xff] %v3111
    %3176 = vst [vmem:[#allocation2 + $0x120] sm:$0xff] %v3112
    %3177 = vst [vmem:[#allocation2 + $0x128] sm:$0xff] %v3113
    %3178 = vst [vmem:[#allocation2 + $0x130] sm:$0xff] %v3114
    %3179 = vst [vmem:[#allocation2 + $0x138] sm:$0xff] %v3115
    %3180 = vst [vmem:[#allocation2 + $0x140] sm:$0xff] %v3116
    %3181 = vst [vmem:[#allocation2 + $0x148] sm:$0xff] %v3117
    %3182 = vst [vmem:[#allocation2 + $0x150] sm:$0xff] %v3118
    %3183 = vst [vmem:[#allocation2 + $0x158] sm:$0xff] %v3119
    %3184 = vst [vmem:[#allocation2 + $0x160] sm:$0xff] %v3120
    %3185 = vst [vmem:[#allocation2 + $0x168] sm:$0xff] %v3121
    %3186 = vst [vmem:[#allocation2 + $0x170] sm:$0xff] %v3122
    %3187 = vst [vmem:[#allocation2 + $0x178] sm:$0xff] %v3123
    %3188 = vst [vmem:[#allocation2 + $0x180] sm:$0xff] %v3124
    %3189 = vst [vmem:[#allocation2 + $0x188] sm:$0xff] %v3125
    %3190 = vst [vmem:[#allocation2 + $0x190] sm:$0xff] %v3126
    %3191 = vst [vmem:[#allocation2 + $0x198] sm:$0xff] %v3127
    %3192 = vst [vmem:[#allocation2 + $0x1a0] sm:$0xff] %v3128
    %3193 = vst [vmem:[#allocation2 + $0x1a8] sm:$0xff] %v3129
    %3194 = vst [vmem:[#allocation2 + $0x1b0] sm:$0xff] %v3130
    %3195 = vst [vmem:[#allocation2 + $0x1b8] sm:$0xff] %v3131
    %3196 = vst [vmem:[#allocation2 + $0x1c0] sm:$0xff] %v3132
    %3197 = vst [vmem:[#allocation2 + $0x1c8] sm:$0xff] %v3133
    %3198 = vst [vmem:[#allocation2 + $0x1d0] sm:$0xff] %v3134
    %3199 = vst [vmem:[#allocation2 + $0x1d8] sm:$0xff] %v3135
    %3200 = vst [vmem:[#allocation2 + $0x1e0] sm:$0xff] %v3136
    %3201 = vst [vmem:[#allocation2 + $0x1e8] sm:$0xff] %v3137
    %3202 = vst [vmem:[#allocation2 + $0x1f0] sm:$0xff] %v3138
    %3203 = vst [vmem:[#allocation2 + $0x1f8] sm:$0xff] %v3139
    // Predicated region
    $region34: #{llama_mlp.1} parent=1 // pred_check
      %p3204 = pneg %p58
    $region35: #{llama_mlp.1} parent=1 // pred_check_branch
      %3206 = sbr.rel (%p3204) target = $region37
    $region36: #{llama_mlp.1} parent=1 // pred_region
      %v3207 = vld [vmem:[#allocation2] sm:$0xff]
      %v3208 = vld [vmem:[#allocation2 + $0x8] sm:$0xff]
      %v3209 = vld [vmem:[#allocation2 + $0x10] sm:$0xff]
      %v3210 = vld [vmem:[#allocation2 + $0x18] sm:$0xff]
      %v3211 = vld [vmem:[#allocation2 + $0x20] sm:$0xff]
      %v3212 = vld [vmem:[#allocation2 + $0x28] sm:$0xff]
      %v3213 = vld [vmem:[#allocation2 + $0x30] sm:$0xff]
      %v3214 = vld [vmem:[#allocation2 + $0x38] sm:$0xff]
      %v3215 = vld [vmem:[#allocation2 + $0x40] sm:$0xff]
      %v3216 = vld [vmem:[#allocation2 + $0x48] sm:$0xff]
      %v3217 = vld [vmem:[#allocation2 + $0x50] sm:$0xff]
      %v3218 = vld [vmem:[#allocation2 + $0x58] sm:$0xff]
      %v3219 = vld [vmem:[#allocation2 + $0x60] sm:$0xff]
      %v3220 = vld [vmem:[#allocation2 + $0x68] sm:$0xff]
      %v3221 = vld [vmem:[#allocation2 + $0x70] sm:$0xff]
      %v3222 = vld [vmem:[#allocation2 + $0x78] sm:$0xff]
      %v3223 = vld [vmem:[#allocation2 + $0x80] sm:$0xff]
      %v3224 = vld [vmem:[#allocation2 + $0x88] sm:$0xff]
      %v3225 = vld [vmem:[#allocation2 + $0x90] sm:$0xff]
      %v3226 = vld [vmem:[#allocation2 + $0x98] sm:$0xff]
      %v3227 = vld [vmem:[#allocation2 + $0xa0] sm:$0xff]
      %v3228 = vld [vmem:[#allocation2 + $0xa8] sm:$0xff]
      %v3229 = vld [vmem:[#allocation2 + $0xb0] sm:$0xff]
      %v3230 = vld [vmem:[#allocation2 + $0xb8] sm:$0xff]
      %v3231 = vld [vmem:[#allocation2 + $0xc0] sm:$0xff]
      %v3232 = vld [vmem:[#allocation2 + $0xc8] sm:$0xff]
      %v3233 = vld [vmem:[#allocation2 + $0xd0] sm:$0xff]
      %v3234 = vld [vmem:[#allocation2 + $0xd8] sm:$0xff]
      %v3235 = vld [vmem:[#allocation2 + $0xe0] sm:$0xff]
      %v3236 = vld [vmem:[#allocation2 + $0xe8] sm:$0xff]
      %v3237 = vld [vmem:[#allocation2 + $0xf0] sm:$0xff]
      %v3238 = vld [vmem:[#allocation2 + $0xf8] sm:$0xff]
      %v3239 = vld [vmem:[#allocation2 + $0x100] sm:$0xff]
      %v3240 = vld [vmem:[#allocation2 + $0x108] sm:$0xff]
      %v3241 = vld [vmem:[#allocation2 + $0x110] sm:$0xff]
      %v3242 = vld [vmem:[#allocation2 + $0x118] sm:$0xff]
      %v3243 = vld [vmem:[#allocation2 + $0x120] sm:$0xff]
      %v3244 = vld [vmem:[#allocation2 + $0x128] sm:$0xff]
      %v3245 = vld [vmem:[#allocation2 + $0x130] sm:$0xff]
      %v3246 = vld [vmem:[#allocation2 + $0x138] sm:$0xff]
      %v3247 = vld [vmem:[#allocation2 + $0x140] sm:$0xff]
      %v3248 = vld [vmem:[#allocation2 + $0x148] sm:$0xff]
      %v3249 = vld [vmem:[#allocation2 + $0x150] sm:$0xff]
      %v3250 = vld [vmem:[#allocation2 + $0x158] sm:$0xff]
      %v3251 = vld [vmem:[#allocation2 + $0x160] sm:$0xff]
      %v3252 = vld [vmem:[#allocation2 + $0x168] sm:$0xff]
      %v3253 = vld [vmem:[#allocation2 + $0x170] sm:$0xff]
      %v3254 = vld [vmem:[#allocation2 + $0x178] sm:$0xff]
      %v3255 = vld [vmem:[#allocation2 + $0x180] sm:$0xff]
      %v3256 = vld [vmem:[#allocation2 + $0x188] sm:$0xff]
      %v3257 = vld [vmem:[#allocation2 + $0x190] sm:$0xff]
      %v3258 = vld [vmem:[#allocation2 + $0x198] sm:$0xff]
      %v3259 = vld [vmem:[#allocation2 + $0x1a0] sm:$0xff]
      %v3260 = vld [vmem:[#allocation2 + $0x1a8] sm:$0xff]
      %v3261 = vld [vmem:[#allocation2 + $0x1b0] sm:$0xff]
      %v3262 = vld [vmem:[#allocation2 + $0x1b8] sm:$0xff]
      %v3263 = vld [vmem:[#allocation2 + $0x1c0] sm:$0xff]
      %v3264 = vld [vmem:[#allocation2 + $0x1c8] sm:$0xff]
      %v3265 = vld [vmem:[#allocation2 + $0x1d0] sm:$0xff]
      %v3266 = vld [vmem:[#allocation2 + $0x1d8] sm:$0xff]
      %v3267 = vld [vmem:[#allocation2 + $0x1e0] sm:$0xff]
      %v3268 = vld [vmem:[#allocation2 + $0x1e8] sm:$0xff]
      %v3269 = vld [vmem:[#allocation2 + $0x1f0] sm:$0xff]
      %v3270 = vld [vmem:[#allocation2 + $0x1f8] sm:$0xff]
      %3271 = vst [vmem:[%s4] sm:$0xff] %v3207
      %3272 = vst [vmem:[%s4 + $0x8] sm:$0xff] %v3208
      %3273 = vst [vmem:[%s4 + $0x10] sm:$0xff] %v3209
      %3274 = vst [vmem:[%s4 + $0x18] sm:$0xff] %v3210
      %3275 = vst [vmem:[%s4 + $0x20] sm:$0xff] %v3211
      %3276 = vst [vmem:[%s4 + $0x28] sm:$0xff] %v3212
      %3277 = vst [vmem:[%s4 + $0x30] sm:$0xff] %v3213
      %3278 = vst [vmem:[%s4 + $0x38] sm:$0xff] %v3214
      %3279 = vst [vmem:[%s4 + $0x40] sm:$0xff] %v3215
      %3280 = vst [vmem:[%s4 + $0x48] sm:$0xff] %v3216
      %3281 = vst [vmem:[%s4 + $0x50] sm:$0xff] %v3217
      %3282 = vst [vmem:[%s4 + $0x58] sm:$0xff] %v3218
      %3283 = vst [vmem:[%s4 + $0x60] sm:$0xff] %v3219
      %3284 = vst [vmem:[%s4 + $0x68] sm:$0xff] %v3220
      %3285 = vst [vmem:[%s4 + $0x70] sm:$0xff] %v3221
      %3286 = vst [vmem:[%s4 + $0x78] sm:$0xff] %v3222
      %3287 = vst [vmem:[%s4 + $0x80] sm:$0xff] %v3223
      %3288 = vst [vmem:[%s4 + $0x88] sm:$0xff] %v3224
      %3289 = vst [vmem:[%s4 + $0x90] sm:$0xff] %v3225
      %3290 = vst [vmem:[%s4 + $0x98] sm:$0xff] %v3226
      %3291 = vst [vmem:[%s4 + $0xa0] sm:$0xff] %v3227
      %3292 = vst [vmem:[%s4 + $0xa8] sm:$0xff] %v3228
      %3293 = vst [vmem:[%s4 + $0xb0] sm:$0xff] %v3229
      %3294 = vst [vmem:[%s4 + $0xb8] sm:$0xff] %v3230
      %3295 = vst [vmem:[%s4 + $0xc0] sm:$0xff] %v3231
      %3296 = vst [vmem:[%s4 + $0xc8] sm:$0xff] %v3232
      %3297 = vst [vmem:[%s4 + $0xd0] sm:$0xff] %v3233
      %3298 = vst [vmem:[%s4 + $0xd8] sm:$0xff] %v3234
      %3299 = vst [vmem:[%s4 + $0xe0] sm:$0xff] %v3235
      %3300 = vst [vmem:[%s4 + $0xe8] sm:$0xff] %v3236
      %3301 = vst [vmem:[%s4 + $0xf0] sm:$0xff] %v3237
      %3302 = vst [vmem:[%s4 + $0xf8] sm:$0xff] %v3238
      %3303 = vst [vmem:[%s4 + $0x100] sm:$0xff] %v3239
      %3304 = vst [vmem:[%s4 + $0x108] sm:$0xff] %v3240
      %3305 = vst [vmem:[%s4 + $0x110] sm:$0xff] %v3241
      %3306 = vst [vmem:[%s4 + $0x118] sm:$0xff] %v3242
      %3307 = vst [vmem:[%s4 + $0x120] sm:$0xff] %v3243
      %3308 = vst [vmem:[%s4 + $0x128] sm:$0xff] %v3244
      %3309 = vst [vmem:[%s4 + $0x130] sm:$0xff] %v3245
      %3310 = vst [vmem:[%s4 + $0x138] sm:$0xff] %v3246
      %3311 = vst [vmem:[%s4 + $0x140] sm:$0xff] %v3247
      %3312 = vst [vmem:[%s4 + $0x148] sm:$0xff] %v3248
      %3313 = vst [vmem:[%s4 + $0x150] sm:$0xff] %v3249
      %3314 = vst [vmem:[%s4 + $0x158] sm:$0xff] %v3250
      %3315 = vst [vmem:[%s4 + $0x160] sm:$0xff] %v3251
      %3316 = vst [vmem:[%s4 + $0x168] sm:$0xff] %v3252
      %3317 = vst [vmem:[%s4 + $0x170] sm:$0xff] %v3253
      %3318 = vst [vmem:[%s4 + $0x178] sm:$0xff] %v3254
      %3319 = vst [vmem:[%s4 + $0x180] sm:$0xff] %v3255
      %3320 = vst [vmem:[%s4 + $0x188] sm:$0xff] %v3256
      %3321 = vst [vmem:[%s4 + $0x190] sm:$0xff] %v3257
      %3322 = vst [vmem:[%s4 + $0x198] sm:$0xff] %v3258
      %3323 = vst [vmem:[%s4 + $0x1a0] sm:$0xff] %v3259
      %3324 = vst [vmem:[%s4 + $0x1a8] sm:$0xff] %v3260
      %3325 = vst [vmem:[%s4 + $0x1b0] sm:$0xff] %v3261
      %3326 = vst [vmem:[%s4 + $0x1b8] sm:$0xff] %v3262
      %3327 = vst [vmem:[%s4 + $0x1c0] sm:$0xff] %v3263
      %3328 = vst [vmem:[%s4 + $0x1c8] sm:$0xff] %v3264
      %3329 = vst [vmem:[%s4 + $0x1d0] sm:$0xff] %v3265
      %3330 = vst [vmem:[%s4 + $0x1d8] sm:$0xff] %v3266
      %3331 = vst [vmem:[%s4 + $0x1e0] sm:$0xff] %v3267
      %3332 = vst [vmem:[%s4 + $0x1e8] sm:$0xff] %v3268
      %3333 = vst [vmem:[%s4 + $0x1f0] sm:$0xff] %v3269
      %3334 = vst [vmem:[%s4 + $0x1f8] sm:$0xff] %v3270
    $region37: #{llama_mlp.1} parent=1 // pred_fallthru
      _
    // Predicated region
    $region38: #{llama_mlp.1} parent=1 // pred_check
      _
    $region39: #{llama_mlp.1} parent=1 // pred_check_branch
      %3336 = sbr.rel (0) target = $region41
    $region40: #{llama_mlp.1} parent=1 // pred_region
      _
    $region41: #{llama_mlp.1} parent=1 // pred_fallthru
      _
    // Predicated region
    $region42: #{llama_mlp.1} parent=1 // pred_check
      _
    $region43: #{llama_mlp.1} parent=1 // pred_check_branch
      %3338 = sbr.rel (0) target = $region45
    $region44: #{llama_mlp.1} parent=1 // pred_region
      _
    $region45: #{llama_mlp.1} parent=1 // pred_fallthru
      _
    %3339 = vsyncpa [#allocation4], 1
    %3340 = vsyncpa [#allocation6], 1

</llo_original>
